<compile_context>
chip_gen: v7x
topology: tpu7x:2x2x1
jax: 0.10.0
libtpu: 0.0.40
codegen_flags: <defaults>
</compile_context>

<pallas_src>
import functools
import math

import jax
import jax.numpy as jnp
from jax.experimental import pallas as pl
from jax.experimental.pallas import tpu as pltpu


def _attention_pool_kernel(
    pix_ref,         # (B, HW, C)   pixel tokens for this batch block (compute dtype)
    pos_cls_ref,     # (1, C)       positional embedding of the class (mean) token
    pos_pix_ref,     # (HW, C)      positional embedding of the pixel tokens
    head_map_ref,    # (C, H)  f32  channel -> head one-hot map
    head_map_t_ref,  # (H, C)  f32  head -> channel one-hot map
    wq_ref, bq_ref,      # (C, C) pre-transposed (weight dtype), (1, C) f32
    wk_ref, bk_ref,      # (C, C) pre-transposed, (1, C) f32
    wv_ref, bv_ref,      # (C, C) pre-transposed, (1, C) f32
    wc_ref, bc_ref,      # (C, O_pad) pre-transposed + padded, (1, O_pad) f32
    out_ref,             # (B, O_pad)
    *, num_heads: int,
):
    B, HW, C = pix_ref.shape
    H = num_heads
    D = C // H
    scale = 1.0 / math.sqrt(D)
    mm_dt = wq_ref.dtype   # matmul operand dtype (bf16 weights -> bf16 MXU path)

    px = pix_ref[...]                                             # (B, HW, C)

    # Class token = mean of pixel tokens (f32 accumulation, no f32 copy of px).
    mean_tok = jnp.mean(px, axis=1, dtype=jnp.float32)            # (B, C)
    cls_tok = (mean_tok + pos_cls_ref[...].astype(jnp.float32)).astype(mm_dt)
    pix_tok = px + pos_pix_ref[...][None, :, :]                   # (B, HW, C)
    pix2d = pix_tok.reshape(B * HW, C).astype(mm_dt)              # matmul operand

    # ---- q / k projections (MXU, f32 accumulation) ----
    q = (jnp.dot(cls_tok, wq_ref[...],
                 preferred_element_type=jnp.float32) + bq_ref[...]) * scale  # (B, C)
    k_cls = jnp.dot(cls_tok, wk_ref[...],
                    preferred_element_type=jnp.float32) + bk_ref[...]        # (B, C)
    k_pix = jnp.dot(pix2d, wk_ref[...],
                    preferred_element_type=jnp.float32) + bk_ref[...]        # (B*HW, C)

    head_map = head_map_ref[...]        # (C, H) f32, constant input (not rebuilt)
    head_map_t = head_map_t_ref[...]    # (H, C) f32

    # ---- per-head logits via mask-matmul (no head slicing / concat) ----
    # logits[b, k, h] = sum_c q[b, c] * k[b, k, c] * head_map[c, h]
    qk_pix = k_pix.reshape(B, HW, C) * q[:, None, :]              # (B, HW, C) f32
    logits_pix = jnp.dot(qk_pix.reshape(B * HW, C), head_map,
                         preferred_element_type=jnp.float32).reshape(B, HW, H)
    logit_cls = jnp.dot(q * k_cls, head_map,
                        preferred_element_type=jnp.float32)       # (B, H)

    # ---- numerically stable softmax over the HW + 1 tokens, per (b, h) ----
    m = jnp.maximum(jnp.max(logits_pix, axis=1), logit_cls)       # (B, H)
    p_pix = jnp.exp(logits_pix - m[:, None, :])                   # (B, HW, H)
    p_cls = jnp.exp(logit_cls - m)                                # (B, H)
    denom = jnp.sum(p_pix, axis=1) + p_cls                        # (B, H)
    inv = pl.reciprocal(denom, approx=False)   # exact; tiny array, basically free
    w_pix = p_pix * inv[:, None, :]                               # (B, HW, H)
    w_cls = p_cls * inv                                           # (B, H)

    # ---- v projections AFTER the softmax so their (B*HW, C) f32 slabs do not
    #      overlap k_pix / qk_pix / logits live ranges (lower peak VMEM) ----
    v_cls = jnp.dot(cls_tok, wv_ref[...],
                    preferred_element_type=jnp.float32) + bv_ref[...]        # (B, C)
    v_pix = jnp.dot(pix2d, wv_ref[...],
                    preferred_element_type=jnp.float32) + bv_ref[...]        # (B*HW, C)

    # ---- expand attention weights back to channels and combine values ----
    w_pix_c = jnp.dot(w_pix.reshape(B * HW, H), head_map_t,
                      preferred_element_type=jnp.float32).reshape(B, HW, C)
    w_cls_c = jnp.dot(w_cls, head_map_t,
                      preferred_element_type=jnp.float32)         # (B, C)
    o = jnp.sum(w_pix_c * v_pix.reshape(B, HW, C), axis=1) + w_cls_c * v_cls  # (B, C)

    # ---- output projection (O padded to a multiple of 128 -> dense stores) ----
    y = jnp.dot(o.astype(mm_dt), wc_ref[...],
                preferred_element_type=jnp.float32) + bc_ref[...]  # (B, O_pad)
    out_ref[...] = y.astype(out_ref.dtype)


def _vmem_limit_bytes(B_BLK, HW, C, O_pad, num_heads, cdt, wdt, odt):
    """Generation-aware VMEM budget: real footprint + margin, capped below the
    physical per-core VMEM of the current TPU generation."""
    try:
        cap_phys = int(pltpu.get_tpu_info().vmem_capacity_bytes)
    except Exception:
        cap_phys = 64 * 1024 * 1024            # v7x-safe fallback
    cap = int(cap_phys * 0.8)                  # ~51 MiB on v7x, ~102 MiB on v5e/v6e

    cb = jnp.dtype(cdt).itemsize
    wb = jnp.dtype(wdt).itemsize
    ob = jnp.dtype(odt).itemsize
    weights = (3 * C * C + C * O_pad) * wb                       # single-buffered
    consts = (3 * C + O_pad) * 4 + (HW + 1) * C * cb + 2 * C * num_heads * 4
    pixels = 2 * B_BLK * HW * C * cb                             # double-buffered in
    outputs = 2 * B_BLK * O_pad * ob                             # double-buffered out
    temporaries = 10 * B_BLK * HW * C * 4 + 6 * B_BLK * max(C, O_pad) * 4
    footprint = weights + consts + pixels + outputs + temporaries + (4 << 20)
    return int(min(cap, max(16 << 20, footprint)))


def attention_pool2d(x_nchw, params, *, num_heads: int, block_b: int = 16,
                     compute_dtype=None, weight_dtype=jnp.bfloat16):
    """x_nchw: (N, C, H, W).  Returns (N, output_dim)."""
    N, C, Hs, Ws = x_nchw.shape
    HW = Hs * Ws
    O = params["wc"].shape[0]
    out_dtype = x_nchw.dtype
    cdt = compute_dtype if compute_dtype is not None else x_nchw.dtype
    wdt = weight_dtype if weight_dtype is not None else cdt
    D = C // num_heads

    # Batch block: multiple of 8 (sublane-aligned), default 16 so the pixel
    # projections give M = B_BLK*HW >= 256 MXU rows on v6e/v7x, but shrunk so
    # the grid keeps >= 2 parallel steps (both v7x TensorCores) when N allows.
    B_BLK = max(8, (block_b // 8) * 8)
    while B_BLK > 8 and pl.cdiv(N, B_BLK) < 2:
        B_BLK -= 8
    N_pad = pl.cdiv(N, B_BLK) * B_BLK
    O_pad = pl.cdiv(O, 128) * 128   # lane-dense output -> unmasked stores

    # glue: NCHW -> (N, HW, C) token layout, cast to compute dtype, pad batch.
    # TODO(synk): on v7x consider consuming (B, C, HW) blocks with an in-kernel
    # transpose to avoid this standalone HBM round-trip.
    pixels = jnp.transpose(x_nchw.reshape(N, C, HW), (0, 2, 1)).astype(cdt)
    if N_pad != N:
        pixels = jnp.pad(pixels, ((0, N_pad - N), (0, 0), (0, 0)))

    # Pre-transpose weights once and ship them in bf16 by default (half the
    # HBM DMA / VMEM, full-rate bf16 MXU operands); pad c_proj to O_pad lanes.
    wq_t = params["wq"].T.astype(wdt)                                    # (C, C)
    wk_t = params["wk"].T.astype(wdt)
    wv_t = params["wv"].T.astype(wdt)
    wc_t = jnp.pad(params["wc"].T, ((0, 0), (0, O_pad - O))).astype(wdt)  # (C, O_pad)

    bq = params["bq"].reshape(1, C).astype(jnp.float32)
    bk = params["bk"].reshape(1, C).astype(jnp.float32)
    bv = params["bv"].reshape(1, C).astype(jnp.float32)
    bc = jnp.pad(params["bc"].reshape(1, O),
                 ((0, 0), (0, O_pad - O))).astype(jnp.float32)

    pos_cls = params["pos"][0:1].astype(cdt)                 # (1, C)
    pos_pix = params["pos"][1:].astype(cdt)                  # (HW, C)

    # channel -> head one-hot maps, built once here (not per grid step).
    head_map = (jnp.arange(C)[:, None] // D
                == jnp.arange(num_heads)[None, :]).astype(jnp.float32)    # (C, H)
    head_map_t = head_map.T                                               # (H, C)

    kernel = functools.partial(_attention_pool_kernel, num_heads=num_heads)

    # Constant (grid-invariant) inputs: single VMEM buffer (no re-DMA needed).
    def const(shape):
        return pl.BlockSpec(shape, lambda n: (0,) * len(shape),
                            pipeline_mode=pl.Buffered(1))

    # Advisory cost estimate (helps XLA schedule around the custom call).
    isz = jnp.dtype(cdt).itemsize
    flops = (4 * N_pad * HW * C * C                  # k/v pixel projections
             + 6 * N_pad * C * C                     # q/k/v class-token projections
             + 4 * N_pad * (HW + 1) * C * num_heads  # logits + weight expansion
             + 2 * N_pad * (HW + 1) * C              # weighted value combine
             + 2 * N_pad * C * O_pad)                # output projection
    transcendentals = N_pad * (HW + 2) * num_heads
    bytes_accessed = (N_pad * HW * C * isz
                      + (3 * C * C + C * O_pad) * jnp.dtype(wdt).itemsize
                      + (HW + 1) * C * isz
                      + (3 * C + O_pad) * 4
                      + 2 * C * num_heads * 4
                      + N_pad * O_pad * jnp.dtype(out_dtype).itemsize)

    out = pl.pallas_call(
        kernel,
        out_shape=jax.ShapeDtypeStruct((N_pad, O_pad), out_dtype),
        grid_spec=pltpu.PrefetchScalarGridSpec(
            num_scalar_prefetch=0,
            grid=(N_pad // B_BLK,),
            in_specs=[
                pl.BlockSpec((B_BLK, HW, C), lambda n: (n, 0, 0)),   # pixels
                const((1, C)),                                        # pos (class)
                const((HW, C)),                                       # pos (pixels)
                const((C, num_heads)),                                # head_map
                const((num_heads, C)),                                # head_map_t
                const((C, C)), const((1, C)),                         # WqT, bq
                const((C, C)), const((1, C)),                         # WkT, bk
                const((C, C)), const((1, C)),                         # WvT, bv
                const((C, O_pad)), const((1, O_pad)),                 # WcT, bc
            ],
            out_specs=pl.BlockSpec((B_BLK, O_pad), lambda n: (n, 0)),
        ),
        compiler_params=pltpu.CompilerParams(
            dimension_semantics=("parallel",),
            vmem_limit_bytes=_vmem_limit_bytes(B_BLK, HW, C, O_pad, num_heads,
                                               cdt, wdt, out_dtype)),
        cost_estimate=pl.CostEstimate(flops=int(flops),
                                      transcendentals=int(transcendentals),
                                      bytes_accessed=int(bytes_accessed)),
    )(pixels, pos_cls, pos_pix, head_map, head_map_t,
      wq_t, bq, wk_t, bk, wv_t, bv, wc_t, bc)

    return out[:N, :O]


def _reference(x_nchw, params, *, num_heads: int):
    """Pure-JAX reference mirroring F.multi_head_attention_forward semantics."""
    N, C, H, W = x_nchw.shape
    HW = H * W
    L = HW + 1
    D = C // num_heads
    px = jnp.transpose(x_nchw.reshape(N, C, HW), (0, 2, 1))             # (N,HW,C)
    toks = jnp.concatenate([px.mean(axis=1, keepdims=True), px], axis=1)
    toks = toks + params["pos"][None]                                    # (N,L,C)
    q = toks[:, :1] @ params["wq"].T + params["bq"]
    k = toks @ params["wk"].T + params["bk"]
    v = toks @ params["wv"].T + params["bv"]
    qh = q.reshape(N, 1, num_heads, D).transpose(0, 2, 1, 3) * (D ** -0.5)
    kh = k.reshape(N, L, num_heads, D).transpose(0, 2, 1, 3)
    vh = v.reshape(N, L, num_heads, D).transpose(0, 2, 1, 3)
    logits = jnp.einsum("bhqd,bhkd->bhqk", qh, kh)
    attn = jax.nn.softmax(logits, axis=-1)
    o = jnp.einsum("bhqk,bhkd->bhqd", attn, vh)
    o = o.transpose(0, 2, 1, 3).reshape(N, C)
    return o @ params["wc"].T + params["bc"]


if __name__ == "__main__":
    # Small shapes consistent with the module; batch sized so that the default
    # B_BLK = 16 still gives a 2-step "parallel" grid (both v7x TensorCores).
    N = 32                # batch
    spacial_dim = 4       # H = W = 4  -> HW = 16, L = 17
    embed_dim = 32
    num_heads = 4
    output_dim = 16

    key = jax.random.PRNGKey(0)
    ks = jax.random.split(key, 10)

    params = {
        "pos": jax.random.normal(ks[0], (spacial_dim ** 2 + 1, embed_dim),
                                 jnp.float32) / math.sqrt(embed_dim),
        "wq": jax.random.normal(ks[1], (embed_dim, embed_dim), jnp.float32) * 0.05,
        "bq": jax.random.normal(ks[2], (embed_dim,), jnp.float32) * 0.05,
        "wk": jax.random.normal(ks[3], (embed_dim, embed_dim), jnp.float32) * 0.05,
        "bk": jax.random.normal(ks[4], (embed_dim,), jnp.float32) * 0.05,
        "wv": jax.random.normal(ks[5], (embed_dim, embed_dim), jnp.float32) * 0.05,
        "bv": jax.random.normal(ks[6], (embed_dim,), jnp.float32) * 0.05,
        "wc": jax.random.normal(ks[7], (output_dim, embed_dim), jnp.float32) * 0.05,
        "bc": jax.random.normal(ks[8], (output_dim,), jnp.float32) * 0.05,
    }

    x = jax.random.normal(ks[9], (N, embed_dim, spacial_dim, spacial_dim),
                          jnp.float32)

    ref = _reference(x, params, num_heads=num_heads)

    # 1) f32 weights + f32 activations: tight parity check (exact reciprocal).
    out_f32 = attention_pool2d(x, params, num_heads=num_heads, block_b=16,
                               weight_dtype=jnp.float32)
    out_f32 = jax.block_until_ready(out_f32)
    assert out_f32.shape == (N, output_dim)
    assert jnp.allclose(out_f32, ref, atol=2e-3, rtol=2e-3), "f32 mismatch vs reference"

    # 2) Default perf config: bf16 weights / matmul operands, f32 accumulation.
    out_def = attention_pool2d(x, params, num_heads=num_heads, block_b=16)
    out_def = jax.block_until_ready(out_def)
    assert out_def.shape == (N, output_dim)
    assert jnp.allclose(out_def, ref, atol=2.5e-2, rtol=2.5e-2), \
        "bf16-weight mismatch vs reference"

    # 3) Full bf16 compute dtype (half HBM/VMEM traffic, full MXU rate).
    out_bf16 = attention_pool2d(x, params, num_heads=num_heads, block_b=16,
                                compute_dtype=jnp.bfloat16)
    out_bf16 = jax.block_until_ready(out_bf16)
    assert jnp.allclose(out_bf16.astype(jnp.float32), ref,
                        atol=3e-2, rtol=3e-2), "bf16 mismatch vs reference"

    print("KERNEL_OK")
</pallas_src>

<mosaic_0001>
module attributes {stable_mosaic.version = 11 : i64} {
  func.func @_attention_pool_kernel(%arg0: i32, %arg1: memref<16x16x32xf32, #tpu.memory_space<vmem>>, %arg2: memref<1x32xf32, #tpu.memory_space<vmem>>, %arg3: memref<16x32xf32, #tpu.memory_space<vmem>>, %arg4: memref<32x4xf32, #tpu.memory_space<vmem>>, %arg5: memref<4x32xf32, #tpu.memory_space<vmem>>, %arg6: memref<32x32xf32, #tpu.memory_space<vmem>>, %arg7: memref<1x32xf32, #tpu.memory_space<vmem>>, %arg8: memref<32x32xf32, #tpu.memory_space<vmem>>, %arg9: memref<1x32xf32, #tpu.memory_space<vmem>>, %arg10: memref<32x32xf32, #tpu.memory_space<vmem>>, %arg11: memref<1x32xf32, #tpu.memory_space<vmem>>, %arg12: memref<32x128xf32, #tpu.memory_space<vmem>>, %arg13: memref<1x128xf32, #tpu.memory_space<vmem>>, %arg14: memref<16x128xf32, #tpu.memory_space<vmem>>) attributes {dimension_semantics = [#tpu.dimension_semantics<parallel>], iteration_bounds = array<i64: 2>, scalar_prefetch = 0 : i64, scratch_operands = 0 : i64, tpu.core_type = #tpu.core_type<tc>, window_params = [{transform_indices = @transform_0, window_bounds = array<i64: 16, 16, 32>}, {pipeline_mode = #tpu.pipeline_mode<synchronous>, transform_indices = @transform_1, window_bounds = array<i64: 1, 32>}, {pipeline_mode = #tpu.pipeline_mode<synchronous>, transform_indices = @transform_2, window_bounds = array<i64: 16, 32>}, {pipeline_mode = #tpu.pipeline_mode<synchronous>, transform_indices = @transform_3, window_bounds = array<i64: 32, 4>}, {pipeline_mode = #tpu.pipeline_mode<synchronous>, transform_indices = @transform_4, window_bounds = array<i64: 4, 32>}, {pipeline_mode = #tpu.pipeline_mode<synchronous>, transform_indices = @transform_5, window_bounds = array<i64: 32, 32>}, {pipeline_mode = #tpu.pipeline_mode<synchronous>, transform_indices = @transform_6, window_bounds = array<i64: 1, 32>}, {pipeline_mode = #tpu.pipeline_mode<synchronous>, transform_indices = @transform_7, window_bounds = array<i64: 32, 32>}, {pipeline_mode = #tpu.pipeline_mode<synchronous>, transform_indices = @transform_8, window_bounds = array<i64: 1, 32>}, {pipeline_mode = #tpu.pipeline_mode<synchronous>, transform_indices = @transform_9, window_bounds = array<i64: 32, 32>}, {pipeline_mode = #tpu.pipeline_mode<synchronous>, transform_indices = @transform_10, window_bounds = array<i64: 1, 32>}, {pipeline_mode = #tpu.pipeline_mode<synchronous>, transform_indices = @transform_11, window_bounds = array<i64: 32, 128>}, {pipeline_mode = #tpu.pipeline_mode<synchronous>, transform_indices = @transform_12, window_bounds = array<i64: 1, 128>}, {transform_indices = @transform_13, window_bounds = array<i64: 16, 128>}]} {
    %c0 = arith.constant 0 : index
    %c0_0 = arith.constant 0 : index
    %c0_1 = arith.constant 0 : index
    %0 = vector.load %arg1[%c0, %c0_0, %c0_1] : memref<16x16x32xf32, #tpu.memory_space<vmem>>, vector<16x16x32xf32>
    %cst = arith.constant dense<0.000000e+00> : vector<16x32xf32>
    %1 = vector.multi_reduction <add>, %0, %cst [1] : vector<16x16x32xf32> to vector<16x32xf32>
    %cst_2 = arith.constant 1.600000e+01 : f32
    %2 = vector.broadcast %cst_2 : f32 to vector<16x32xf32>
    %3 = arith.divf %1, %2 : vector<16x32xf32>
    %c0_3 = arith.constant 0 : index
    %c0_4 = arith.constant 0 : index
    %4 = vector.load %arg2[%c0_3, %c0_4] : memref<1x32xf32, #tpu.memory_space<vmem>>, vector<1x32xf32>
    %5 = vector.broadcast %4 : vector<1x32xf32> to vector<16x32xf32>
    %6 = arith.addf %3, %5 : vector<16x32xf32>
    %c0_5 = arith.constant 0 : index
    %c0_6 = arith.constant 0 : index
    %7 = vector.load %arg3[%c0_5, %c0_6] : memref<16x32xf32, #tpu.memory_space<vmem>>, vector<16x32xf32>
    %8 = vector.shape_cast %7 : vector<16x32xf32> to vector<1x16x32xf32>
    %9 = vector.broadcast %8 : vector<1x16x32xf32> to vector<16x16x32xf32>
    %10 = arith.addf %0, %9 : vector<16x16x32xf32>
    %11 = vector.shape_cast %10 : vector<16x16x32xf32> to vector<256x32xf32>
    %c0_7 = arith.constant 0 : index
    %c0_8 = arith.constant 0 : index
    %12 = vector.load %arg6[%c0_7, %c0_8] : memref<32x32xf32, #tpu.memory_space<vmem>>, vector<32x32xf32>
    %cst_9 = arith.constant dense<0.000000e+00> : vector<16x32xf32>
    %13 = tpu.matmul %6, %12, %cst_9 {dimension_numbers = #tpu.dot_dimension_numbers<[1], [0], [0], [1], [0, 0, 1, 1], [], []>} : vector<16x32xf32>, vector<32x32xf32>, vector<16x32xf32> -> vector<16x32xf32>
    %c0_10 = arith.constant 0 : index
    %c0_11 = arith.constant 0 : index
    %14 = vector.load %arg7[%c0_10, %c0_11] : memref<1x32xf32, #tpu.memory_space<vmem>>, vector<1x32xf32>
    %15 = vector.broadcast %14 : vector<1x32xf32> to vector<16x32xf32>
    %16 = arith.addf %13, %15 : vector<16x32xf32>
    %cst_12 = arith.constant 0.353553385 : f32
    %17 = vector.broadcast %cst_12 : f32 to vector<16x32xf32>
    %18 = arith.mulf %16, %17 : vector<16x32xf32>
    %c0_13 = arith.constant 0 : index
    %c0_14 = arith.constant 0 : index
    %19 = vector.load %arg8[%c0_13, %c0_14] : memref<32x32xf32, #tpu.memory_space<vmem>>, vector<32x32xf32>
    %cst_15 = arith.constant dense<0.000000e+00> : vector<16x32xf32>
    %20 = tpu.matmul %6, %19, %cst_15 {dimension_numbers = #tpu.dot_dimension_numbers<[1], [0], [0], [1], [0, 0, 1, 1], [], []>} : vector<16x32xf32>, vector<32x32xf32>, vector<16x32xf32> -> vector<16x32xf32>
    %c0_16 = arith.constant 0 : index
    %c0_17 = arith.constant 0 : index
    %21 = vector.load %arg9[%c0_16, %c0_17] : memref<1x32xf32, #tpu.memory_space<vmem>>, vector<1x32xf32>
    %22 = vector.broadcast %21 : vector<1x32xf32> to vector<16x32xf32>
    %23 = arith.addf %20, %22 : vector<16x32xf32>
    %c0_18 = arith.constant 0 : index
    %c0_19 = arith.constant 0 : index
    %24 = vector.load %arg8[%c0_18, %c0_19] : memref<32x32xf32, #tpu.memory_space<vmem>>, vector<32x32xf32>
    %cst_20 = arith.constant dense<0.000000e+00> : vector<256x32xf32>
    %25 = tpu.matmul %11, %24, %cst_20 {dimension_numbers = #tpu.dot_dimension_numbers<[1], [0], [0], [1], [0, 0, 1, 1], [], []>} : vector<256x32xf32>, vector<32x32xf32>, vector<256x32xf32> -> vector<256x32xf32>
    %c0_21 = arith.constant 0 : index
    %c0_22 = arith.constant 0 : index
    %26 = vector.load %arg9[%c0_21, %c0_22] : memref<1x32xf32, #tpu.memory_space<vmem>>, vector<1x32xf32>
    %27 = vector.broadcast %26 : vector<1x32xf32> to vector<256x32xf32>
    %28 = arith.addf %25, %27 : vector<256x32xf32>
    %c0_23 = arith.constant 0 : index
    %c0_24 = arith.constant 0 : index
    %29 = vector.load %arg4[%c0_23, %c0_24] : memref<32x4xf32, #tpu.memory_space<vmem>>, vector<32x4xf32>
    %c0_25 = arith.constant 0 : index
    %c0_26 = arith.constant 0 : index
    %30 = vector.load %arg5[%c0_25, %c0_26] : memref<4x32xf32, #tpu.memory_space<vmem>>, vector<4x32xf32>
    %31 = vector.shape_cast %28 : vector<256x32xf32> to vector<16x16x32xf32>
    %32 = vector.shape_cast %18 : vector<16x32xf32> to vector<16x1x32xf32>
    %33 = vector.broadcast %32 : vector<16x1x32xf32> to vector<16x16x32xf32>
    %34 = arith.mulf %31, %33 : vector<16x16x32xf32>
    %35 = vector.shape_cast %34 : vector<16x16x32xf32> to vector<256x32xf32>
    %cst_27 = arith.constant dense<0.000000e+00> : vector<256x4xf32>
    %36 = tpu.matmul %35, %29, %cst_27 {dimension_numbers = #tpu.dot_dimension_numbers<[1], [0], [0], [1], [0, 0, 1, 1], [], []>} : vector<256x32xf32>, vector<32x4xf32>, vector<256x4xf32> -> vector<256x4xf32>
    %37 = vector.shape_cast %36 : vector<256x4xf32> to vector<16x16x4xf32>
    %38 = arith.mulf %18, %23 : vector<16x32xf32>
    %cst_28 = arith.constant dense<0.000000e+00> : vector<16x4xf32>
    %39 = tpu.matmul %38, %29, %cst_28 {dimension_numbers = #tpu.dot_dimension_numbers<[1], [0], [0], [1], [0, 0, 1, 1], [], []>} : vector<16x32xf32>, vector<32x4xf32>, vector<16x4xf32> -> vector<16x4xf32>
    %cst_29 = arith.constant dense<0xFF800000> : vector<16x4xf32>
    %40 = vector.multi_reduction <maximumf>, %37, %cst_29 [1] : vector<16x16x4xf32> to vector<16x4xf32>
    %41 = arith.maximumf %40, %39 : vector<16x4xf32>
    %42 = vector.shape_cast %41 : vector<16x4xf32> to vector<16x1x4xf32>
    %43 = vector.broadcast %42 : vector<16x1x4xf32> to vector<16x16x4xf32>
    %44 = arith.subf %37, %43 : vector<16x16x4xf32>
    %45 = math.exp %44 : vector<16x16x4xf32>
    %46 = arith.subf %39, %41 : vector<16x4xf32>
    %47 = math.exp %46 : vector<16x4xf32>
    %cst_30 = arith.constant dense<0.000000e+00> : vector<16x4xf32>
    %48 = vector.multi_reduction <add>, %45, %cst_30 [1] : vector<16x16x4xf32> to vector<16x4xf32>
    %49 = arith.addf %48, %47 : vector<16x4xf32>
    %50 = tpu.reciprocal %49 : vector<16x4xf32> -> vector<16x4xf32>
    %51 = vector.shape_cast %50 : vector<16x4xf32> to vector<16x1x4xf32>
    %52 = vector.broadcast %51 : vector<16x1x4xf32> to vector<16x16x4xf32>
    %53 = arith.mulf %45, %52 : vector<16x16x4xf32>
    %54 = arith.mulf %47, %50 : vector<16x4xf32>
    %c0_31 = arith.constant 0 : index
    %c0_32 = arith.constant 0 : index
    %55 = vector.load %arg10[%c0_31, %c0_32] : memref<32x32xf32, #tpu.memory_space<vmem>>, vector<32x32xf32>
    %cst_33 = arith.constant dense<0.000000e+00> : vector<16x32xf32>
    %56 = tpu.matmul %6, %55, %cst_33 {dimension_numbers = #tpu.dot_dimension_numbers<[1], [0], [0], [1], [0, 0, 1, 1], [], []>} : vector<16x32xf32>, vector<32x32xf32>, vector<16x32xf32> -> vector<16x32xf32>
    %c0_34 = arith.constant 0 : index
    %c0_35 = arith.constant 0 : index
    %57 = vector.load %arg11[%c0_34, %c0_35] : memref<1x32xf32, #tpu.memory_space<vmem>>, vector<1x32xf32>
    %58 = vector.broadcast %57 : vector<1x32xf32> to vector<16x32xf32>
    %59 = arith.addf %56, %58 : vector<16x32xf32>
    %c0_36 = arith.constant 0 : index
    %c0_37 = arith.constant 0 : index
    %60 = vector.load %arg10[%c0_36, %c0_37] : memref<32x32xf32, #tpu.memory_space<vmem>>, vector<32x32xf32>
    %cst_38 = arith.constant dense<0.000000e+00> : vector<256x32xf32>
    %61 = tpu.matmul %11, %60, %cst_38 {dimension_numbers = #tpu.dot_dimension_numbers<[1], [0], [0], [1], [0, 0, 1, 1], [], []>} : vector<256x32xf32>, vector<32x32xf32>, vector<256x32xf32> -> vector<256x32xf32>
    %c0_39 = arith.constant 0 : index
    %c0_40 = arith.constant 0 : index
    %62 = vector.load %arg11[%c0_39, %c0_40] : memref<1x32xf32, #tpu.memory_space<vmem>>, vector<1x32xf32>
    %63 = vector.broadcast %62 : vector<1x32xf32> to vector<256x32xf32>
    %64 = arith.addf %61, %63 : vector<256x32xf32>
    %65 = vector.shape_cast %53 : vector<16x16x4xf32> to vector<256x4xf32>
    %cst_41 = arith.constant dense<0.000000e+00> : vector<256x32xf32>
    %66 = tpu.matmul %65, %30, %cst_41 {dimension_numbers = #tpu.dot_dimension_numbers<[1], [0], [0], [1], [0, 0, 1, 1], [], []>} : vector<256x4xf32>, vector<4x32xf32>, vector<256x32xf32> -> vector<256x32xf32>
    %67 = vector.shape_cast %66 : vector<256x32xf32> to vector<16x16x32xf32>
    %cst_42 = arith.constant dense<0.000000e+00> : vector<16x32xf32>
    %68 = tpu.matmul %54, %30, %cst_42 {dimension_numbers = #tpu.dot_dimension_numbers<[1], [0], [0], [1], [0, 0, 1, 1], [], []>} : vector<16x4xf32>, vector<4x32xf32>, vector<16x32xf32> -> vector<16x32xf32>
    %69 = vector.shape_cast %64 : vector<256x32xf32> to vector<16x16x32xf32>
    %70 = arith.mulf %67, %69 : vector<16x16x32xf32>
    %cst_43 = arith.constant dense<0.000000e+00> : vector<16x32xf32>
    %71 = vector.multi_reduction <add>, %70, %cst_43 [1] : vector<16x16x32xf32> to vector<16x32xf32>
    %72 = arith.mulf %68, %59 : vector<16x32xf32>
    %73 = arith.addf %71, %72 : vector<16x32xf32>
    %c0_44 = arith.constant 0 : index
    %c0_45 = arith.constant 0 : index
    %74 = vector.load %arg12[%c0_44, %c0_45] : memref<32x128xf32, #tpu.memory_space<vmem>>, vector<32x128xf32>
    %cst_46 = arith.constant dense<0.000000e+00> : vector<16x128xf32>
    %75 = tpu.matmul %73, %74, %cst_46 {dimension_numbers = #tpu.dot_dimension_numbers<[1], [0], [0], [1], [0, 0, 1, 1], [], []>} : vector<16x32xf32>, vector<32x128xf32>, vector<16x128xf32> -> vector<16x128xf32>
    %c0_47 = arith.constant 0 : index
    %c0_48 = arith.constant 0 : index
    %76 = vector.load %arg13[%c0_47, %c0_48] : memref<1x128xf32, #tpu.memory_space<vmem>>, vector<1x128xf32>
    %77 = vector.broadcast %76 : vector<1x128xf32> to vector<16x128xf32>
    %78 = arith.addf %75, %77 : vector<16x128xf32>
    %c0_49 = arith.constant 0 : index
    %c0_50 = arith.constant 0 : index
    %79 = vector.load %arg14[%c0_49, %c0_50] : memref<16x128xf32, #tpu.memory_space<vmem>>, vector<16x128xf32>
    tpu.vector_store %arg14[%c0_49, %c0_50], %78 {strides = array<i32>} : memref<16x128xf32, #tpu.memory_space<vmem>>, vector<16x128xf32>,
    return
  }
  func.func @transform_0(%arg0: i32) -> (i32, i32, i32) {
    %c0_i32 = arith.constant 0 : i32
    %c0_i32_0 = arith.constant 0 : i32
    %c0_i32_1 = arith.constant 0 : i32
    return %arg0, %c0_i32, %c0_i32_0 : i32, i32, i32
  }
  func.func @transform_1(%arg0: i32) -> (i32, i32) {
    %c0_i32 = arith.constant 0 : i32
    %c0_i32_0 = arith.constant 0 : i32
    %c0_i32_1 = arith.constant 0 : i32
    return %c0_i32, %c0_i32_0 : i32, i32
  }
  func.func @transform_2(%arg0: i32) -> (i32, i32) {
    %c0_i32 = arith.constant 0 : i32
    %c0_i32_0 = arith.constant 0 : i32
    %c0_i32_1 = arith.constant 0 : i32
    return %c0_i32, %c0_i32_0 : i32, i32
  }
  func.func @transform_3(%arg0: i32) -> (i32, i32) {
    %c0_i32 = arith.constant 0 : i32
    %c0_i32_0 = arith.constant 0 : i32
    %c0_i32_1 = arith.constant 0 : i32
    return %c0_i32, %c0_i32_0 : i32, i32
  }
  func.func @transform_4(%arg0: i32) -> (i32, i32) {
    %c0_i32 = arith.constant 0 : i32
    %c0_i32_0 = arith.constant 0 : i32
    %c0_i32_1 = arith.constant 0 : i32
    return %c0_i32, %c0_i32_0 : i32, i32
  }
  func.func @transform_5(%arg0: i32) -> (i32, i32) {
    %c0_i32 = arith.constant 0 : i32
    %c0_i32_0 = arith.constant 0 : i32
    %c0_i32_1 = arith.constant 0 : i32
    return %c0_i32, %c0_i32_0 : i32, i32
  }
  func.func @transform_6(%arg0: i32) -> (i32, i32) {
    %c0_i32 = arith.constant 0 : i32
    %c0_i32_0 = arith.constant 0 : i32
    %c0_i32_1 = arith.constant 0 : i32
    return %c0_i32, %c0_i32_0 : i32, i32
  }
  func.func @transform_7(%arg0: i32) -> (i32, i32) {
    %c0_i32 = arith.constant 0 : i32
    %c0_i32_0 = arith.constant 0 : i32
    %c0_i32_1 = arith.constant 0 : i32
    return %c0_i32, %c0_i32_0 : i32, i32
  }
  func.func @transform_8(%arg0: i32) -> (i32, i32) {
    %c0_i32 = arith.constant 0 : i32
    %c0_i32_0 = arith.constant 0 : i32
    %c0_i32_1 = arith.constant 0 : i32
    return %c0_i32, %c0_i32_0 : i32, i32
  }
  func.func @transform_9(%arg0: i32) -> (i32, i32) {
    %c0_i32 = arith.constant 0 : i32
    %c0_i32_0 = arith.constant 0 : i32
    %c0_i32_1 = arith.constant 0 : i32
    return %c0_i32, %c0_i32_0 : i32, i32
  }
  func.func @transform_10(%arg0: i32) -> (i32, i32) {
    %c0_i32 = arith.constant 0 : i32
    %c0_i32_0 = arith.constant 0 : i32
    %c0_i32_1 = arith.constant 0 : i32
    return %c0_i32, %c0_i32_0 : i32, i32
  }
  func.func @transform_11(%arg0: i32) -> (i32, i32) {
    %c0_i32 = arith.constant 0 : i32
    %c0_i32_0 = arith.constant 0 : i32
    %c0_i32_1 = arith.constant 0 : i32
    return %c0_i32, %c0_i32_0 : i32, i32
  }
  func.func @transform_12(%arg0: i32) -> (i32, i32) {
    %c0_i32 = arith.constant 0 : i32
    %c0_i32_0 = arith.constant 0 : i32
    %c0_i32_1 = arith.constant 0 : i32
    return %c0_i32, %c0_i32_0 : i32, i32
  }
  func.func @transform_13(%arg0: i32) -> (i32, i32) {
    %c0_i32 = arith.constant 0 : i32
    %c0_i32_0 = arith.constant 0 : i32
    return %arg0, %c0_i32 : i32, i32
  }
}

</mosaic_0001>

<llo_original>
// kernel: tpu_custom_call.1
$region0: #{tpu_custom_call.1}
  #allocation0 [shape = 'u32[]', space=smem, size = 0x4, offset = 0x4, fixed_abs, tag = 'smem constant byte address 0x4 - core index']
  #allocation1 [shape = 'u32[144,128]{1,0:T(1,128)}', space=vmem, size = 0x12000, scoped, tag = 'internal scratch']
  %s0 = inlined_call_operand.hbm [shape: f32[32,16,32], index: 0, kind: input, shape index: {}]
  %s1 = inlined_call_operand.vmem [shape: f32[1,32], index: 1, kind: input, shape index: {}]
  %s2 = inlined_call_operand.hbm [shape: f32[16,32], index: 2, kind: input, shape index: {}]
  %s3 = inlined_call_operand.vmem [shape: f32[32,4], index: 3, kind: input, shape index: {}]
  %s4 = inlined_call_operand.hbm [shape: f32[4,32], index: 4, kind: input, shape index: {}]
  %s5 = inlined_call_operand.vmem [shape: f32[32,32], index: 5, kind: input, shape index: {}]
  %s6 = inlined_call_operand.vmem [shape: f32[1,32], index: 6, kind: input, shape index: {}]
  %s7 = inlined_call_operand.hbm [shape: f32[32,32], index: 7, kind: input, shape index: {}]
  %s8 = inlined_call_operand.hbm [shape: f32[1,32], index: 8, kind: input, shape index: {}]
  %s9 = inlined_call_operand.vmem [shape: f32[32,32], index: 9, kind: input, shape index: {}]
  %s10 = inlined_call_operand.vmem [shape: f32[1,32], index: 10, kind: input, shape index: {}]
  %s11 = inlined_call_operand.hbm [shape: f32[32,128], index: 11, kind: input, shape index: {}]
  %s12 = inlined_call_operand.vmem [shape: f32[1,128], index: 12, kind: input, shape index: {}]
  %s13 = inlined_call_operand.hbm [shape: f32[32,128], index: 13, kind: output, shape index: {}]
  %s14 = sld [smem:[#allocation0]]
  $region109: #{tpu_custom_call.1} parent=0
    _
  %s16 = ssub.s32 1, %s14
  %s17 = scalar_select 0, %s16, %s14
  $region1: #{tpu_custom_call.1} parent=0
    #allocation2 [shape = 'u8[262144]{0}', space=vmem, size = 0x40000, scoped, tag = 'input window, operand 0']
    #allocation3 [shape = 's32[2]{0}', space=sflag, size = 0x8, scoped, tag = 'scoped memory for tpu_custom_call.1']
    #allocation4 [shape = 's32[2]{0}', space=sflag, size = 0x8, scoped, tag = 'scoped memory for tpu_custom_call.1']
    #allocation5 [shape = 'u8[8192]{0}', space=vmem, size = 0x2000, scoped, tag = 'input window, operand 2, single buffered']
    #allocation6 [shape = 's32[1]{0}', space=sflag, size = 0x4, scoped, tag = 'scoped memory for tpu_custom_call.1']
    #allocation7 [shape = 'u8[2048]{0}', space=vmem, size = 0x800, scoped, tag = 'input window, operand 4, single buffered']
    #allocation8 [shape = 'u8[16384]{0}', space=vmem, size = 0x4000, scoped, tag = 'input window, operand 7, single buffered']
    #allocation9 [shape = 's32[1]{0}', space=sflag, size = 0x4, scoped, tag = 'scoped memory for tpu_custom_call.1']
    #allocation10 [shape = 'u8[512]{0}', space=vmem, size = 0x400, scoped, tag = 'input window, operand 8, single buffered']
    #allocation11 [shape = 'u8[16384]{0}', space=vmem, size = 0x4000, scoped, tag = 'input window, operand 11, single buffered']
    #allocation12 [shape = 's32[1]{0}', space=sflag, size = 0x4, scoped, tag = 'scoped memory for tpu_custom_call.1']
    #allocation13 [shape = 'u8[16384]{0}', space=vmem, size = 0x4000, scoped, tag = 'output window, operand 0']
    %18 = vsyncpa [#allocation3], 0
    %s19 = scalar_lea.sflag [#allocation3], 1
    %20 = vsyncpa %s19, 0
    %21 = vsyncpa [#allocation6], 0
    %22 = vsyncpa [#allocation9], 0
    %23 = vsyncpa [#allocation12], 0
    %24 = vsyncpa [#allocation4], 0
    %s25 = scalar_lea.sflag [#allocation4], 1
    %26 = vsyncpa %s25, 0
    loop: start=0, step=1, limit=4
    $region2: #{tpu_custom_call.1} parent=1 // loop_pre_header
      _
    $region3: #{tpu_custom_call.1} parent=1 // loop_header
      %s28 = sphi 0, %s32
      %p29 = scmp.ge.s32.totalorder %s28, 4
      %s38 = sphi 0, %s40
      %s41 = sphi 0, %s38
      %s42 = sphi 0, %s41
      %s58 = sphi 0, %s42
      %s62 = sphi 0, %s62
      %s64 = sphi 0, %s62
      %s65 = sphi 0, %s64
      %s79 = sphi 0, %s65
      %s83 = sphi 0, %s83
      %s85 = sphi 0, %s83
      %s86 = sphi 0, %s85
      %s100 = sphi 0, %s86
      %s104 = sphi 0, %s104
      %s106 = sphi 0, %s104
      %s107 = sphi 0, %s106
      %s121 = sphi 0, %s107
      %s125 = sphi 0, %s125
      %s127 = sphi 0, %s125
      %s128 = sphi 0, %s127
      %s142 = sphi 0, %s128
      %s146 = sphi 0, %s146
      %s148 = sphi 0, %s146
      %s149 = sphi 0, %s148
      %s163 = sphi 0, %s149
      %s167 = sphi 0, %s167
      %s169 = sphi 0, %s167
      %s170 = sphi 0, %s169
      %s184 = sphi 0, %s170
      %s188 = sphi 0, %s188
      %s190 = sphi 0, %s188
      %s191 = sphi 0, %s190
      %s205 = sphi 0, %s191
      %s209 = sphi 0, %s209
      %s211 = sphi 0, %s209
      %s212 = sphi 0, %s211
      %s226 = sphi 0, %s212
      %s230 = sphi 0, %s230
      %s232 = sphi 0, %s230
      %s233 = sphi 0, %s232
      %s247 = sphi 0, %s233
      %s251 = sphi 0, %s251
      %s253 = sphi 0, %s251
      %s254 = sphi 0, %s253
      %s268 = sphi 0, %s254
      %s272 = sphi 0, %s272
      %s274 = sphi 0, %s272
      %s275 = sphi 0, %s274
      %s289 = sphi 0, %s275
      %s293 = sphi 0, %s293
      %s295 = sphi 0, %s293
      %s296 = sphi 0, %s295
      %s310 = sphi 0, %s296
      %s316 = sphi 0, %s318
      %s319 = sphi 0, %s316
      %s320 = sphi 0, %s319
      %s336 = sphi 0, %s320
    $region4: #{tpu_custom_call.1} parent=1 // loop_header_branch
      %31 = sbr.rel (%p29) target = $region8
    $region5: #{tpu_custom_call.1} parent=1 // loop_body
      %s33 = ssub.s32 %s28, 1
      %s34 = ssub.s32 %s28, 2
      %s35 = sadd.s32 %s28, 1
      %s36 = ssub.s32 %s28, %s35
      %p37 = scmp.eq.s32.totalorder %s36, 0
      %s39 = sadd.s32 %s38, 1
      %s40 = scalar_select %p37, %s38, %s39
      %p43 = pneg %p37
      %p44 = scmp.eq.s32.totalorder %s28, 1
      %p45 = por %p43, %p44
      %p46 = scmp.ne.s32.totalorder %s38, %s41
      %p47 = scmp.eq.s32.totalorder %s28, 0
      %p48 = por %p46, %p47
      %p49 = scmp.ne.s32.totalorder %s38, %s41
      %p50 = scmp.eq.s32.totalorder %s33, 1
      %p51 = por %p49, %p50
      %p52 = scmp.ne.s32.totalorder %s41, %s42
      %p53 = scmp.eq.s32.totalorder %s33, 0
      %p54 = por %p52, %p53
      %p55 = scmp.ne.s32.totalorder %s41, %s42
      %p56 = scmp.eq.s32.totalorder %s34, 1
      %p57 = por %p55, %p56
      %p59 = scmp.ne.s32.totalorder %s42, %s58
      %p60 = scmp.eq.s32.totalorder %s34, 0
      %p61 = por %p59, %p60
      %s63 = sadd.s32 %s62, 1
      %p66 = scmp.eq.s32.totalorder %s28, 1
      %p67 = scmp.ne.s32.totalorder %s62, %s64
      %p68 = scmp.eq.s32.totalorder %s28, 0
      %p69 = por %p67, %p68
      %p70 = scmp.ne.s32.totalorder %s62, %s64
      %p71 = scmp.eq.s32.totalorder %s33, 1
      %p72 = por %p70, %p71
      %p73 = scmp.ne.s32.totalorder %s64, %s65
      %p74 = scmp.eq.s32.totalorder %s33, 0
      %p75 = por %p73, %p74
      %p76 = scmp.ne.s32.totalorder %s64, %s65
      %p77 = scmp.eq.s32.totalorder %s34, 1
      %p78 = por %p76, %p77
      %p80 = scmp.ne.s32.totalorder %s65, %s79
      %p81 = scmp.eq.s32.totalorder %s34, 0
      %p82 = por %p80, %p81
      %s84 = sadd.s32 %s83, 1
      %p87 = scmp.eq.s32.totalorder %s28, 1
      %p88 = scmp.ne.s32.totalorder %s83, %s85
      %p89 = scmp.eq.s32.totalorder %s28, 0
      %p90 = por %p88, %p89
      %p91 = scmp.ne.s32.totalorder %s83, %s85
      %p92 = scmp.eq.s32.totalorder %s33, 1
      %p93 = por %p91, %p92
      %p94 = scmp.ne.s32.totalorder %s85, %s86
      %p95 = scmp.eq.s32.totalorder %s33, 0
      %p96 = por %p94, %p95
      %p97 = scmp.ne.s32.totalorder %s85, %s86
      %p98 = scmp.eq.s32.totalorder %s34, 1
      %p99 = por %p97, %p98
      %p101 = scmp.ne.s32.totalorder %s86, %s100
      %p102 = scmp.eq.s32.totalorder %s34, 0
      %p103 = por %p101, %p102
      %s105 = sadd.s32 %s104, 1
      %p108 = scmp.eq.s32.totalorder %s28, 1
      %p109 = scmp.ne.s32.totalorder %s104, %s106
      %p110 = scmp.eq.s32.totalorder %s28, 0
      %p111 = por %p109, %p110
      %p112 = scmp.ne.s32.totalorder %s104, %s106
      %p113 = scmp.eq.s32.totalorder %s33, 1
      %p114 = por %p112, %p113
      %p115 = scmp.ne.s32.totalorder %s106, %s107
      %p116 = scmp.eq.s32.totalorder %s33, 0
      %p117 = por %p115, %p116
      %p118 = scmp.ne.s32.totalorder %s106, %s107
      %p119 = scmp.eq.s32.totalorder %s34, 1
      %p120 = por %p118, %p119
      %p122 = scmp.ne.s32.totalorder %s107, %s121
      %p123 = scmp.eq.s32.totalorder %s34, 0
      %p124 = por %p122, %p123
      %s126 = sadd.s32 %s125, 1
      %p129 = scmp.eq.s32.totalorder %s28, 1
      %p130 = scmp.ne.s32.totalorder %s125, %s127
      %p131 = scmp.eq.s32.totalorder %s28, 0
      %p132 = por %p130, %p131
      %p133 = scmp.ne.s32.totalorder %s125, %s127
      %p134 = scmp.eq.s32.totalorder %s33, 1
      %p135 = por %p133, %p134
      %p136 = scmp.ne.s32.totalorder %s127, %s128
      %p137 = scmp.eq.s32.totalorder %s33, 0
      %p138 = por %p136, %p137
      %p139 = scmp.ne.s32.totalorder %s127, %s128
      %p140 = scmp.eq.s32.totalorder %s34, 1
      %p141 = por %p139, %p140
      %p143 = scmp.ne.s32.totalorder %s128, %s142
      %p144 = scmp.eq.s32.totalorder %s34, 0
      %p145 = por %p143, %p144
      %s147 = sadd.s32 %s146, 1
      %p150 = scmp.eq.s32.totalorder %s28, 1
      %p151 = scmp.ne.s32.totalorder %s146, %s148
      %p152 = scmp.eq.s32.totalorder %s28, 0
      %p153 = por %p151, %p152
      %p154 = scmp.ne.s32.totalorder %s146, %s148
      %p155 = scmp.eq.s32.totalorder %s33, 1
      %p156 = por %p154, %p155
      %p157 = scmp.ne.s32.totalorder %s148, %s149
      %p158 = scmp.eq.s32.totalorder %s33, 0
      %p159 = por %p157, %p158
      %p160 = scmp.ne.s32.totalorder %s148, %s149
      %p161 = scmp.eq.s32.totalorder %s34, 1
      %p162 = por %p160, %p161
      %p164 = scmp.ne.s32.totalorder %s149, %s163
      %p165 = scmp.eq.s32.totalorder %s34, 0
      %p166 = por %p164, %p165
      %s168 = sadd.s32 %s167, 1
      %p171 = scmp.eq.s32.totalorder %s28, 1
      %p172 = scmp.ne.s32.totalorder %s167, %s169
      %p173 = scmp.eq.s32.totalorder %s28, 0
      %p174 = por %p172, %p173
      %p175 = scmp.ne.s32.totalorder %s167, %s169
      %p176 = scmp.eq.s32.totalorder %s33, 1
      %p177 = por %p175, %p176
      %p178 = scmp.ne.s32.totalorder %s169, %s170
      %p179 = scmp.eq.s32.totalorder %s33, 0
      %p180 = por %p178, %p179
      %p181 = scmp.ne.s32.totalorder %s169, %s170
      %p182 = scmp.eq.s32.totalorder %s34, 1
      %p183 = por %p181, %p182
      %p185 = scmp.ne.s32.totalorder %s170, %s184
      %p186 = scmp.eq.s32.totalorder %s34, 0
      %p187 = por %p185, %p186
      %s189 = sadd.s32 %s188, 1
      %p192 = scmp.eq.s32.totalorder %s28, 1
      %p193 = scmp.ne.s32.totalorder %s188, %s190
      %p194 = scmp.eq.s32.totalorder %s28, 0
      %p195 = por %p193, %p194
      %p196 = scmp.ne.s32.totalorder %s188, %s190
      %p197 = scmp.eq.s32.totalorder %s33, 1
      %p198 = por %p196, %p197
      %p199 = scmp.ne.s32.totalorder %s190, %s191
      %p200 = scmp.eq.s32.totalorder %s33, 0
      %p201 = por %p199, %p200
      %p202 = scmp.ne.s32.totalorder %s190, %s191
      %p203 = scmp.eq.s32.totalorder %s34, 1
      %p204 = por %p202, %p203
      %p206 = scmp.ne.s32.totalorder %s191, %s205
      %p207 = scmp.eq.s32.totalorder %s34, 0
      %p208 = por %p206, %p207
      %s210 = sadd.s32 %s209, 1
      %p213 = scmp.eq.s32.totalorder %s28, 1
      %p214 = scmp.ne.s32.totalorder %s209, %s211
      %p215 = scmp.eq.s32.totalorder %s28, 0
      %p216 = por %p214, %p215
      %p217 = scmp.ne.s32.totalorder %s209, %s211
      %p218 = scmp.eq.s32.totalorder %s33, 1
      %p219 = por %p217, %p218
      %p220 = scmp.ne.s32.totalorder %s211, %s212
      %p221 = scmp.eq.s32.totalorder %s33, 0
      %p222 = por %p220, %p221
      %p223 = scmp.ne.s32.totalorder %s211, %s212
      %p224 = scmp.eq.s32.totalorder %s34, 1
      %p225 = por %p223, %p224
      %p227 = scmp.ne.s32.totalorder %s212, %s226
      %p228 = scmp.eq.s32.totalorder %s34, 0
      %p229 = por %p227, %p228
      %s231 = sadd.s32 %s230, 1
      %p234 = scmp.eq.s32.totalorder %s28, 1
      %p235 = scmp.ne.s32.totalorder %s230, %s232
      %p236 = scmp.eq.s32.totalorder %s28, 0
      %p237 = por %p235, %p236
      %p238 = scmp.ne.s32.totalorder %s230, %s232
      %p239 = scmp.eq.s32.totalorder %s33, 1
      %p240 = por %p238, %p239
      %p241 = scmp.ne.s32.totalorder %s232, %s233
      %p242 = scmp.eq.s32.totalorder %s33, 0
      %p243 = por %p241, %p242
      %p244 = scmp.ne.s32.totalorder %s232, %s233
      %p245 = scmp.eq.s32.totalorder %s34, 1
      %p246 = por %p244, %p245
      %p248 = scmp.ne.s32.totalorder %s233, %s247
      %p249 = scmp.eq.s32.totalorder %s34, 0
      %p250 = por %p248, %p249
      %s252 = sadd.s32 %s251, 1
      %p255 = scmp.eq.s32.totalorder %s28, 1
      %p256 = scmp.ne.s32.totalorder %s251, %s253
      %p257 = scmp.eq.s32.totalorder %s28, 0
      %p258 = por %p256, %p257
      %p259 = scmp.ne.s32.totalorder %s251, %s253
      %p260 = scmp.eq.s32.totalorder %s33, 1
      %p261 = por %p259, %p260
      %p262 = scmp.ne.s32.totalorder %s253, %s254
      %p263 = scmp.eq.s32.totalorder %s33, 0
      %p264 = por %p262, %p263
      %p265 = scmp.ne.s32.totalorder %s253, %s254
      %p266 = scmp.eq.s32.totalorder %s34, 1
      %p267 = por %p265, %p266
      %p269 = scmp.ne.s32.totalorder %s254, %s268
      %p270 = scmp.eq.s32.totalorder %s34, 0
      %p271 = por %p269, %p270
      %s273 = sadd.s32 %s272, 1
      %p276 = scmp.eq.s32.totalorder %s28, 1
      %p277 = scmp.ne.s32.totalorder %s272, %s274
      %p278 = scmp.eq.s32.totalorder %s28, 0
      %p279 = por %p277, %p278
      %p280 = scmp.ne.s32.totalorder %s272, %s274
      %p281 = scmp.eq.s32.totalorder %s33, 1
      %p282 = por %p280, %p281
      %p283 = scmp.ne.s32.totalorder %s274, %s275
      %p284 = scmp.eq.s32.totalorder %s33, 0
      %p285 = por %p283, %p284
      %p286 = scmp.ne.s32.totalorder %s274, %s275
      %p287 = scmp.eq.s32.totalorder %s34, 1
      %p288 = por %p286, %p287
      %p290 = scmp.ne.s32.totalorder %s275, %s289
      %p291 = scmp.eq.s32.totalorder %s34, 0
      %p292 = por %p290, %p291
      %s294 = sadd.s32 %s293, 1
      %p297 = scmp.eq.s32.totalorder %s28, 1
      %p298 = scmp.ne.s32.totalorder %s293, %s295
      %p299 = scmp.eq.s32.totalorder %s28, 0
      %p300 = por %p298, %p299
      %p301 = scmp.ne.s32.totalorder %s293, %s295
      %p302 = scmp.eq.s32.totalorder %s33, 1
      %p303 = por %p301, %p302
      %p304 = scmp.ne.s32.totalorder %s295, %s296
      %p305 = scmp.eq.s32.totalorder %s33, 0
      %p306 = por %p304, %p305
      %p307 = scmp.ne.s32.totalorder %s295, %s296
      %p308 = scmp.eq.s32.totalorder %s34, 1
      %p309 = por %p307, %p308
      %p311 = scmp.ne.s32.totalorder %s296, %s310
      %p312 = scmp.eq.s32.totalorder %s34, 0
      %p313 = por %p311, %p312
      %s314 = ssub.s32 %s28, %s35
      %p315 = scmp.eq.s32.totalorder %s314, 0
      %s317 = sadd.s32 %s316, 1
      %s318 = scalar_select %p315, %s316, %s317
      %p321 = pneg %p315
      %p322 = scmp.eq.s32.totalorder %s28, 1
      %p323 = por %p321, %p322
      %p324 = scmp.ne.s32.totalorder %s316, %s319
      %p325 = scmp.eq.s32.totalorder %s28, 0
      %p326 = por %p324, %p325
      %p327 = scmp.ne.s32.totalorder %s316, %s319
      %p328 = scmp.eq.s32.totalorder %s33, 1
      %p329 = por %p327, %p328
      %p330 = scmp.ne.s32.totalorder %s319, %s320
      %p331 = scmp.eq.s32.totalorder %s33, 0
      %p332 = por %p330, %p331
      %p333 = scmp.ne.s32.totalorder %s319, %s320
      %p334 = scmp.eq.s32.totalorder %s34, 1
      %p335 = por %p333, %p334
      %p337 = scmp.ne.s32.totalorder %s320, %s336
      %p338 = scmp.eq.s32.totalorder %s34, 0
      %p339 = por %p337, %p338
      %p340 = scmp.le.s32.totalorder 1, %s28
      %p341 = scmp.lt.s32.totalorder %s28, 3
      %p342 = pnand %p340, %p341
      %p343 = pneg %p342
      // Predicated region
      $region9: #{tpu_custom_call.1} parent=5 // pred_check
        _
      $region10: #{tpu_custom_call.1} parent=5 // pred_check_branch
        %345 = sbr.rel (%p342) target = $region12
      $region11: #{tpu_custom_call.1} parent=5 // pred_region
        %s346 = ssub.s32 %s28, 1
        // Predicated region
        $region13: #{tpu_custom_call.1} parent=11 // pred_check
          %p347 = pneg %p75
        $region14: #{tpu_custom_call.1} parent=11 // pred_check_branch
          %349 = sbr.rel (%p347) target = $region16
        $region15: #{tpu_custom_call.1} parent=11 // pred_region
          _
        $region16: #{tpu_custom_call.1} parent=11 // pred_fallthru
          _
        // Predicated region
        $region17: #{tpu_custom_call.1} parent=11 // pred_check
          %p350 = pneg %p96
        $region18: #{tpu_custom_call.1} parent=11 // pred_check_branch
          %352 = sbr.rel (%p350) target = $region20
        $region19: #{tpu_custom_call.1} parent=11 // pred_region
          %s354 = ssub.s32 256, 256
          %355 = vsyncadd [#allocation6], %s354
          %s356 = sshll.u32 [#allocation5], 4
          %s357 = int_to_ptr.vmem [resolvable:$true] %s356
          %362 = dma.hbm_to_vmem [thread:$0]  %s2, 256, %s357, [#allocation6], 128, 128, 8
        $region20: #{tpu_custom_call.1} parent=11 // pred_fallthru
          _
        // Predicated region
        $region21: #{tpu_custom_call.1} parent=11 // pred_check
          %p363 = pneg %p117
        $region22: #{tpu_custom_call.1} parent=11 // pred_check_branch
          %365 = sbr.rel (%p363) target = $region24
        $region23: #{tpu_custom_call.1} parent=11 // pred_region
          _
        $region24: #{tpu_custom_call.1} parent=11 // pred_fallthru
          _
        // Predicated region
        $region25: #{tpu_custom_call.1} parent=11 // pred_check
          %p366 = pneg %p138
        $region26: #{tpu_custom_call.1} parent=11 // pred_check_branch
          %368 = sbr.rel (%p366) target = $region28
        $region27: #{tpu_custom_call.1} parent=11 // pred_region
          %s370 = ssub.s32 64, 64
          %371 = vsyncadd [#allocation6], %s370
          %s373 = sshll.u32 [#allocation7], 4
          %s374 = int_to_ptr.vmem [resolvable:$true] %s373
          %376 = dma.hbm_to_vmem [thread:$0]  %s4, 64, %s374, [#allocation6]
        $region28: #{tpu_custom_call.1} parent=11 // pred_fallthru
          _
        // Predicated region
        $region29: #{tpu_custom_call.1} parent=11 // pred_check
          %p377 = pneg %p159
        $region30: #{tpu_custom_call.1} parent=11 // pred_check_branch
          %379 = sbr.rel (%p377) target = $region32
        $region31: #{tpu_custom_call.1} parent=11 // pred_region
          _
        $region32: #{tpu_custom_call.1} parent=11 // pred_fallthru
          _
        // Predicated region
        $region33: #{tpu_custom_call.1} parent=11 // pred_check
          %p380 = pneg %p180
        $region34: #{tpu_custom_call.1} parent=11 // pred_check_branch
          %382 = sbr.rel (%p380) target = $region36
        $region35: #{tpu_custom_call.1} parent=11 // pred_region
          _
        $region36: #{tpu_custom_call.1} parent=11 // pred_fallthru
          _
        // Predicated region
        $region37: #{tpu_custom_call.1} parent=11 // pred_check
          %p383 = pneg %p201
        $region38: #{tpu_custom_call.1} parent=11 // pred_check_branch
          %385 = sbr.rel (%p383) target = $region40
        $region39: #{tpu_custom_call.1} parent=11 // pred_region
          %s387 = ssub.s32 512, 512
          %388 = vsyncadd [#allocation9], %s387
          %s389 = sshll.u32 [#allocation8], 4
          %s390 = int_to_ptr.vmem [resolvable:$true] %s389
          %395 = dma.hbm_to_vmem [thread:$0]  %s7, 512, %s390, [#allocation9], 128, 128, 8
        $region40: #{tpu_custom_call.1} parent=11 // pred_fallthru
          _
        // Predicated region
        $region41: #{tpu_custom_call.1} parent=11 // pred_check
          %p396 = pneg %p222
        $region42: #{tpu_custom_call.1} parent=11 // pred_check_branch
          %398 = sbr.rel (%p396) target = $region44
        $region43: #{tpu_custom_call.1} parent=11 // pred_region
          %s400 = ssub.s32 16, 16
          %401 = vsyncadd [#allocation9], %s400
          %s403 = sshll.u32 [#allocation10], 4
          %s404 = int_to_ptr.vmem [resolvable:$true] %s403
          %406 = dma.hbm_to_vmem [thread:$0]  %s8, 16, %s404, [#allocation9]
        $region44: #{tpu_custom_call.1} parent=11 // pred_fallthru
          _
        // Predicated region
        $region45: #{tpu_custom_call.1} parent=11 // pred_check
          %p407 = pneg %p243
        $region46: #{tpu_custom_call.1} parent=11 // pred_check_branch
          %409 = sbr.rel (%p407) target = $region48
        $region47: #{tpu_custom_call.1} parent=11 // pred_region
          _
        $region48: #{tpu_custom_call.1} parent=11 // pred_fallthru
          _
        // Predicated region
        $region49: #{tpu_custom_call.1} parent=11 // pred_check
          %p410 = pneg %p264
        $region50: #{tpu_custom_call.1} parent=11 // pred_check_branch
          %412 = sbr.rel (%p410) target = $region52
        $region51: #{tpu_custom_call.1} parent=11 // pred_region
          _
        $region52: #{tpu_custom_call.1} parent=11 // pred_fallthru
          _
        // Predicated region
        $region53: #{tpu_custom_call.1} parent=11 // pred_check
          %p413 = pneg %p285
        $region54: #{tpu_custom_call.1} parent=11 // pred_check_branch
          %415 = sbr.rel (%p413) target = $region56
        $region55: #{tpu_custom_call.1} parent=11 // pred_region
          %s417 = ssub.s32 512, 512
          %418 = vsyncadd [#allocation12], %s417
          %s419 = sshll.u32 [#allocation11], 4
          %s420 = int_to_ptr.vmem [resolvable:$true] %s419
          %425 = dma.hbm_to_vmem [thread:$0]  %s11, 512, %s420, [#allocation12], 128, 128, 8
        $region56: #{tpu_custom_call.1} parent=11 // pred_fallthru
          _
        // Predicated region
        $region57: #{tpu_custom_call.1} parent=11 // pred_check
          %p426 = pneg %p306
        $region58: #{tpu_custom_call.1} parent=11 // pred_check_branch
          %428 = sbr.rel (%p426) target = $region60
        $region59: #{tpu_custom_call.1} parent=11 // pred_region
          _
        $region60: #{tpu_custom_call.1} parent=11 // pred_fallthru
          _
      $region12: #{tpu_custom_call.1} parent=5 // pred_fallthru
        _
      %p429 = scmp.lt.s32.totalorder %s28, 2
      // Predicated region
      $region61: #{tpu_custom_call.1} parent=5 // pred_check
        %p430 = pneg %p429
      $region62: #{tpu_custom_call.1} parent=5 // pred_check_branch
        %432 = sbr.rel (%p430) target = $region64
      $region63: #{tpu_custom_call.1} parent=5 // pred_region
        // Predicated region
        $region65: #{tpu_custom_call.1} parent=63 // pred_check
          %p433 = pneg %p48
        $region66: #{tpu_custom_call.1} parent=63 // pred_check_branch
          %435 = sbr.rel (%p433) target = $region68
        $region67: #{tpu_custom_call.1} parent=63 // pred_region
          %s436 = sand.u32 %s38, 1
          %s437 = scalar_lea.sflag [#allocation3], %s436
          %s438 = sand.u32 %s38, 1
          %s439 = smul.addr %s438, 256
          %s440 = scalar_lea.vmem [#allocation2], %s439
          %s441 = smul.u32 16, %s28
          %s443 = ssub.s32 4096, 4096
          %444 = vsyncadd %s437, %s443
          %s445 = smul.addr %s441, 2
          %s446 = smul.addr %s445, 128
          %s447 = scalar_lea.hbm %s0, %s446
          %s448 = sshll.u32 %s440, 4
          %s449 = int_to_ptr.vmem [resolvable:$true] %s448
          %454 = dma.hbm_to_vmem [thread:$0]  %s447, 4096, %s449, %s437, 128, 128, 8
        $region68: #{tpu_custom_call.1} parent=63 // pred_fallthru
          _
      $region64: #{tpu_custom_call.1} parent=5 // pred_fallthru
        _
      %p455 = scmp.le.s32.totalorder 1, %s28
      %p456 = scmp.lt.s32.totalorder %s28, 3
      %p457 = pnand %p455, %p456
      %p458 = pneg %p457
      // Predicated region
      $region69: #{tpu_custom_call.1} parent=5 // pred_check
        _
      $region70: #{tpu_custom_call.1} parent=5 // pred_check_branch
        %460 = sbr.rel (%p457) target = $region72
      $region71: #{tpu_custom_call.1} parent=5 // pred_region
        %s461 = ssub.s32 %s28, 1
        %s462 = sand.u32 %s41, 1
        %s463 = scalar_lea.sflag [#allocation3], %s462
        %s464 = sand.u32 %s41, 1
        %s465 = smul.addr %s464, 256
        %s466 = scalar_lea.vmem [#allocation2], %s465
        // Predicated region
        $region73: #{tpu_custom_call.1} parent=71 // pred_check
          %p467 = pneg %p54
        $region74: #{tpu_custom_call.1} parent=71 // pred_check_branch
          %469 = sbr.rel (%p467) target = $region76
        $region75: #{tpu_custom_call.1} parent=71 // pred_region
          %470 = dma.done %s463, 4096
        $region76: #{tpu_custom_call.1} parent=71 // pred_fallthru
          _
        // Predicated region
        $region77: #{tpu_custom_call.1} parent=71 // pred_check
          %p471 = pneg %p96
        $region78: #{tpu_custom_call.1} parent=71 // pred_check_branch
          %473 = sbr.rel (%p471) target = $region80
        $region79: #{tpu_custom_call.1} parent=71 // pred_region
          %474 = dma.done [#allocation6], 256
        $region80: #{tpu_custom_call.1} parent=71 // pred_fallthru
          _
        // Predicated region
        $region81: #{tpu_custom_call.1} parent=71 // pred_check
          %p475 = pneg %p138
        $region82: #{tpu_custom_call.1} parent=71 // pred_check_branch
          %477 = sbr.rel (%p475) target = $region84
        $region83: #{tpu_custom_call.1} parent=71 // pred_region
          %478 = dma.done [#allocation6], 64
        $region84: #{tpu_custom_call.1} parent=71 // pred_fallthru
          _
        // Predicated region
        $region85: #{tpu_custom_call.1} parent=71 // pred_check
          %p479 = pneg %p201
        $region86: #{tpu_custom_call.1} parent=71 // pred_check_branch
          %481 = sbr.rel (%p479) target = $region88
        $region87: #{tpu_custom_call.1} parent=71 // pred_region
          %482 = dma.done [#allocation9], 512
        $region88: #{tpu_custom_call.1} parent=71 // pred_fallthru
          _
        // Predicated region
        $region89: #{tpu_custom_call.1} parent=71 // pred_check
          %p483 = pneg %p222
        $region90: #{tpu_custom_call.1} parent=71 // pred_check_branch
          %485 = sbr.rel (%p483) target = $region92
        $region91: #{tpu_custom_call.1} parent=71 // pred_region
          %486 = dma.done [#allocation9], 16
        $region92: #{tpu_custom_call.1} parent=71 // pred_fallthru
          _
        // Predicated region
        $region93: #{tpu_custom_call.1} parent=71 // pred_check
          %p487 = pneg %p285
        $region94: #{tpu_custom_call.1} parent=71 // pred_check_branch
          %489 = sbr.rel (%p487) target = $region96
        $region95: #{tpu_custom_call.1} parent=71 // pred_region
          %490 = dma.done [#allocation12], 512
        $region96: #{tpu_custom_call.1} parent=71 // pred_fallthru
          _
        %s491 = sand.u32 %s41, 1
        %s492 = scalar_lea.sflag [#allocation3], %s491
        %s493 = sand.u32 %s41, 1
        %s494 = smul.addr %s493, 256
        %s495 = scalar_lea.vmem [#allocation2], %s494
        %p496 = pneg %p54
        %p497 = pneg %p51
        %p498 = pneg %p75
        %p499 = pneg %p72
        %p500 = pneg %p96
        %p501 = pneg %p93
        %p502 = pneg %p117
        %p503 = pneg %p114
        %p504 = pneg %p138
        %p505 = pneg %p135
        %p506 = pneg %p159
        %p507 = pneg %p156
        %p508 = pneg %p180
        %p509 = pneg %p177
        %p510 = pneg %p201
        %p511 = pneg %p198
        %p512 = pneg %p222
        %p513 = pneg %p219
        %p514 = pneg %p243
        %p515 = pneg %p240
        %p516 = pneg %p264
        %p517 = pneg %p261
        %p518 = pneg %p285
        %p519 = pneg %p282
        %p520 = pneg %p306
        %p521 = pneg %p303
        %p522 = pneg %p332
        %p523 = pneg %p329
        %s524 = sand.u32 %s319, 1
        %s525 = scalar_lea.sflag [#allocation4], %s524
        %s526 = sand.u32 %s319, 1
        %s527 = smul.addr %s526, 16
        %s528 = scalar_lea.vmem [#allocation13], %s527
        %s529 = smul.u32 16, %s33
        %s530 = smul.u32 2, %s33
        %v531 = vld [vmem:[%s466] sm:$0xff]
        %v532 = vld [vmem:[%s466 + $0x8] sm:$0xff]
        %v533 = vld [vmem:[%s466 + $0x10] sm:$0xff]
        %v534 = vld [vmem:[%s466 + $0x18] sm:$0xff]
        %v535 = vld [vmem:[%s466 + $0x20] sm:$0xff]
        %v536 = vld [vmem:[%s466 + $0x28] sm:$0xff]
        %v537 = vld [vmem:[%s466 + $0x30] sm:$0xff]
        %v538 = vld [vmem:[%s466 + $0x38] sm:$0xff]
        %v539 = vld [vmem:[%s466 + $0x40] sm:$0xff]
        %v540 = vld [vmem:[%s466 + $0x48] sm:$0xff]
        %v541 = vld [vmem:[%s466 + $0x50] sm:$0xff]
        %v542 = vld [vmem:[%s466 + $0x58] sm:$0xff]
        %v543 = vld [vmem:[%s466 + $0x60] sm:$0xff]
        %v544 = vld [vmem:[%s466 + $0x68] sm:$0xff]
        %v545 = vld [vmem:[%s466 + $0x70] sm:$0xff]
        %v546 = vld [vmem:[%s466 + $0x78] sm:$0xff]
        %v547 = vld [vmem:[%s466 + $0x80] sm:$0xff]
        %v548 = vld [vmem:[%s466 + $0x88] sm:$0xff]
        %v549 = vld [vmem:[%s466 + $0x90] sm:$0xff]
        %v550 = vld [vmem:[%s466 + $0x98] sm:$0xff]
        %v551 = vld [vmem:[%s466 + $0xa0] sm:$0xff]
        %v552 = vld [vmem:[%s466 + $0xa8] sm:$0xff]
        %v553 = vld [vmem:[%s466 + $0xb0] sm:$0xff]
        %v554 = vld [vmem:[%s466 + $0xb8] sm:$0xff]
        %v555 = vld [vmem:[%s466 + $0xc0] sm:$0xff]
        %v556 = vld [vmem:[%s466 + $0xc8] sm:$0xff]
        %v557 = vld [vmem:[%s466 + $0xd0] sm:$0xff]
        %v558 = vld [vmem:[%s466 + $0xd8] sm:$0xff]
        %v559 = vld [vmem:[%s466 + $0xe0] sm:$0xff]
        %v560 = vld [vmem:[%s466 + $0xe8] sm:$0xff]
        %v561 = vld [vmem:[%s466 + $0xf0] sm:$0xff]
        %v562 = vld [vmem:[%s466 + $0xf8] sm:$0xff]
        %vm563 = vcmask 261120
        %v564 = vsel %vm563, %v531, 0.0
        %v565 = vsel %vm563, %v532, 0.0
        %v566 = vadd.f32 %v564, %v565
        %v567 = vrot.slane %v566, 4
        %v568 = vadd.f32 %v566, %v567
        %v569 = vrot.slane %v568, 2
        %v570 = vadd.f32 %v568, %v569
        %v571 = vrot.slane %v570, 1
        %v572 = vadd.f32 %v570, %v571
        %v573 = vsel %vm563, %v533, 0.0
        %v574 = vsel %vm563, %v534, 0.0
        %v575 = vadd.f32 %v573, %v574
        %v576 = vrot.slane %v575, 4
        %v577 = vadd.f32 %v575, %v576
        %v578 = vrot.slane %v577, 2
        %v579 = vadd.f32 %v577, %v578
        %v580 = vrot.slane %v579, 1
        %v581 = vadd.f32 %v579, %v580
        %v582 = vsel %vm563, %v535, 0.0
        %v583 = vsel %vm563, %v536, 0.0
        %v584 = vadd.f32 %v582, %v583
        %v585 = vrot.slane %v584, 4
        %v586 = vadd.f32 %v584, %v585
        %v587 = vrot.slane %v586, 2
        %v588 = vadd.f32 %v586, %v587
        %v589 = vrot.slane %v588, 1
        %v590 = vadd.f32 %v588, %v589
        %v591 = vsel %vm563, %v537, 0.0
        %v592 = vsel %vm563, %v538, 0.0
        %v593 = vadd.f32 %v591, %v592
        %v594 = vrot.slane %v593, 4
        %v595 = vadd.f32 %v593, %v594
        %v596 = vrot.slane %v595, 2
        %v597 = vadd.f32 %v595, %v596
        %v598 = vrot.slane %v597, 1
        %v599 = vadd.f32 %v597, %v598
        %v600 = vsel %vm563, %v539, 0.0
        %v601 = vsel %vm563, %v540, 0.0
        %v602 = vadd.f32 %v600, %v601
        %v603 = vrot.slane %v602, 4
        %v604 = vadd.f32 %v602, %v603
        %v605 = vrot.slane %v604, 2
        %v606 = vadd.f32 %v604, %v605
        %v607 = vrot.slane %v606, 1
        %v608 = vadd.f32 %v606, %v607
        %v609 = vsel %vm563, %v541, 0.0
        %v610 = vsel %vm563, %v542, 0.0
        %v611 = vadd.f32 %v609, %v610
        %v612 = vrot.slane %v611, 4
        %v613 = vadd.f32 %v611, %v612
        %v614 = vrot.slane %v613, 2
        %v615 = vadd.f32 %v613, %v614
        %v616 = vrot.slane %v615, 1
        %v617 = vadd.f32 %v615, %v616
        %v618 = vsel %vm563, %v543, 0.0
        %v619 = vsel %vm563, %v544, 0.0
        %v620 = vadd.f32 %v618, %v619
        %v621 = vrot.slane %v620, 4
        %v622 = vadd.f32 %v620, %v621
        %v623 = vrot.slane %v622, 2
        %v624 = vadd.f32 %v622, %v623
        %v625 = vrot.slane %v624, 1
        %v626 = vadd.f32 %v624, %v625
        %v627 = vsel %vm563, %v545, 0.0
        %v628 = vsel %vm563, %v546, 0.0
        %v629 = vadd.f32 %v627, %v628
        %v630 = vrot.slane %v629, 4
        %v631 = vadd.f32 %v629, %v630
        %v632 = vrot.slane %v631, 2
        %v633 = vadd.f32 %v631, %v632
        %v634 = vrot.slane %v633, 1
        %v635 = vadd.f32 %v633, %v634
        %v636 = vsel %vm563, %v547, 0.0
        %v637 = vsel %vm563, %v548, 0.0
        %v638 = vadd.f32 %v636, %v637
        %v639 = vrot.slane %v638, 4
        %v640 = vadd.f32 %v638, %v639
        %v641 = vrot.slane %v640, 2
        %v642 = vadd.f32 %v640, %v641
        %v643 = vrot.slane %v642, 1
        %v644 = vadd.f32 %v642, %v643
        %v645 = vsel %vm563, %v549, 0.0
        %v646 = vsel %vm563, %v550, 0.0
        %v647 = vadd.f32 %v645, %v646
        %v648 = vrot.slane %v647, 4
        %v649 = vadd.f32 %v647, %v648
        %v650 = vrot.slane %v649, 2
        %v651 = vadd.f32 %v649, %v650
        %v652 = vrot.slane %v651, 1
        %v653 = vadd.f32 %v651, %v652
        %v654 = vsel %vm563, %v551, 0.0
        %v655 = vsel %vm563, %v552, 0.0
        %v656 = vadd.f32 %v654, %v655
        %v657 = vrot.slane %v656, 4
        %v658 = vadd.f32 %v656, %v657
        %v659 = vrot.slane %v658, 2
        %v660 = vadd.f32 %v658, %v659
        %v661 = vrot.slane %v660, 1
        %v662 = vadd.f32 %v660, %v661
        %v663 = vsel %vm563, %v553, 0.0
        %v664 = vsel %vm563, %v554, 0.0
        %v665 = vadd.f32 %v663, %v664
        %v666 = vrot.slane %v665, 4
        %v667 = vadd.f32 %v665, %v666
        %v668 = vrot.slane %v667, 2
        %v669 = vadd.f32 %v667, %v668
        %v670 = vrot.slane %v669, 1
        %v671 = vadd.f32 %v669, %v670
        %v672 = vsel %vm563, %v555, 0.0
        %v673 = vsel %vm563, %v556, 0.0
        %v674 = vadd.f32 %v672, %v673
        %v675 = vrot.slane %v674, 4
        %v676 = vadd.f32 %v674, %v675
        %v677 = vrot.slane %v676, 2
        %v678 = vadd.f32 %v676, %v677
        %v679 = vrot.slane %v678, 1
        %v680 = vadd.f32 %v678, %v679
        %v681 = vsel %vm563, %v557, 0.0
        %v682 = vsel %vm563, %v558, 0.0
        %v683 = vadd.f32 %v681, %v682
        %v684 = vrot.slane %v683, 4
        %v685 = vadd.f32 %v683, %v684
        %v686 = vrot.slane %v685, 2
        %v687 = vadd.f32 %v685, %v686
        %v688 = vrot.slane %v687, 1
        %v689 = vadd.f32 %v687, %v688
        %v690 = vsel %vm563, %v559, 0.0
        %v691 = vsel %vm563, %v560, 0.0
        %v692 = vadd.f32 %v690, %v691
        %v693 = vrot.slane %v692, 4
        %v694 = vadd.f32 %v692, %v693
        %v695 = vrot.slane %v694, 2
        %v696 = vadd.f32 %v694, %v695
        %v697 = vrot.slane %v696, 1
        %v698 = vadd.f32 %v696, %v697
        %v699 = vsel %vm563, %v561, 0.0
        %v700 = vsel %vm563, %v562, 0.0
        %v701 = vadd.f32 %v699, %v700
        %v702 = vrot.slane %v701, 4
        %v703 = vadd.f32 %v701, %v702
        %v704 = vrot.slane %v703, 2
        %v705 = vadd.f32 %v703, %v704
        %v706 = vrot.slane %v705, 1
        %v707 = vadd.f32 %v705, %v706
        %v708 = vrcp.pop 16.0
        %v709 = vmul.f32 %v572, %v708
        %v710 = vmul.f32 %v581, %v708
        %v711 = vmul.f32 %v590, %v708
        %v712 = vmul.f32 %v599, %v708
        %v713 = vmul.f32 %v608, %v708
        %v714 = vmul.f32 %v617, %v708
        %v715 = vmul.f32 %v626, %v708
        %v716 = vmul.f32 %v635, %v708
        %v717 = vmul.f32 %v644, %v708
        %v718 = vmul.f32 %v653, %v708
        %v719 = vmul.f32 %v662, %v708
        %v720 = vmul.f32 %v671, %v708
        %v721 = vmul.f32 %v680, %v708
        %v722 = vmul.f32 %v689, %v708
        %v723 = vmul.f32 %v698, %v708
        %v724 = vmul.f32 %v707, %v708
        %v725 = vld [vmem:[%s1] sm:$0x1]
        %v727 = vlaneseq
        %v728 = vshrl.u32 %v727, 7
        %v729 = vsub.s32 0, %v728
        %v730 = vrot.slane %v725, %v729
        %v732 = vadd.f32 %v709, %v730
        %v733 = vadd.f32 %v710, %v730
        %v734 = vadd.f32 %v711, %v730
        %v735 = vadd.f32 %v712, %v730
        %v736 = vadd.f32 %v713, %v730
        %v737 = vadd.f32 %v714, %v730
        %v738 = vadd.f32 %v715, %v730
        %v739 = vadd.f32 %v716, %v730
        %v740 = vadd.f32 %v717, %v730
        %v741 = vadd.f32 %v718, %v730
        %v742 = vadd.f32 %v719, %v730
        %v743 = vadd.f32 %v720, %v730
        %v744 = vadd.f32 %v721, %v730
        %v745 = vadd.f32 %v722, %v730
        %v746 = vadd.f32 %v723, %v730
        %v747 = vadd.f32 %v724, %v730
        %v748 = vld [vmem:[#allocation5] sm:$0xff]
        %v749 = vld [vmem:[#allocation5 + $0x8] sm:$0xff]
        %v750 = vadd.f32 %v531, %v748
        %v751 = vadd.f32 %v532, %v749
        %v752 = vadd.f32 %v533, %v748
        %v753 = vadd.f32 %v534, %v749
        %v754 = vadd.f32 %v535, %v748
        %v755 = vadd.f32 %v536, %v749
        %v756 = vadd.f32 %v537, %v748
        %v757 = vadd.f32 %v538, %v749
        %v758 = vadd.f32 %v539, %v748
        %v759 = vadd.f32 %v540, %v749
        %v760 = vadd.f32 %v541, %v748
        %v761 = vadd.f32 %v542, %v749
        %v762 = vadd.f32 %v543, %v748
        %v763 = vadd.f32 %v544, %v749
        %v764 = vadd.f32 %v545, %v748
        %v765 = vadd.f32 %v546, %v749
        %v766 = vadd.f32 %v547, %v748
        %v767 = vadd.f32 %v548, %v749
        %v768 = vadd.f32 %v549, %v748
        %v769 = vadd.f32 %v550, %v749
        %v770 = vadd.f32 %v551, %v748
        %v771 = vadd.f32 %v552, %v749
        %v772 = vadd.f32 %v553, %v748
        %v773 = vadd.f32 %v554, %v749
        %v774 = vadd.f32 %v555, %v748
        %v775 = vadd.f32 %v556, %v749
        %v776 = vadd.f32 %v557, %v748
        %v777 = vadd.f32 %v558, %v749
        %v778 = vadd.f32 %v559, %v748
        %v779 = vadd.f32 %v560, %v749
        %v780 = vadd.f32 %v561, %v748
        %v781 = vadd.f32 %v562, %v749
        %v782 = vld [vmem:[%s5] sm:$0xff]
        %v783 = vld [vmem:[%s5 + $0x8] sm:$0xff]
        %v784 = vld [vmem:[%s5 + $0x10] sm:$0xff]
        %v785 = vld [vmem:[%s5 + $0x18] sm:$0xff]
        %v786 = vld [vmem:[%s6] sm:$0x1]
        %v788 = vlaneseq
        %v789 = vshrl.u32 %v788, 7
        %v790 = vsub.s32 0, %v789
        %v791 = vrot.slane %v786, %v790
        %v809 = vrot.slane %v733, 7
        %vm810 = vcmask 1041409
        %v811 = vsel %vm810, %v809, %v732
        %v812 = vrot.slane %v734, 6
        %vm813 = vcmask 1042434
        %v814 = vsel %vm813, %v812, %v811
        %v815 = vrot.slane %v735, 5
        %vm816 = vcmask 1043459
        %v817 = vsel %vm816, %v815, %v814
        %v818 = vrot.slane %v736, 4
        %vm819 = vcmask 1044484
        %v820 = vsel %vm819, %v818, %v817
        %v821 = vrot.slane %v737, 3
        %vm822 = vcmask 1045509
        %v823 = vsel %vm822, %v821, %v820
        %v824 = vrot.slane %v738, 2
        %vm825 = vcmask 1046534
        %v826 = vsel %vm825, %v824, %v823
        %v827 = vrot.slane %v739, 1
        %vm828 = vcmask 1047559
        %v829 = vsel %vm828, %v827, %v826
        %v830 = vrot.slane %v741, 7
        %v831 = vsel %vm810, %v830, %v740
        %v832 = vrot.slane %v742, 6
        %v833 = vsel %vm813, %v832, %v831
        %v834 = vrot.slane %v743, 5
        %v835 = vsel %vm816, %v834, %v833
        %v836 = vrot.slane %v744, 4
        %v837 = vsel %vm819, %v836, %v835
        %v838 = vrot.slane %v745, 3
        %v839 = vsel %vm822, %v838, %v837
        %v840 = vrot.slane %v746, 2
        %v841 = vsel %vm825, %v840, %v839
        %v842 = vrot.slane %v747, 1
        %v843 = vsel %vm828, %v842, %v841
        %v844 = vsel %vm563, %v829, 0
        %v846 = vsel %vm563, %v843, 0
        %848 = vmatprep.subr.mxu0 0.0
        %849 = vmatpush1.msra.mxu0 %v782
        %850 = vmatprep.subr.mxu0 0.0
        %851 = vmatpush1.msra.mxu0 %v783
        %852 = vmatprep.subr.mxu0 0.0
        %853 = vmatpush1.msra.mxu0 %v784
        %854 = vmatprep.subr.mxu0 0.0
        %855 = vmatpush1.msra.mxu0 %v785
        %856 = vmatprep.subr.mxu0 0.0
        %857 = vmatpush1.msra.mxu0 0.0
        %858 = vmatprep.subr.mxu0 0.0
        %859 = vmatpush1.msra.mxu0 0.0
        %860 = vmatprep.subr.mxu0 0.0
        %861 = vmatpush1.msra.mxu0 0.0
        %862 = vmatprep.subr.mxu0 0.0
        %863 = vmatpush1.msra.mxu0 0.0
        %864 = vmatprep.subr.mxu0 0.0
        %865 = vmatpush1.msra.mxu0 0.0
        %866 = vmatprep.subr.mxu0 0.0
        %867 = vmatpush1.msra.mxu0 0.0
        %868 = vmatprep.subr.mxu0 0.0
        %869 = vmatpush1.msra.mxu0 0.0
        %870 = vmatprep.subr.mxu0 0.0
        %871 = vmatpush1.msra.mxu0 0.0
        %872 = vmatprep.subr.mxu0 0.0
        %873 = vmatpush1.msra.mxu0 0.0
        %874 = vmatprep.subr.mxu0 0.0
        %875 = vmatpush1.msra.mxu0 0.0
        %876 = vmatprep.subr.mxu0 0.0
        %877 = vmatpush1.msra.mxu0 0.0
        %878 = vmatprep.subr.mxu0 0.0
        %879 = vmatpush1.msra.mxu0 0.0
        %880 = vmatprep.subr.mxu0 0.0
        %881 = vmatpush1.msra.mxu0 0.0
        %882 = vmatprep.subr.mxu0 0.0
        %883 = vmatpush1.msra.mxu0 0.0
        %884 = vmatprep.subr.mxu0 0.0
        %885 = vmatpush1.msra.mxu0 0.0
        %886 = vmatprep.subr.mxu0 0.0
        %887 = vmatpush1.msra.mxu0 0.0
        %888 = vmatprep.subr.mxu0 0.0
        %889 = vmatpush1.msra.mxu0 0.0
        %890 = vmatprep.subr.mxu0 0.0
        %891 = vmatpush1.msra.mxu0 0.0
        %892 = vmatprep.subr.mxu0 0.0
        %893 = vmatpush1.msra.mxu0 0.0
        %894 = vmatprep.subr.mxu0 0.0
        %895 = vmatpush1.msra.mxu0 0.0
        %896 = vmatprep.subr.mxu0 0.0
        %897 = vmatpush1.msra.mxu0 0.0
        %898 = vmatprep.subr.mxu0 0.0
        %899 = vmatpush1.msra.mxu0 0.0
        %900 = vmatprep.subr.mxu0 0.0
        %901 = vmatpush1.msra.mxu0 0.0
        %902 = vmatprep.subr.mxu0 0.0
        %903 = vmatpush1.msra.mxu0 0.0
        %904 = vmatprep.subr.mxu0 0.0
        %905 = vmatpush1.msra.mxu0 0.0
        %906 = vmatprep.subr.mxu0 0.0
        %907 = vmatpush1.msra.mxu0 0.0
        %908 = vmatprep.subr.mxu0 0.0
        %909 = vmatpush1.msra.mxu0 0.0
        %910 = vmatprep.subr.mxu0 0.0
        %911 = vmatpush1.msra.mxu0 0.0
        %912 = vmatprep.mubr.f32.mxu0 0.0
        %913 = vmatmul.mubr.f32.gmra.mrb[0].mxu0 %v844
        %v914 = vpop.f32.mrb[0].mxu0
        %v915 = vadd.f32 %v791, %v914
        %v916 = vpop.f32.mrb[0].mxu0
        %917 = vmatprep.mubr.f32.mxu0 0.0
        %918 = vmatmul.mubr.f32.gmra.mrb[0].mxu0 %v846
        %v919 = vpop.f32.mrb[0].mxu0
        %v920 = vadd.f32 %v791, %v919
        %v921 = vpop.f32.mrb[0].mxu0
        %922 = vdwg.mxu0
        %v923 = vmul.f32 %v915, 0.35355338
        %v924 = vmul.f32 %v920, 0.35355338
        %v925 = vld [vmem:[#allocation8] sm:$0xff]
        %v926 = vld [vmem:[#allocation8 + $0x8] sm:$0xff]
        %v927 = vld [vmem:[#allocation8 + $0x10] sm:$0xff]
        %v928 = vld [vmem:[#allocation8 + $0x18] sm:$0xff]
        %v929 = vld [vmem:[#allocation10] sm:$0x1]
        %v931 = vlaneseq
        %v932 = vshrl.u32 %v931, 7
        %v933 = vsub.s32 0, %v932
        %v934 = vrot.slane %v929, %v933
        %936 = vmatprep.subr.mxu0 0.0
        %937 = vmatpush1.msra.mxu0 %v925
        %938 = vmatprep.subr.mxu0 0.0
        %939 = vmatpush1.msra.mxu0 %v926
        %940 = vmatprep.subr.mxu0 0.0
        %941 = vmatpush1.msra.mxu0 %v927
        %942 = vmatprep.subr.mxu0 0.0
        %943 = vmatpush1.msra.mxu0 %v928
        %944 = vmatprep.subr.mxu0 0.0
        %945 = vmatpush1.msra.mxu0 0.0
        %946 = vmatprep.subr.mxu0 0.0
        %947 = vmatpush1.msra.mxu0 0.0
        %948 = vmatprep.subr.mxu0 0.0
        %949 = vmatpush1.msra.mxu0 0.0
        %950 = vmatprep.subr.mxu0 0.0
        %951 = vmatpush1.msra.mxu0 0.0
        %952 = vmatprep.subr.mxu0 0.0
        %953 = vmatpush1.msra.mxu0 0.0
        %954 = vmatprep.subr.mxu0 0.0
        %955 = vmatpush1.msra.mxu0 0.0
        %956 = vmatprep.subr.mxu0 0.0
        %957 = vmatpush1.msra.mxu0 0.0
        %958 = vmatprep.subr.mxu0 0.0
        %959 = vmatpush1.msra.mxu0 0.0
        %960 = vmatprep.subr.mxu0 0.0
        %961 = vmatpush1.msra.mxu0 0.0
        %962 = vmatprep.subr.mxu0 0.0
        %963 = vmatpush1.msra.mxu0 0.0
        %964 = vmatprep.subr.mxu0 0.0
        %965 = vmatpush1.msra.mxu0 0.0
        %966 = vmatprep.subr.mxu0 0.0
        %967 = vmatpush1.msra.mxu0 0.0
        %968 = vmatprep.subr.mxu0 0.0
        %969 = vmatpush1.msra.mxu0 0.0
        %970 = vmatprep.subr.mxu0 0.0
        %971 = vmatpush1.msra.mxu0 0.0
        %972 = vmatprep.subr.mxu0 0.0
        %973 = vmatpush1.msra.mxu0 0.0
        %974 = vmatprep.subr.mxu0 0.0
        %975 = vmatpush1.msra.mxu0 0.0
        %976 = vmatprep.subr.mxu0 0.0
        %977 = vmatpush1.msra.mxu0 0.0
        %978 = vmatprep.subr.mxu0 0.0
        %979 = vmatpush1.msra.mxu0 0.0
        %980 = vmatprep.subr.mxu0 0.0
        %981 = vmatpush1.msra.mxu0 0.0
        %982 = vmatprep.subr.mxu0 0.0
        %983 = vmatpush1.msra.mxu0 0.0
        %984 = vmatprep.subr.mxu0 0.0
        %985 = vmatpush1.msra.mxu0 0.0
        %986 = vmatprep.subr.mxu0 0.0
        %987 = vmatpush1.msra.mxu0 0.0
        %988 = vmatprep.subr.mxu0 0.0
        %989 = vmatpush1.msra.mxu0 0.0
        %990 = vmatprep.subr.mxu0 0.0
        %991 = vmatpush1.msra.mxu0 0.0
        %992 = vmatprep.subr.mxu0 0.0
        %993 = vmatpush1.msra.mxu0 0.0
        %994 = vmatprep.subr.mxu0 0.0
        %995 = vmatpush1.msra.mxu0 0.0
        %996 = vmatprep.subr.mxu0 0.0
        %997 = vmatpush1.msra.mxu0 0.0
        %998 = vmatprep.subr.mxu0 0.0
        %999 = vmatpush1.msra.mxu0 0.0
        %1000 = vmatprep.mubr.f32.mxu0 0.0
        %1001 = vmatmul.mubr.f32.gmra.mrb[0].mxu0 %v844
        %v1002 = vpop.f32.mrb[0].mxu0
        %v1003 = vadd.f32 %v934, %v1002
        %v1004 = vpop.f32.mrb[0].mxu0
        %1005 = vmatprep.mubr.f32.mxu0 0.0
        %1006 = vmatmul.mubr.f32.gmra.mrb[0].mxu0 %v846
        %v1007 = vpop.f32.mrb[0].mxu0
        %v1008 = vadd.f32 %v934, %v1007
        %v1009 = vpop.f32.mrb[0].mxu0
        %1010 = vdwg.mxu0
        %v1012 = vsel %vm563, %v750, 0
        %v1015 = vsel %vm563, %v751, 0
        %v1018 = vsel %vm563, %v752, 0
        %v1021 = vsel %vm563, %v753, 0
        %v1024 = vsel %vm563, %v754, 0
        %v1027 = vsel %vm563, %v755, 0
        %v1030 = vsel %vm563, %v756, 0
        %v1033 = vsel %vm563, %v757, 0
        %v1036 = vsel %vm563, %v758, 0
        %v1039 = vsel %vm563, %v759, 0
        %v1042 = vsel %vm563, %v760, 0
        %v1045 = vsel %vm563, %v761, 0
        %v1048 = vsel %vm563, %v762, 0
        %v1051 = vsel %vm563, %v763, 0
        %v1054 = vsel %vm563, %v764, 0
        %v1057 = vsel %vm563, %v765, 0
        %v1060 = vsel %vm563, %v766, 0
        %v1063 = vsel %vm563, %v767, 0
        %v1066 = vsel %vm563, %v768, 0
        %v1069 = vsel %vm563, %v769, 0
        %v1072 = vsel %vm563, %v770, 0
        %v1075 = vsel %vm563, %v771, 0
        %v1078 = vsel %vm563, %v772, 0
        %v1081 = vsel %vm563, %v773, 0
        %v1084 = vsel %vm563, %v774, 0
        %v1087 = vsel %vm563, %v775, 0
        %v1090 = vsel %vm563, %v776, 0
        %v1093 = vsel %vm563, %v777, 0
        %v1096 = vsel %vm563, %v778, 0
        %v1099 = vsel %vm563, %v779, 0
        %v1102 = vsel %vm563, %v780, 0
        %v1105 = vsel %vm563, %v781, 0
        %1107 = vmatprep.subr.mxu0 0.0
        %1108 = vmatpush1.msra.mxu0 %v925
        %1109 = vmatprep.subr.mxu0 0.0
        %1110 = vmatpush1.msra.mxu0 %v926
        %1111 = vmatprep.subr.mxu0 0.0
        %1112 = vmatpush1.msra.mxu0 %v927
        %1113 = vmatprep.subr.mxu0 0.0
        %1114 = vmatpush1.msra.mxu0 %v928
        %1115 = vmatprep.subr.mxu0 0.0
        %1116 = vmatpush1.msra.mxu0 0.0
        %1117 = vmatprep.subr.mxu0 0.0
        %1118 = vmatpush1.msra.mxu0 0.0
        %1119 = vmatprep.subr.mxu0 0.0
        %1120 = vmatpush1.msra.mxu0 0.0
        %1121 = vmatprep.subr.mxu0 0.0
        %1122 = vmatpush1.msra.mxu0 0.0
        %1123 = vmatprep.subr.mxu0 0.0
        %1124 = vmatpush1.msra.mxu0 0.0
        %1125 = vmatprep.subr.mxu0 0.0
        %1126 = vmatpush1.msra.mxu0 0.0
        %1127 = vmatprep.subr.mxu0 0.0
        %1128 = vmatpush1.msra.mxu0 0.0
        %1129 = vmatprep.subr.mxu0 0.0
        %1130 = vmatpush1.msra.mxu0 0.0
        %1131 = vmatprep.subr.mxu0 0.0
        %1132 = vmatpush1.msra.mxu0 0.0
        %1133 = vmatprep.subr.mxu0 0.0
        %1134 = vmatpush1.msra.mxu0 0.0
        %1135 = vmatprep.subr.mxu0 0.0
        %1136 = vmatpush1.msra.mxu0 0.0
        %1137 = vmatprep.subr.mxu0 0.0
        %1138 = vmatpush1.msra.mxu0 0.0
        %1139 = vmatprep.subr.mxu0 0.0
        %1140 = vmatpush1.msra.mxu0 0.0
        %1141 = vmatprep.subr.mxu0 0.0
        %1142 = vmatpush1.msra.mxu0 0.0
        %1143 = vmatprep.subr.mxu0 0.0
        %1144 = vmatpush1.msra.mxu0 0.0
        %1145 = vmatprep.subr.mxu0 0.0
        %1146 = vmatpush1.msra.mxu0 0.0
        %1147 = vmatprep.subr.mxu0 0.0
        %1148 = vmatpush1.msra.mxu0 0.0
        %1149 = vmatprep.subr.mxu0 0.0
        %1150 = vmatpush1.msra.mxu0 0.0
        %1151 = vmatprep.subr.mxu0 0.0
        %1152 = vmatpush1.msra.mxu0 0.0
        %1153 = vmatprep.subr.mxu0 0.0
        %1154 = vmatpush1.msra.mxu0 0.0
        %1155 = vmatprep.subr.mxu0 0.0
        %1156 = vmatpush1.msra.mxu0 0.0
        %1157 = vmatprep.subr.mxu0 0.0
        %1158 = vmatpush1.msra.mxu0 0.0
        %1159 = vmatprep.subr.mxu0 0.0
        %1160 = vmatpush1.msra.mxu0 0.0
        %1161 = vmatprep.subr.mxu0 0.0
        %1162 = vmatpush1.msra.mxu0 0.0
        %1163 = vmatprep.subr.mxu0 0.0
        %1164 = vmatpush1.msra.mxu0 0.0
        %1165 = vmatprep.subr.mxu0 0.0
        %1166 = vmatpush1.msra.mxu0 0.0
        %1167 = vmatprep.subr.mxu0 0.0
        %1168 = vmatpush1.msra.mxu0 0.0
        %1169 = vmatprep.subr.mxu0 0.0
        %1170 = vmatpush1.msra.mxu0 0.0
        %1171 = vmatprep.mubr.f32.mxu0 0.0
        %1172 = vmatmul.mubr.f32.gmra.mrb[0].mxu0 %v1012
        %v1173 = vpop.f32.mrb[0].mxu0
        %v1174 = vadd.f32 %v934, %v1173
        %v1175 = vpop.f32.mrb[0].mxu0
        %1176 = vmatprep.mubr.f32.mxu0 0.0
        %1177 = vmatmul.mubr.f32.gmra.mrb[0].mxu0 %v1015
        %v1178 = vpop.f32.mrb[0].mxu0
        %v1179 = vadd.f32 %v934, %v1178
        %v1180 = vpop.f32.mrb[0].mxu0
        %1181 = vmatprep.mubr.f32.mxu0 0.0
        %1182 = vmatmul.mubr.f32.gmra.mrb[0].mxu0 %v1018
        %v1183 = vpop.f32.mrb[0].mxu0
        %v1184 = vadd.f32 %v934, %v1183
        %v1185 = vpop.f32.mrb[0].mxu0
        %1186 = vmatprep.mubr.f32.mxu0 0.0
        %1187 = vmatmul.mubr.f32.gmra.mrb[0].mxu0 %v1021
        %v1188 = vpop.f32.mrb[0].mxu0
        %v1189 = vadd.f32 %v934, %v1188
        %v1190 = vpop.f32.mrb[0].mxu0
        %1191 = vmatprep.mubr.f32.mxu0 0.0
        %1192 = vmatmul.mubr.f32.gmra.mrb[0].mxu0 %v1024
        %v1193 = vpop.f32.mrb[0].mxu0
        %v1194 = vadd.f32 %v934, %v1193
        %v1195 = vpop.f32.mrb[0].mxu0
        %1196 = vmatprep.mubr.f32.mxu0 0.0
        %1197 = vmatmul.mubr.f32.gmra.mrb[0].mxu0 %v1027
        %v1198 = vpop.f32.mrb[0].mxu0
        %v1199 = vadd.f32 %v934, %v1198
        %v1200 = vpop.f32.mrb[0].mxu0
        %1201 = vmatprep.mubr.f32.mxu0 0.0
        %1202 = vmatmul.mubr.f32.gmra.mrb[0].mxu0 %v1030
        %v1203 = vpop.f32.mrb[0].mxu0
        %v1204 = vadd.f32 %v934, %v1203
        %v1205 = vpop.f32.mrb[0].mxu0
        %1206 = vmatprep.mubr.f32.mxu0 0.0
        %1207 = vmatmul.mubr.f32.gmra.mrb[0].mxu0 %v1033
        %v1208 = vpop.f32.mrb[0].mxu0
        %v1209 = vadd.f32 %v934, %v1208
        %v1210 = vpop.f32.mrb[0].mxu0
        %1211 = vmatprep.mubr.f32.mxu0 0.0
        %1212 = vmatmul.mubr.f32.gmra.mrb[0].mxu0 %v1036
        %v1213 = vpop.f32.mrb[0].mxu0
        %v1214 = vadd.f32 %v934, %v1213
        %v1215 = vpop.f32.mrb[0].mxu0
        %1216 = vmatprep.mubr.f32.mxu0 0.0
        %1217 = vmatmul.mubr.f32.gmra.mrb[0].mxu0 %v1039
        %v1218 = vpop.f32.mrb[0].mxu0
        %v1219 = vadd.f32 %v934, %v1218
        %v1220 = vpop.f32.mrb[0].mxu0
        %1221 = vmatprep.mubr.f32.mxu0 0.0
        %1222 = vmatmul.mubr.f32.gmra.mrb[0].mxu0 %v1042
        %v1223 = vpop.f32.mrb[0].mxu0
        %v1224 = vadd.f32 %v934, %v1223
        %v1225 = vpop.f32.mrb[0].mxu0
        %1226 = vmatprep.mubr.f32.mxu0 0.0
        %1227 = vmatmul.mubr.f32.gmra.mrb[0].mxu0 %v1045
        %v1228 = vpop.f32.mrb[0].mxu0
        %v1229 = vadd.f32 %v934, %v1228
        %v1230 = vpop.f32.mrb[0].mxu0
        %1231 = vmatprep.mubr.f32.mxu0 0.0
        %1232 = vmatmul.mubr.f32.gmra.mrb[0].mxu0 %v1048
        %v1233 = vpop.f32.mrb[0].mxu0
        %v1234 = vadd.f32 %v934, %v1233
        %v1235 = vpop.f32.mrb[0].mxu0
        %1236 = vmatprep.mubr.f32.mxu0 0.0
        %1237 = vmatmul.mubr.f32.gmra.mrb[0].mxu0 %v1051
        %v1238 = vpop.f32.mrb[0].mxu0
        %v1239 = vadd.f32 %v934, %v1238
        %v1240 = vpop.f32.mrb[0].mxu0
        %1241 = vmatprep.mubr.f32.mxu0 0.0
        %1242 = vmatmul.mubr.f32.gmra.mrb[0].mxu0 %v1054
        %v1243 = vpop.f32.mrb[0].mxu0
        %v1244 = vadd.f32 %v934, %v1243
        %v1245 = vpop.f32.mrb[0].mxu0
        %1246 = vmatprep.mubr.f32.mxu0 0.0
        %1247 = vmatmul.mubr.f32.gmra.mrb[0].mxu0 %v1057
        %v1248 = vpop.f32.mrb[0].mxu0
        %v1249 = vadd.f32 %v934, %v1248
        %v1250 = vpop.f32.mrb[0].mxu0
        %1251 = vmatprep.mubr.f32.mxu0 0.0
        %1252 = vmatmul.mubr.f32.gmra.mrb[0].mxu0 %v1060
        %v1253 = vpop.f32.mrb[0].mxu0
        %v1254 = vadd.f32 %v934, %v1253
        %v1255 = vpop.f32.mrb[0].mxu0
        %1256 = vmatprep.mubr.f32.mxu0 0.0
        %1257 = vmatmul.mubr.f32.gmra.mrb[0].mxu0 %v1063
        %v1258 = vpop.f32.mrb[0].mxu0
        %v1259 = vadd.f32 %v934, %v1258
        %v1260 = vpop.f32.mrb[0].mxu0
        %1261 = vmatprep.mubr.f32.mxu0 0.0
        %1262 = vmatmul.mubr.f32.gmra.mrb[0].mxu0 %v1066
        %v1263 = vpop.f32.mrb[0].mxu0
        %v1264 = vadd.f32 %v934, %v1263
        %v1265 = vpop.f32.mrb[0].mxu0
        %1266 = vmatprep.mubr.f32.mxu0 0.0
        %1267 = vmatmul.mubr.f32.gmra.mrb[0].mxu0 %v1069
        %v1268 = vpop.f32.mrb[0].mxu0
        %v1269 = vadd.f32 %v934, %v1268
        %v1270 = vpop.f32.mrb[0].mxu0
        %1271 = vmatprep.mubr.f32.mxu0 0.0
        %1272 = vmatmul.mubr.f32.gmra.mrb[0].mxu0 %v1072
        %v1273 = vpop.f32.mrb[0].mxu0
        %v1274 = vadd.f32 %v934, %v1273
        %v1275 = vpop.f32.mrb[0].mxu0
        %1276 = vmatprep.mubr.f32.mxu0 0.0
        %1277 = vmatmul.mubr.f32.gmra.mrb[0].mxu0 %v1075
        %v1278 = vpop.f32.mrb[0].mxu0
        %v1279 = vadd.f32 %v934, %v1278
        %v1280 = vpop.f32.mrb[0].mxu0
        %1281 = vmatprep.mubr.f32.mxu0 0.0
        %1282 = vmatmul.mubr.f32.gmra.mrb[0].mxu0 %v1078
        %v1283 = vpop.f32.mrb[0].mxu0
        %v1284 = vadd.f32 %v934, %v1283
        %v1285 = vpop.f32.mrb[0].mxu0
        %1286 = vmatprep.mubr.f32.mxu0 0.0
        %1287 = vmatmul.mubr.f32.gmra.mrb[0].mxu0 %v1081
        %v1288 = vpop.f32.mrb[0].mxu0
        %v1289 = vadd.f32 %v934, %v1288
        %v1290 = vpop.f32.mrb[0].mxu0
        %1291 = vmatprep.mubr.f32.mxu0 0.0
        %1292 = vmatmul.mubr.f32.gmra.mrb[0].mxu0 %v1084
        %v1293 = vpop.f32.mrb[0].mxu0
        %v1294 = vadd.f32 %v934, %v1293
        %v1295 = vpop.f32.mrb[0].mxu0
        %1296 = vmatprep.mubr.f32.mxu0 0.0
        %1297 = vmatmul.mubr.f32.gmra.mrb[0].mxu0 %v1087
        %v1298 = vpop.f32.mrb[0].mxu0
        %v1299 = vadd.f32 %v934, %v1298
        %v1300 = vpop.f32.mrb[0].mxu0
        %1301 = vmatprep.mubr.f32.mxu0 0.0
        %1302 = vmatmul.mubr.f32.gmra.mrb[0].mxu0 %v1090
        %v1303 = vpop.f32.mrb[0].mxu0
        %v1304 = vadd.f32 %v934, %v1303
        %v1305 = vpop.f32.mrb[0].mxu0
        %1306 = vmatprep.mubr.f32.mxu0 0.0
        %1307 = vmatmul.mubr.f32.gmra.mrb[0].mxu0 %v1093
        %v1308 = vpop.f32.mrb[0].mxu0
        %v1309 = vadd.f32 %v934, %v1308
        %v1310 = vpop.f32.mrb[0].mxu0
        %1311 = vmatprep.mubr.f32.mxu0 0.0
        %1312 = vmatmul.mubr.f32.gmra.mrb[0].mxu0 %v1096
        %v1313 = vpop.f32.mrb[0].mxu0
        %v1314 = vadd.f32 %v934, %v1313
        %v1315 = vpop.f32.mrb[0].mxu0
        %1316 = vmatprep.mubr.f32.mxu0 0.0
        %1317 = vmatmul.mubr.f32.gmra.mrb[0].mxu0 %v1099
        %v1318 = vpop.f32.mrb[0].mxu0
        %v1319 = vadd.f32 %v934, %v1318
        %v1320 = vpop.f32.mrb[0].mxu0
        %1321 = vmatprep.mubr.f32.mxu0 0.0
        %1322 = vmatmul.mubr.f32.gmra.mrb[0].mxu0 %v1102
        %v1323 = vpop.f32.mrb[0].mxu0
        %v1324 = vadd.f32 %v934, %v1323
        %v1325 = vpop.f32.mrb[0].mxu0
        %1326 = vmatprep.mubr.f32.mxu0 0.0
        %1327 = vmatmul.mubr.f32.gmra.mrb[0].mxu0 %v1105
        %v1328 = vpop.f32.mrb[0].mxu0
        %v1329 = vadd.f32 %v934, %v1328
        %v1330 = vpop.f32.mrb[0].mxu0
        %1331 = vdwg.mxu0
        %v1332 = vld [vmem:[%s3] sm:$0xff]
        %v1333 = vld [vmem:[%s3 + $0x8] sm:$0xff]
        %v1334 = vld [vmem:[%s3 + $0x10] sm:$0xff]
        %v1335 = vld [vmem:[%s3 + $0x18] sm:$0xff]
        %v1336 = vld [vmem:[#allocation7] sm:$0xf]
        %v1339 = vcombine.high %v923, %v923
        %v1341 = vunpack.c.l.s4 1966171168
        %v1342 = vunpack.c.0.s8 %v1341
        %v1343 = vlaneseq
        %v1344 = vshrl.u32 %v1343, 7
        %v1345 = vsub.s32 %v1342, %v1344
        %v1346 = vrot.slane %v923, %v1345
        %v1348 = vunpack.c.l.s4 1966171168
        %v1349 = vunpack.c.0.s8 %v1348
        %v1350 = vlaneseq
        %v1351 = vshrl.u32 %v1350, 7
        %v1352 = vsub.s32 %v1349, %v1351
        %v1353 = vrot.slane %v1339, %v1352
        %v1354 = vcombine.high %v1346, %v1346
        %v1355 = vcombine.high %v1353, %v1353
        %v1357 = vunpack.c.l.s4 1966171168
        %v1358 = vunpack.c.0.s8 %v1357
        %v1359 = vlaneseq
        %v1360 = vshrl.u32 %v1359, 7
        %v1361 = vsub.s32 %v1358, %v1360
        %v1362 = vrot.slane %v1346, %v1361
        %v1364 = vunpack.c.l.s4 1966171168
        %v1365 = vunpack.c.0.s8 %v1364
        %v1366 = vlaneseq
        %v1367 = vshrl.u32 %v1366, 7
        %v1368 = vsub.s32 %v1365, %v1367
        %v1369 = vrot.slane %v1353, %v1368
        %v1371 = vunpack.c.l.s4 1966171168
        %v1372 = vunpack.c.0.s8 %v1371
        %v1373 = vlaneseq
        %v1374 = vshrl.u32 %v1373, 7
        %v1375 = vsub.s32 %v1372, %v1374
        %v1376 = vrot.slane %v1354, %v1375
        %v1378 = vunpack.c.l.s4 1966171168
        %v1379 = vunpack.c.0.s8 %v1378
        %v1380 = vlaneseq
        %v1381 = vshrl.u32 %v1380, 7
        %v1382 = vsub.s32 %v1379, %v1381
        %v1383 = vrot.slane %v1355, %v1382
        %v1384 = vcombine.high %v1362, %v1362
        %v1385 = vcombine.high %v1369, %v1369
        %v1386 = vcombine.high %v1376, %v1376
        %v1387 = vcombine.high %v1383, %v1383
        %v1388 = vcombine.high %v924, %v924
        %v1390 = vunpack.c.l.s4 1966171168
        %v1391 = vunpack.c.0.s8 %v1390
        %v1392 = vlaneseq
        %v1393 = vshrl.u32 %v1392, 7
        %v1394 = vsub.s32 %v1391, %v1393
        %v1395 = vrot.slane %v924, %v1394
        %v1397 = vunpack.c.l.s4 1966171168
        %v1398 = vunpack.c.0.s8 %v1397
        %v1399 = vlaneseq
        %v1400 = vshrl.u32 %v1399, 7
        %v1401 = vsub.s32 %v1398, %v1400
        %v1402 = vrot.slane %v1388, %v1401
        %v1403 = vcombine.high %v1395, %v1395
        %v1404 = vcombine.high %v1402, %v1402
        %v1406 = vunpack.c.l.s4 1966171168
        %v1407 = vunpack.c.0.s8 %v1406
        %v1408 = vlaneseq
        %v1409 = vshrl.u32 %v1408, 7
        %v1410 = vsub.s32 %v1407, %v1409
        %v1411 = vrot.slane %v1395, %v1410
        %v1413 = vunpack.c.l.s4 1966171168
        %v1414 = vunpack.c.0.s8 %v1413
        %v1415 = vlaneseq
        %v1416 = vshrl.u32 %v1415, 7
        %v1417 = vsub.s32 %v1414, %v1416
        %v1418 = vrot.slane %v1402, %v1417
        %v1420 = vunpack.c.l.s4 1966171168
        %v1421 = vunpack.c.0.s8 %v1420
        %v1422 = vlaneseq
        %v1423 = vshrl.u32 %v1422, 7
        %v1424 = vsub.s32 %v1421, %v1423
        %v1425 = vrot.slane %v1403, %v1424
        %v1427 = vunpack.c.l.s4 1966171168
        %v1428 = vunpack.c.0.s8 %v1427
        %v1429 = vlaneseq
        %v1430 = vshrl.u32 %v1429, 7
        %v1431 = vsub.s32 %v1428, %v1430
        %v1432 = vrot.slane %v1404, %v1431
        %v1433 = vcombine.high %v1411, %v1411
        %v1434 = vcombine.high %v1418, %v1418
        %v1435 = vcombine.high %v1425, %v1425
        %v1436 = vcombine.high %v1432, %v1432
        %v1437 = vlaneseq
        %v1438 = vshrl.u32 %v1437, 7
        %v1439 = vsub.s32 0, %v1438
        %v1440 = vrot.slane %v1362, %v1439
        %v1441 = vlaneseq
        %v1442 = vshrl.u32 %v1441, 7
        %v1443 = vsub.s32 0, %v1442
        %v1444 = vrot.slane %v1376, %v1443
        %v1445 = vlaneseq
        %v1446 = vshrl.u32 %v1445, 7
        %v1447 = vsub.s32 0, %v1446
        %v1448 = vrot.slane %v1384, %v1447
        %v1449 = vlaneseq
        %v1450 = vshrl.u32 %v1449, 7
        %v1451 = vsub.s32 0, %v1450
        %v1452 = vrot.slane %v1386, %v1451
        %v1453 = vlaneseq
        %v1454 = vshrl.u32 %v1453, 7
        %v1455 = vsub.s32 0, %v1454
        %v1456 = vrot.slane %v1369, %v1455
        %v1457 = vlaneseq
        %v1458 = vshrl.u32 %v1457, 7
        %v1459 = vsub.s32 0, %v1458
        %v1460 = vrot.slane %v1383, %v1459
        %v1461 = vlaneseq
        %v1462 = vshrl.u32 %v1461, 7
        %v1463 = vsub.s32 0, %v1462
        %v1464 = vrot.slane %v1385, %v1463
        %v1465 = vlaneseq
        %v1466 = vshrl.u32 %v1465, 7
        %v1467 = vsub.s32 0, %v1466
        %v1468 = vrot.slane %v1387, %v1467
        %v1469 = vlaneseq
        %v1470 = vshrl.u32 %v1469, 7
        %v1471 = vsub.s32 0, %v1470
        %v1472 = vrot.slane %v1411, %v1471
        %v1473 = vlaneseq
        %v1474 = vshrl.u32 %v1473, 7
        %v1475 = vsub.s32 0, %v1474
        %v1476 = vrot.slane %v1425, %v1475
        %v1477 = vlaneseq
        %v1478 = vshrl.u32 %v1477, 7
        %v1479 = vsub.s32 0, %v1478
        %v1480 = vrot.slane %v1433, %v1479
        %v1481 = vlaneseq
        %v1482 = vshrl.u32 %v1481, 7
        %v1483 = vsub.s32 0, %v1482
        %v1484 = vrot.slane %v1435, %v1483
        %v1485 = vlaneseq
        %v1486 = vshrl.u32 %v1485, 7
        %v1487 = vsub.s32 0, %v1486
        %v1488 = vrot.slane %v1418, %v1487
        %v1489 = vlaneseq
        %v1490 = vshrl.u32 %v1489, 7
        %v1491 = vsub.s32 0, %v1490
        %v1492 = vrot.slane %v1432, %v1491
        %v1493 = vlaneseq
        %v1494 = vshrl.u32 %v1493, 7
        %v1495 = vsub.s32 0, %v1494
        %v1496 = vrot.slane %v1434, %v1495
        %v1497 = vlaneseq
        %v1498 = vshrl.u32 %v1497, 7
        %v1499 = vsub.s32 0, %v1498
        %v1500 = vrot.slane %v1436, %v1499
        %v1517 = vmul.f32 %v1174, %v1440
        %v1518 = vmul.f32 %v1179, %v1440
        %v1519 = vmul.f32 %v1184, %v1444
        %v1520 = vmul.f32 %v1189, %v1444
        %v1521 = vmul.f32 %v1194, %v1448
        %v1522 = vmul.f32 %v1199, %v1448
        %v1523 = vmul.f32 %v1204, %v1452
        %v1524 = vmul.f32 %v1209, %v1452
        %v1525 = vmul.f32 %v1214, %v1456
        %v1526 = vmul.f32 %v1219, %v1456
        %v1527 = vmul.f32 %v1224, %v1460
        %v1528 = vmul.f32 %v1229, %v1460
        %v1529 = vmul.f32 %v1234, %v1464
        %v1530 = vmul.f32 %v1239, %v1464
        %v1531 = vmul.f32 %v1244, %v1468
        %v1532 = vmul.f32 %v1249, %v1468
        %v1533 = vmul.f32 %v1254, %v1472
        %v1534 = vmul.f32 %v1259, %v1472
        %v1535 = vmul.f32 %v1264, %v1476
        %v1536 = vmul.f32 %v1269, %v1476
        %v1537 = vmul.f32 %v1274, %v1480
        %v1538 = vmul.f32 %v1279, %v1480
        %v1539 = vmul.f32 %v1284, %v1484
        %v1540 = vmul.f32 %v1289, %v1484
        %v1541 = vmul.f32 %v1294, %v1488
        %v1542 = vmul.f32 %v1299, %v1488
        %v1543 = vmul.f32 %v1304, %v1492
        %v1544 = vmul.f32 %v1309, %v1492
        %v1545 = vmul.f32 %v1314, %v1496
        %v1546 = vmul.f32 %v1319, %v1496
        %v1547 = vmul.f32 %v1324, %v1500
        %v1548 = vmul.f32 %v1329, %v1500
        %v1550 = vsel %vm563, %v1517, 0
        %v1553 = vsel %vm563, %v1518, 0
        %v1556 = vsel %vm563, %v1519, 0
        %v1559 = vsel %vm563, %v1520, 0
        %v1562 = vsel %vm563, %v1521, 0
        %v1565 = vsel %vm563, %v1522, 0
        %v1568 = vsel %vm563, %v1523, 0
        %v1571 = vsel %vm563, %v1524, 0
        %v1574 = vsel %vm563, %v1525, 0
        %v1577 = vsel %vm563, %v1526, 0
        %v1580 = vsel %vm563, %v1527, 0
        %v1583 = vsel %vm563, %v1528, 0
        %v1586 = vsel %vm563, %v1529, 0
        %v1589 = vsel %vm563, %v1530, 0
        %v1592 = vsel %vm563, %v1531, 0
        %v1595 = vsel %vm563, %v1532, 0
        %v1598 = vsel %vm563, %v1533, 0
        %v1601 = vsel %vm563, %v1534, 0
        %v1604 = vsel %vm563, %v1535, 0
        %v1607 = vsel %vm563, %v1536, 0
        %v1610 = vsel %vm563, %v1537, 0
        %v1613 = vsel %vm563, %v1538, 0
        %v1616 = vsel %vm563, %v1539, 0
        %v1619 = vsel %vm563, %v1540, 0
        %v1622 = vsel %vm563, %v1541, 0
        %v1625 = vsel %vm563, %v1542, 0
        %v1628 = vsel %vm563, %v1543, 0
        %v1631 = vsel %vm563, %v1544, 0
        %v1634 = vsel %vm563, %v1545, 0
        %v1637 = vsel %vm563, %v1546, 0
        %v1640 = vsel %vm563, %v1547, 0
        %v1643 = vsel %vm563, %v1548, 0
        %1645 = vmatprep.subr.mxu0 0.0
        %1646 = vmatpush1.msra.mxu0 %v1332
        %1647 = vmatprep.subr.mxu0 0.0
        %1648 = vmatpush1.msra.mxu0 %v1333
        %1649 = vmatprep.subr.mxu0 0.0
        %1650 = vmatpush1.msra.mxu0 %v1334
        %1651 = vmatprep.subr.mxu0 0.0
        %1652 = vmatpush1.msra.mxu0 %v1335
        %1653 = vmatprep.subr.mxu0 0.0
        %1654 = vmatpush1.msra.mxu0 0.0
        %1655 = vmatprep.subr.mxu0 0.0
        %1656 = vmatpush1.msra.mxu0 0.0
        %1657 = vmatprep.subr.mxu0 0.0
        %1658 = vmatpush1.msra.mxu0 0.0
        %1659 = vmatprep.subr.mxu0 0.0
        %1660 = vmatpush1.msra.mxu0 0.0
        %1661 = vmatprep.subr.mxu0 0.0
        %1662 = vmatpush1.msra.mxu0 0.0
        %1663 = vmatprep.subr.mxu0 0.0
        %1664 = vmatpush1.msra.mxu0 0.0
        %1665 = vmatprep.subr.mxu0 0.0
        %1666 = vmatpush1.msra.mxu0 0.0
        %1667 = vmatprep.subr.mxu0 0.0
        %1668 = vmatpush1.msra.mxu0 0.0
        %1669 = vmatprep.subr.mxu0 0.0
        %1670 = vmatpush1.msra.mxu0 0.0
        %1671 = vmatprep.subr.mxu0 0.0
        %1672 = vmatpush1.msra.mxu0 0.0
        %1673 = vmatprep.subr.mxu0 0.0
        %1674 = vmatpush1.msra.mxu0 0.0
        %1675 = vmatprep.subr.mxu0 0.0
        %1676 = vmatpush1.msra.mxu0 0.0
        %1677 = vmatprep.subr.mxu0 0.0
        %1678 = vmatpush1.msra.mxu0 0.0
        %1679 = vmatprep.subr.mxu0 0.0
        %1680 = vmatpush1.msra.mxu0 0.0
        %1681 = vmatprep.subr.mxu0 0.0
        %1682 = vmatpush1.msra.mxu0 0.0
        %1683 = vmatprep.subr.mxu0 0.0
        %1684 = vmatpush1.msra.mxu0 0.0
        %1685 = vmatprep.subr.mxu0 0.0
        %1686 = vmatpush1.msra.mxu0 0.0
        %1687 = vmatprep.subr.mxu0 0.0
        %1688 = vmatpush1.msra.mxu0 0.0
        %1689 = vmatprep.subr.mxu0 0.0
        %1690 = vmatpush1.msra.mxu0 0.0
        %1691 = vmatprep.subr.mxu0 0.0
        %1692 = vmatpush1.msra.mxu0 0.0
        %1693 = vmatprep.subr.mxu0 0.0
        %1694 = vmatpush1.msra.mxu0 0.0
        %1695 = vmatprep.subr.mxu0 0.0
        %1696 = vmatpush1.msra.mxu0 0.0
        %1697 = vmatprep.subr.mxu0 0.0
        %1698 = vmatpush1.msra.mxu0 0.0
        %1699 = vmatprep.subr.mxu0 0.0
        %1700 = vmatpush1.msra.mxu0 0.0
        %1701 = vmatprep.subr.mxu0 0.0
        %1702 = vmatpush1.msra.mxu0 0.0
        %1703 = vmatprep.subr.mxu0 0.0
        %1704 = vmatpush1.msra.mxu0 0.0
        %1705 = vmatprep.subr.mxu0 0.0
        %1706 = vmatpush1.msra.mxu0 0.0
        %1707 = vmatprep.subr.mxu0 0.0
        %1708 = vmatpush1.msra.mxu0 0.0
        %1709 = vmatprep.mubr.f32.mxu0 0.0
        %1710 = vmatmul.mubr.f32.gmra.mrb[0].mxu0 %v1550
        %v1711 = vpop.f32.mrb[0].mxu0
        %v1712 = vadd.f32 0.0, %v1711
        %v1713 = vpop.f32.mrb[0].mxu0
        %1714 = vmatprep.mubr.f32.mxu0 0.0
        %1715 = vmatmul.mubr.f32.gmra.mrb[0].mxu0 %v1553
        %v1716 = vpop.f32.mrb[0].mxu0
        %v1717 = vadd.f32 0.0, %v1716
        %v1718 = vpop.f32.mrb[0].mxu0
        %1719 = vmatprep.mubr.f32.mxu0 0.0
        %1720 = vmatmul.mubr.f32.gmra.mrb[0].mxu0 %v1556
        %v1721 = vpop.f32.mrb[0].mxu0
        %v1722 = vadd.f32 0.0, %v1721
        %v1723 = vpop.f32.mrb[0].mxu0
        %1724 = vmatprep.mubr.f32.mxu0 0.0
        %1725 = vmatmul.mubr.f32.gmra.mrb[0].mxu0 %v1559
        %v1726 = vpop.f32.mrb[0].mxu0
        %v1727 = vadd.f32 0.0, %v1726
        %v1728 = vpop.f32.mrb[0].mxu0
        %1729 = vmatprep.mubr.f32.mxu0 0.0
        %1730 = vmatmul.mubr.f32.gmra.mrb[0].mxu0 %v1562
        %v1731 = vpop.f32.mrb[0].mxu0
        %v1732 = vadd.f32 0.0, %v1731
        %v1733 = vpop.f32.mrb[0].mxu0
        %1734 = vmatprep.mubr.f32.mxu0 0.0
        %1735 = vmatmul.mubr.f32.gmra.mrb[0].mxu0 %v1565
        %v1736 = vpop.f32.mrb[0].mxu0
        %v1737 = vadd.f32 0.0, %v1736
        %v1738 = vpop.f32.mrb[0].mxu0
        %1739 = vmatprep.mubr.f32.mxu0 0.0
        %1740 = vmatmul.mubr.f32.gmra.mrb[0].mxu0 %v1568
        %v1741 = vpop.f32.mrb[0].mxu0
        %v1742 = vadd.f32 0.0, %v1741
        %v1743 = vpop.f32.mrb[0].mxu0
        %1744 = vmatprep.mubr.f32.mxu0 0.0
        %1745 = vmatmul.mubr.f32.gmra.mrb[0].mxu0 %v1571
        %v1746 = vpop.f32.mrb[0].mxu0
        %v1747 = vadd.f32 0.0, %v1746
        %v1748 = vpop.f32.mrb[0].mxu0
        %1749 = vmatprep.mubr.f32.mxu0 0.0
        %1750 = vmatmul.mubr.f32.gmra.mrb[0].mxu0 %v1574
        %v1751 = vpop.f32.mrb[0].mxu0
        %v1752 = vadd.f32 0.0, %v1751
        %v1753 = vpop.f32.mrb[0].mxu0
        %1754 = vmatprep.mubr.f32.mxu0 0.0
        %1755 = vmatmul.mubr.f32.gmra.mrb[0].mxu0 %v1577
        %v1756 = vpop.f32.mrb[0].mxu0
        %v1757 = vadd.f32 0.0, %v1756
        %v1758 = vpop.f32.mrb[0].mxu0
        %1759 = vmatprep.mubr.f32.mxu0 0.0
        %1760 = vmatmul.mubr.f32.gmra.mrb[0].mxu0 %v1580
        %v1761 = vpop.f32.mrb[0].mxu0
        %v1762 = vadd.f32 0.0, %v1761
        %v1763 = vpop.f32.mrb[0].mxu0
        %1764 = vmatprep.mubr.f32.mxu0 0.0
        %1765 = vmatmul.mubr.f32.gmra.mrb[0].mxu0 %v1583
        %v1766 = vpop.f32.mrb[0].mxu0
        %v1767 = vadd.f32 0.0, %v1766
        %v1768 = vpop.f32.mrb[0].mxu0
        %1769 = vmatprep.mubr.f32.mxu0 0.0
        %1770 = vmatmul.mubr.f32.gmra.mrb[0].mxu0 %v1586
        %v1771 = vpop.f32.mrb[0].mxu0
        %v1772 = vadd.f32 0.0, %v1771
        %v1773 = vpop.f32.mrb[0].mxu0
        %1774 = vmatprep.mubr.f32.mxu0 0.0
        %1775 = vmatmul.mubr.f32.gmra.mrb[0].mxu0 %v1589
        %v1776 = vpop.f32.mrb[0].mxu0
        %v1777 = vadd.f32 0.0, %v1776
        %v1778 = vpop.f32.mrb[0].mxu0
        %1779 = vmatprep.mubr.f32.mxu0 0.0
        %1780 = vmatmul.mubr.f32.gmra.mrb[0].mxu0 %v1592
        %v1781 = vpop.f32.mrb[0].mxu0
        %v1782 = vadd.f32 0.0, %v1781
        %v1783 = vpop.f32.mrb[0].mxu0
        %1784 = vmatprep.mubr.f32.mxu0 0.0
        %1785 = vmatmul.mubr.f32.gmra.mrb[0].mxu0 %v1595
        %v1786 = vpop.f32.mrb[0].mxu0
        %v1787 = vadd.f32 0.0, %v1786
        %v1788 = vpop.f32.mrb[0].mxu0
        %1789 = vmatprep.mubr.f32.mxu0 0.0
        %1790 = vmatmul.mubr.f32.gmra.mrb[0].mxu0 %v1598
        %v1791 = vpop.f32.mrb[0].mxu0
        %v1792 = vadd.f32 0.0, %v1791
        %v1793 = vpop.f32.mrb[0].mxu0
        %1794 = vmatprep.mubr.f32.mxu0 0.0
        %1795 = vmatmul.mubr.f32.gmra.mrb[0].mxu0 %v1601
        %v1796 = vpop.f32.mrb[0].mxu0
        %v1797 = vadd.f32 0.0, %v1796
        %v1798 = vpop.f32.mrb[0].mxu0
        %1799 = vmatprep.mubr.f32.mxu0 0.0
        %1800 = vmatmul.mubr.f32.gmra.mrb[0].mxu0 %v1604
        %v1801 = vpop.f32.mrb[0].mxu0
        %v1802 = vadd.f32 0.0, %v1801
        %v1803 = vpop.f32.mrb[0].mxu0
        %1804 = vmatprep.mubr.f32.mxu0 0.0
        %1805 = vmatmul.mubr.f32.gmra.mrb[0].mxu0 %v1607
        %v1806 = vpop.f32.mrb[0].mxu0
        %v1807 = vadd.f32 0.0, %v1806
        %v1808 = vpop.f32.mrb[0].mxu0
        %1809 = vmatprep.mubr.f32.mxu0 0.0
        %1810 = vmatmul.mubr.f32.gmra.mrb[0].mxu0 %v1610
        %v1811 = vpop.f32.mrb[0].mxu0
        %v1812 = vadd.f32 0.0, %v1811
        %v1813 = vpop.f32.mrb[0].mxu0
        %1814 = vmatprep.mubr.f32.mxu0 0.0
        %1815 = vmatmul.mubr.f32.gmra.mrb[0].mxu0 %v1613
        %v1816 = vpop.f32.mrb[0].mxu0
        %v1817 = vadd.f32 0.0, %v1816
        %v1818 = vpop.f32.mrb[0].mxu0
        %1819 = vmatprep.mubr.f32.mxu0 0.0
        %1820 = vmatmul.mubr.f32.gmra.mrb[0].mxu0 %v1616
        %v1821 = vpop.f32.mrb[0].mxu0
        %v1822 = vadd.f32 0.0, %v1821
        %v1823 = vpop.f32.mrb[0].mxu0
        %1824 = vmatprep.mubr.f32.mxu0 0.0
        %1825 = vmatmul.mubr.f32.gmra.mrb[0].mxu0 %v1619
        %v1826 = vpop.f32.mrb[0].mxu0
        %v1827 = vadd.f32 0.0, %v1826
        %v1828 = vpop.f32.mrb[0].mxu0
        %1829 = vmatprep.mubr.f32.mxu0 0.0
        %1830 = vmatmul.mubr.f32.gmra.mrb[0].mxu0 %v1622
        %v1831 = vpop.f32.mrb[0].mxu0
        %v1832 = vadd.f32 0.0, %v1831
        %v1833 = vpop.f32.mrb[0].mxu0
        %1834 = vmatprep.mubr.f32.mxu0 0.0
        %1835 = vmatmul.mubr.f32.gmra.mrb[0].mxu0 %v1625
        %v1836 = vpop.f32.mrb[0].mxu0
        %v1837 = vadd.f32 0.0, %v1836
        %v1838 = vpop.f32.mrb[0].mxu0
        %1839 = vmatprep.mubr.f32.mxu0 0.0
        %1840 = vmatmul.mubr.f32.gmra.mrb[0].mxu0 %v1628
        %v1841 = vpop.f32.mrb[0].mxu0
        %v1842 = vadd.f32 0.0, %v1841
        %v1843 = vpop.f32.mrb[0].mxu0
        %1844 = vmatprep.mubr.f32.mxu0 0.0
        %1845 = vmatmul.mubr.f32.gmra.mrb[0].mxu0 %v1631
        %v1846 = vpop.f32.mrb[0].mxu0
        %v1847 = vadd.f32 0.0, %v1846
        %v1848 = vpop.f32.mrb[0].mxu0
        %1849 = vmatprep.mubr.f32.mxu0 0.0
        %1850 = vmatmul.mubr.f32.gmra.mrb[0].mxu0 %v1634
        %v1851 = vpop.f32.mrb[0].mxu0
        %v1852 = vadd.f32 0.0, %v1851
        %v1853 = vpop.f32.mrb[0].mxu0
        %1854 = vmatprep.mubr.f32.mxu0 0.0
        %1855 = vmatmul.mubr.f32.gmra.mrb[0].mxu0 %v1637
        %v1856 = vpop.f32.mrb[0].mxu0
        %v1857 = vadd.f32 0.0, %v1856
        %v1858 = vpop.f32.mrb[0].mxu0
        %1859 = vmatprep.mubr.f32.mxu0 0.0
        %1860 = vmatmul.mubr.f32.gmra.mrb[0].mxu0 %v1640
        %v1861 = vpop.f32.mrb[0].mxu0
        %v1862 = vadd.f32 0.0, %v1861
        %v1863 = vpop.f32.mrb[0].mxu0
        %1864 = vmatprep.mubr.f32.mxu0 0.0
        %1865 = vmatmul.mubr.f32.gmra.mrb[0].mxu0 %v1643
        %v1866 = vpop.f32.mrb[0].mxu0
        %v1867 = vadd.f32 0.0, %v1866
        %v1868 = vpop.f32.mrb[0].mxu0
        %1869 = vdwg.mxu0
        %v1870 = vmul.f32 %v923, %v1003
        %v1871 = vmul.f32 %v924, %v1008
        %v1873 = vsel %vm563, %v1870, 0
        %v1876 = vsel %vm563, %v1871, 0
        %1878 = vmatprep.subr.mxu0 0.0
        %1879 = vmatpush1.msra.mxu0 %v1332
        %1880 = vmatprep.subr.mxu0 0.0
        %1881 = vmatpush1.msra.mxu0 %v1333
        %1882 = vmatprep.subr.mxu0 0.0
        %1883 = vmatpush1.msra.mxu0 %v1334
        %1884 = vmatprep.subr.mxu0 0.0
        %1885 = vmatpush1.msra.mxu0 %v1335
        %1886 = vmatprep.subr.mxu0 0.0
        %1887 = vmatpush1.msra.mxu0 0.0
        %1888 = vmatprep.subr.mxu0 0.0
        %1889 = vmatpush1.msra.mxu0 0.0
        %1890 = vmatprep.subr.mxu0 0.0
        %1891 = vmatpush1.msra.mxu0 0.0
        %1892 = vmatprep.subr.mxu0 0.0
        %1893 = vmatpush1.msra.mxu0 0.0
        %1894 = vmatprep.subr.mxu0 0.0
        %1895 = vmatpush1.msra.mxu0 0.0
        %1896 = vmatprep.subr.mxu0 0.0
        %1897 = vmatpush1.msra.mxu0 0.0
        %1898 = vmatprep.subr.mxu0 0.0
        %1899 = vmatpush1.msra.mxu0 0.0
        %1900 = vmatprep.subr.mxu0 0.0
        %1901 = vmatpush1.msra.mxu0 0.0
        %1902 = vmatprep.subr.mxu0 0.0
        %1903 = vmatpush1.msra.mxu0 0.0
        %1904 = vmatprep.subr.mxu0 0.0
        %1905 = vmatpush1.msra.mxu0 0.0
        %1906 = vmatprep.subr.mxu0 0.0
        %1907 = vmatpush1.msra.mxu0 0.0
        %1908 = vmatprep.subr.mxu0 0.0
        %1909 = vmatpush1.msra.mxu0 0.0
        %1910 = vmatprep.subr.mxu0 0.0
        %1911 = vmatpush1.msra.mxu0 0.0
        %1912 = vmatprep.subr.mxu0 0.0
        %1913 = vmatpush1.msra.mxu0 0.0
        %1914 = vmatprep.subr.mxu0 0.0
        %1915 = vmatpush1.msra.mxu0 0.0
        %1916 = vmatprep.subr.mxu0 0.0
        %1917 = vmatpush1.msra.mxu0 0.0
        %1918 = vmatprep.subr.mxu0 0.0
        %1919 = vmatpush1.msra.mxu0 0.0
        %1920 = vmatprep.subr.mxu0 0.0
        %1921 = vmatpush1.msra.mxu0 0.0
        %1922 = vmatprep.subr.mxu0 0.0
        %1923 = vmatpush1.msra.mxu0 0.0
        %1924 = vmatprep.subr.mxu0 0.0
        %1925 = vmatpush1.msra.mxu0 0.0
        %1926 = vmatprep.subr.mxu0 0.0
        %1927 = vmatpush1.msra.mxu0 0.0
        %1928 = vmatprep.subr.mxu0 0.0
        %1929 = vmatpush1.msra.mxu0 0.0
        %1930 = vmatprep.subr.mxu0 0.0
        %1931 = vmatpush1.msra.mxu0 0.0
        %1932 = vmatprep.subr.mxu0 0.0
        %1933 = vmatpush1.msra.mxu0 0.0
        %1934 = vmatprep.subr.mxu0 0.0
        %1935 = vmatpush1.msra.mxu0 0.0
        %1936 = vmatprep.subr.mxu0 0.0
        %1937 = vmatpush1.msra.mxu0 0.0
        %1938 = vmatprep.subr.mxu0 0.0
        %1939 = vmatpush1.msra.mxu0 0.0
        %1940 = vmatprep.subr.mxu0 0.0
        %1941 = vmatpush1.msra.mxu0 0.0
        %1942 = vmatprep.mubr.f32.mxu0 0.0
        %1943 = vmatmul.mubr.f32.gmra.mrb[0].mxu0 %v1873
        %v1944 = vpop.f32.mrb[0].mxu0
        %v1945 = vadd.f32 0.0, %v1944
        %v1946 = vpop.f32.mrb[0].mxu0
        %1947 = vmatprep.mubr.f32.mxu0 0.0
        %1948 = vmatmul.mubr.f32.gmra.mrb[0].mxu0 %v1876
        %v1949 = vpop.f32.mrb[0].mxu0
        %v1950 = vadd.f32 0.0, %v1949
        %v1951 = vpop.f32.mrb[0].mxu0
        %1952 = vdwg.mxu0
        %vm1953 = vcmask 31744
        %v1954 = vsel %vm1953, %v1712, -inf
        %v1955 = vsel %vm1953, %v1717, -inf
        %v1956 = vmax.f32 %v1954, %v1955
        %v1957 = vrot.slane %v1956, 4
        %v1958 = vmax.f32 %v1956, %v1957
        %v1959 = vrot.slane %v1958, 2
        %v1960 = vmax.f32 %v1958, %v1959
        %v1961 = vrot.slane %v1960, 1
        %v1962 = vmax.f32 %v1960, %v1961
        %v1963 = vsel %vm1953, %v1722, -inf
        %v1964 = vsel %vm1953, %v1727, -inf
        %v1965 = vmax.f32 %v1963, %v1964
        %v1966 = vrot.slane %v1965, 4
        %v1967 = vmax.f32 %v1965, %v1966
        %v1968 = vrot.slane %v1967, 2
        %v1969 = vmax.f32 %v1967, %v1968
        %v1970 = vrot.slane %v1969, 1
        %v1971 = vmax.f32 %v1969, %v1970
        %v1972 = vsel %vm1953, %v1732, -inf
        %v1973 = vsel %vm1953, %v1737, -inf
        %v1974 = vmax.f32 %v1972, %v1973
        %v1975 = vrot.slane %v1974, 4
        %v1976 = vmax.f32 %v1974, %v1975
        %v1977 = vrot.slane %v1976, 2
        %v1978 = vmax.f32 %v1976, %v1977
        %v1979 = vrot.slane %v1978, 1
        %v1980 = vmax.f32 %v1978, %v1979
        %v1981 = vsel %vm1953, %v1742, -inf
        %v1982 = vsel %vm1953, %v1747, -inf
        %v1983 = vmax.f32 %v1981, %v1982
        %v1984 = vrot.slane %v1983, 4
        %v1985 = vmax.f32 %v1983, %v1984
        %v1986 = vrot.slane %v1985, 2
        %v1987 = vmax.f32 %v1985, %v1986
        %v1988 = vrot.slane %v1987, 1
        %v1989 = vmax.f32 %v1987, %v1988
        %v1990 = vsel %vm1953, %v1752, -inf
        %v1991 = vsel %vm1953, %v1757, -inf
        %v1992 = vmax.f32 %v1990, %v1991
        %v1993 = vrot.slane %v1992, 4
        %v1994 = vmax.f32 %v1992, %v1993
        %v1995 = vrot.slane %v1994, 2
        %v1996 = vmax.f32 %v1994, %v1995
        %v1997 = vrot.slane %v1996, 1
        %v1998 = vmax.f32 %v1996, %v1997
        %v1999 = vsel %vm1953, %v1762, -inf
        %v2000 = vsel %vm1953, %v1767, -inf
        %v2001 = vmax.f32 %v1999, %v2000
        %v2002 = vrot.slane %v2001, 4
        %v2003 = vmax.f32 %v2001, %v2002
        %v2004 = vrot.slane %v2003, 2
        %v2005 = vmax.f32 %v2003, %v2004
        %v2006 = vrot.slane %v2005, 1
        %v2007 = vmax.f32 %v2005, %v2006
        %v2008 = vsel %vm1953, %v1772, -inf
        %v2009 = vsel %vm1953, %v1777, -inf
        %v2010 = vmax.f32 %v2008, %v2009
        %v2011 = vrot.slane %v2010, 4
        %v2012 = vmax.f32 %v2010, %v2011
        %v2013 = vrot.slane %v2012, 2
        %v2014 = vmax.f32 %v2012, %v2013
        %v2015 = vrot.slane %v2014, 1
        %v2016 = vmax.f32 %v2014, %v2015
        %v2017 = vsel %vm1953, %v1782, -inf
        %v2018 = vsel %vm1953, %v1787, -inf
        %v2019 = vmax.f32 %v2017, %v2018
        %v2020 = vrot.slane %v2019, 4
        %v2021 = vmax.f32 %v2019, %v2020
        %v2022 = vrot.slane %v2021, 2
        %v2023 = vmax.f32 %v2021, %v2022
        %v2024 = vrot.slane %v2023, 1
        %v2025 = vmax.f32 %v2023, %v2024
        %v2026 = vsel %vm1953, %v1792, -inf
        %v2027 = vsel %vm1953, %v1797, -inf
        %v2028 = vmax.f32 %v2026, %v2027
        %v2029 = vrot.slane %v2028, 4
        %v2030 = vmax.f32 %v2028, %v2029
        %v2031 = vrot.slane %v2030, 2
        %v2032 = vmax.f32 %v2030, %v2031
        %v2033 = vrot.slane %v2032, 1
        %v2034 = vmax.f32 %v2032, %v2033
        %v2035 = vsel %vm1953, %v1802, -inf
        %v2036 = vsel %vm1953, %v1807, -inf
        %v2037 = vmax.f32 %v2035, %v2036
        %v2038 = vrot.slane %v2037, 4
        %v2039 = vmax.f32 %v2037, %v2038
        %v2040 = vrot.slane %v2039, 2
        %v2041 = vmax.f32 %v2039, %v2040
        %v2042 = vrot.slane %v2041, 1
        %v2043 = vmax.f32 %v2041, %v2042
        %v2044 = vsel %vm1953, %v1812, -inf
        %v2045 = vsel %vm1953, %v1817, -inf
        %v2046 = vmax.f32 %v2044, %v2045
        %v2047 = vrot.slane %v2046, 4
        %v2048 = vmax.f32 %v2046, %v2047
        %v2049 = vrot.slane %v2048, 2
        %v2050 = vmax.f32 %v2048, %v2049
        %v2051 = vrot.slane %v2050, 1
        %v2052 = vmax.f32 %v2050, %v2051
        %v2053 = vsel %vm1953, %v1822, -inf
        %v2054 = vsel %vm1953, %v1827, -inf
        %v2055 = vmax.f32 %v2053, %v2054
        %v2056 = vrot.slane %v2055, 4
        %v2057 = vmax.f32 %v2055, %v2056
        %v2058 = vrot.slane %v2057, 2
        %v2059 = vmax.f32 %v2057, %v2058
        %v2060 = vrot.slane %v2059, 1
        %v2061 = vmax.f32 %v2059, %v2060
        %v2062 = vsel %vm1953, %v1832, -inf
        %v2063 = vsel %vm1953, %v1837, -inf
        %v2064 = vmax.f32 %v2062, %v2063
        %v2065 = vrot.slane %v2064, 4
        %v2066 = vmax.f32 %v2064, %v2065
        %v2067 = vrot.slane %v2066, 2
        %v2068 = vmax.f32 %v2066, %v2067
        %v2069 = vrot.slane %v2068, 1
        %v2070 = vmax.f32 %v2068, %v2069
        %v2071 = vsel %vm1953, %v1842, -inf
        %v2072 = vsel %vm1953, %v1847, -inf
        %v2073 = vmax.f32 %v2071, %v2072
        %v2074 = vrot.slane %v2073, 4
        %v2075 = vmax.f32 %v2073, %v2074
        %v2076 = vrot.slane %v2075, 2
        %v2077 = vmax.f32 %v2075, %v2076
        %v2078 = vrot.slane %v2077, 1
        %v2079 = vmax.f32 %v2077, %v2078
        %v2080 = vsel %vm1953, %v1852, -inf
        %v2081 = vsel %vm1953, %v1857, -inf
        %v2082 = vmax.f32 %v2080, %v2081
        %v2083 = vrot.slane %v2082, 4
        %v2084 = vmax.f32 %v2082, %v2083
        %v2085 = vrot.slane %v2084, 2
        %v2086 = vmax.f32 %v2084, %v2085
        %v2087 = vrot.slane %v2086, 1
        %v2088 = vmax.f32 %v2086, %v2087
        %v2089 = vsel %vm1953, %v1862, -inf
        %v2090 = vsel %vm1953, %v1867, -inf
        %v2091 = vmax.f32 %v2089, %v2090
        %v2092 = vrot.slane %v2091, 4
        %v2093 = vmax.f32 %v2091, %v2092
        %v2094 = vrot.slane %v2093, 2
        %v2095 = vmax.f32 %v2093, %v2094
        %v2096 = vrot.slane %v2095, 1
        %v2097 = vmax.f32 %v2095, %v2096
        %v2100 = vrot.slane %v1945, 1
        %v2101 = vrot.slane %v1945, 2
        %v2102 = vrot.slane %v1945, 3
        %v2103 = vrot.slane %v1945, 4
        %v2104 = vrot.slane %v1945, 5
        %v2105 = vrot.slane %v1945, 6
        %v2106 = vrot.slane %v1945, 7
        %v2107 = vrot.slane %v1950, 1
        %v2108 = vrot.slane %v1950, 2
        %v2109 = vrot.slane %v1950, 3
        %v2110 = vrot.slane %v1950, 4
        %v2111 = vrot.slane %v1950, 5
        %v2112 = vrot.slane %v1950, 6
        %v2113 = vrot.slane %v1950, 7
        %v2130 = vmax.f32 %v1962, %v1945
        %v2131 = vmax.f32 %v1971, %v2100
        %v2132 = vmax.f32 %v1980, %v2101
        %v2133 = vmax.f32 %v1989, %v2102
        %v2134 = vmax.f32 %v1998, %v2103
        %v2135 = vmax.f32 %v2007, %v2104
        %v2136 = vmax.f32 %v2016, %v2105
        %v2137 = vmax.f32 %v2025, %v2106
        %v2138 = vmax.f32 %v2034, %v1950
        %v2139 = vmax.f32 %v2043, %v2107
        %v2140 = vmax.f32 %v2052, %v2108
        %v2141 = vmax.f32 %v2061, %v2109
        %v2142 = vmax.f32 %v2070, %v2110
        %v2143 = vmax.f32 %v2079, %v2111
        %v2144 = vmax.f32 %v2088, %v2112
        %v2145 = vmax.f32 %v2097, %v2113
        %v2146 = vlaneseq
        %v2147 = vshrl.u32 %v2146, 7
        %v2148 = vsub.s32 0, %v2147
        %v2149 = vrot.slane %v2130, %v2148
        %v2150 = vlaneseq
        %v2151 = vshrl.u32 %v2150, 7
        %v2152 = vsub.s32 0, %v2151
        %v2153 = vrot.slane %v2131, %v2152
        %v2154 = vlaneseq
        %v2155 = vshrl.u32 %v2154, 7
        %v2156 = vsub.s32 0, %v2155
        %v2157 = vrot.slane %v2132, %v2156
        %v2158 = vlaneseq
        %v2159 = vshrl.u32 %v2158, 7
        %v2160 = vsub.s32 0, %v2159
        %v2161 = vrot.slane %v2133, %v2160
        %v2162 = vlaneseq
        %v2163 = vshrl.u32 %v2162, 7
        %v2164 = vsub.s32 0, %v2163
        %v2165 = vrot.slane %v2134, %v2164
        %v2166 = vlaneseq
        %v2167 = vshrl.u32 %v2166, 7
        %v2168 = vsub.s32 0, %v2167
        %v2169 = vrot.slane %v2135, %v2168
        %v2170 = vlaneseq
        %v2171 = vshrl.u32 %v2170, 7
        %v2172 = vsub.s32 0, %v2171
        %v2173 = vrot.slane %v2136, %v2172
        %v2174 = vlaneseq
        %v2175 = vshrl.u32 %v2174, 7
        %v2176 = vsub.s32 0, %v2175
        %v2177 = vrot.slane %v2137, %v2176
        %v2178 = vlaneseq
        %v2179 = vshrl.u32 %v2178, 7
        %v2180 = vsub.s32 0, %v2179
        %v2181 = vrot.slane %v2138, %v2180
        %v2182 = vlaneseq
        %v2183 = vshrl.u32 %v2182, 7
        %v2184 = vsub.s32 0, %v2183
        %v2185 = vrot.slane %v2139, %v2184
        %v2186 = vlaneseq
        %v2187 = vshrl.u32 %v2186, 7
        %v2188 = vsub.s32 0, %v2187
        %v2189 = vrot.slane %v2140, %v2188
        %v2190 = vlaneseq
        %v2191 = vshrl.u32 %v2190, 7
        %v2192 = vsub.s32 0, %v2191
        %v2193 = vrot.slane %v2141, %v2192
        %v2194 = vlaneseq
        %v2195 = vshrl.u32 %v2194, 7
        %v2196 = vsub.s32 0, %v2195
        %v2197 = vrot.slane %v2142, %v2196
        %v2198 = vlaneseq
        %v2199 = vshrl.u32 %v2198, 7
        %v2200 = vsub.s32 0, %v2199
        %v2201 = vrot.slane %v2143, %v2200
        %v2202 = vlaneseq
        %v2203 = vshrl.u32 %v2202, 7
        %v2204 = vsub.s32 0, %v2203
        %v2205 = vrot.slane %v2144, %v2204
        %v2206 = vlaneseq
        %v2207 = vshrl.u32 %v2206, 7
        %v2208 = vsub.s32 0, %v2207
        %v2209 = vrot.slane %v2145, %v2208
        %v2210 = vsub.f32 %v1712, %v2149
        %v2211 = vsub.f32 %v1717, %v2149
        %v2212 = vsub.f32 %v1722, %v2153
        %v2213 = vsub.f32 %v1727, %v2153
        %v2214 = vsub.f32 %v1732, %v2157
        %v2215 = vsub.f32 %v1737, %v2157
        %v2216 = vsub.f32 %v1742, %v2161
        %v2217 = vsub.f32 %v1747, %v2161
        %v2218 = vsub.f32 %v1752, %v2165
        %v2219 = vsub.f32 %v1757, %v2165
        %v2220 = vsub.f32 %v1762, %v2169
        %v2221 = vsub.f32 %v1767, %v2169
        %v2222 = vsub.f32 %v1772, %v2173
        %v2223 = vsub.f32 %v1777, %v2173
        %v2224 = vsub.f32 %v1782, %v2177
        %v2225 = vsub.f32 %v1787, %v2177
        %v2226 = vsub.f32 %v1792, %v2181
        %v2227 = vsub.f32 %v1797, %v2181
        %v2228 = vsub.f32 %v1802, %v2185
        %v2229 = vsub.f32 %v1807, %v2185
        %v2230 = vsub.f32 %v1812, %v2189
        %v2231 = vsub.f32 %v1817, %v2189
        %v2232 = vsub.f32 %v1822, %v2193
        %v2233 = vsub.f32 %v1827, %v2193
        %v2234 = vsub.f32 %v1832, %v2197
        %v2235 = vsub.f32 %v1837, %v2197
        %v2236 = vsub.f32 %v1842, %v2201
        %v2237 = vsub.f32 %v1847, %v2201
        %v2238 = vsub.f32 %v1852, %v2205
        %v2239 = vsub.f32 %v1857, %v2205
        %v2240 = vsub.f32 %v1862, %v2209
        %v2241 = vsub.f32 %v1867, %v2209
        %v2242 = vmul.f32 %v2210, 1.442695
        %v2243 = vpow.pop %v2242
        %v2244 = vmul.f32 %v2211, 1.442695
        %v2245 = vpow.pop %v2244
        %v2246 = vmul.f32 %v2212, 1.442695
        %v2247 = vpow.pop %v2246
        %v2248 = vmul.f32 %v2213, 1.442695
        %v2249 = vpow.pop %v2248
        %v2250 = vmul.f32 %v2214, 1.442695
        %v2251 = vpow.pop %v2250
        %v2252 = vmul.f32 %v2215, 1.442695
        %v2253 = vpow.pop %v2252
        %v2254 = vmul.f32 %v2216, 1.442695
        %v2255 = vpow.pop %v2254
        %v2256 = vmul.f32 %v2217, 1.442695
        %v2257 = vpow.pop %v2256
        %v2258 = vmul.f32 %v2218, 1.442695
        %v2259 = vpow.pop %v2258
        %v2260 = vmul.f32 %v2219, 1.442695
        %v2261 = vpow.pop %v2260
        %v2262 = vmul.f32 %v2220, 1.442695
        %v2263 = vpow.pop %v2262
        %v2264 = vmul.f32 %v2221, 1.442695
        %v2265 = vpow.pop %v2264
        %v2266 = vmul.f32 %v2222, 1.442695
        %v2267 = vpow.pop %v2266
        %v2268 = vmul.f32 %v2223, 1.442695
        %v2269 = vpow.pop %v2268
        %v2270 = vmul.f32 %v2224, 1.442695
        %v2271 = vpow.pop %v2270
        %v2272 = vmul.f32 %v2225, 1.442695
        %v2273 = vpow.pop %v2272
        %v2274 = vmul.f32 %v2226, 1.442695
        %v2275 = vpow.pop %v2274
        %v2276 = vmul.f32 %v2227, 1.442695
        %v2277 = vpow.pop %v2276
        %v2278 = vmul.f32 %v2228, 1.442695
        %v2279 = vpow.pop %v2278
        %v2280 = vmul.f32 %v2229, 1.442695
        %v2281 = vpow.pop %v2280
        %v2282 = vmul.f32 %v2230, 1.442695
        %v2283 = vpow.pop %v2282
        %v2284 = vmul.f32 %v2231, 1.442695
        %v2285 = vpow.pop %v2284
        %v2286 = vmul.f32 %v2232, 1.442695
        %v2287 = vpow.pop %v2286
        %v2288 = vmul.f32 %v2233, 1.442695
        %v2289 = vpow.pop %v2288
        %v2290 = vmul.f32 %v2234, 1.442695
        %v2291 = vpow.pop %v2290
        %v2292 = vmul.f32 %v2235, 1.442695
        %v2293 = vpow.pop %v2292
        %v2294 = vmul.f32 %v2236, 1.442695
        %v2295 = vpow.pop %v2294
        %v2296 = vmul.f32 %v2237, 1.442695
        %v2297 = vpow.pop %v2296
        %v2298 = vmul.f32 %v2238, 1.442695
        %v2299 = vpow.pop %v2298
        %v2300 = vmul.f32 %v2239, 1.442695
        %v2301 = vpow.pop %v2300
        %v2302 = vmul.f32 %v2240, 1.442695
        %v2303 = vpow.pop %v2302
        %v2304 = vmul.f32 %v2241, 1.442695
        %v2305 = vpow.pop %v2304
        %v2322 = vrot.slane %v2131, 7
        %v2323 = vsel %vm810, %v2322, %v2130
        %v2324 = vrot.slane %v2132, 6
        %v2325 = vsel %vm813, %v2324, %v2323
        %v2326 = vrot.slane %v2133, 5
        %v2327 = vsel %vm816, %v2326, %v2325
        %v2328 = vrot.slane %v2134, 4
        %v2329 = vsel %vm819, %v2328, %v2327
        %v2330 = vrot.slane %v2135, 3
        %v2331 = vsel %vm822, %v2330, %v2329
        %v2332 = vrot.slane %v2136, 2
        %v2333 = vsel %vm825, %v2332, %v2331
        %v2334 = vrot.slane %v2137, 1
        %v2335 = vsel %vm828, %v2334, %v2333
        %v2336 = vrot.slane %v2139, 7
        %v2337 = vsel %vm810, %v2336, %v2138
        %v2338 = vrot.slane %v2140, 6
        %v2339 = vsel %vm813, %v2338, %v2337
        %v2340 = vrot.slane %v2141, 5
        %v2341 = vsel %vm816, %v2340, %v2339
        %v2342 = vrot.slane %v2142, 4
        %v2343 = vsel %vm819, %v2342, %v2341
        %v2344 = vrot.slane %v2143, 3
        %v2345 = vsel %vm822, %v2344, %v2343
        %v2346 = vrot.slane %v2144, 2
        %v2347 = vsel %vm825, %v2346, %v2345
        %v2348 = vrot.slane %v2145, 1
        %v2349 = vsel %vm828, %v2348, %v2347
        %v2352 = vsub.f32 %v1945, %v2335
        %v2353 = vsub.f32 %v1950, %v2349
        %v2354 = vmul.f32 %v2352, 1.442695
        %v2355 = vpow.pop %v2354
        %v2356 = vmul.f32 %v2353, 1.442695
        %v2357 = vpow.pop %v2356
        %v2358 = vsel %vm1953, %v2243, 0.0
        %v2359 = vsel %vm1953, %v2245, 0.0
        %v2360 = vadd.f32 %v2358, %v2359
        %v2361 = vrot.slane %v2360, 4
        %v2362 = vadd.f32 %v2360, %v2361
        %v2363 = vrot.slane %v2362, 2
        %v2364 = vadd.f32 %v2362, %v2363
        %v2365 = vrot.slane %v2364, 1
        %v2366 = vadd.f32 %v2364, %v2365
        %v2367 = vsel %vm1953, %v2247, 0.0
        %v2368 = vsel %vm1953, %v2249, 0.0
        %v2369 = vadd.f32 %v2367, %v2368
        %v2370 = vrot.slane %v2369, 4
        %v2371 = vadd.f32 %v2369, %v2370
        %v2372 = vrot.slane %v2371, 2
        %v2373 = vadd.f32 %v2371, %v2372
        %v2374 = vrot.slane %v2373, 1
        %v2375 = vadd.f32 %v2373, %v2374
        %v2376 = vsel %vm1953, %v2251, 0.0
        %v2377 = vsel %vm1953, %v2253, 0.0
        %v2378 = vadd.f32 %v2376, %v2377
        %v2379 = vrot.slane %v2378, 4
        %v2380 = vadd.f32 %v2378, %v2379
        %v2381 = vrot.slane %v2380, 2
        %v2382 = vadd.f32 %v2380, %v2381
        %v2383 = vrot.slane %v2382, 1
        %v2384 = vadd.f32 %v2382, %v2383
        %v2385 = vsel %vm1953, %v2255, 0.0
        %v2386 = vsel %vm1953, %v2257, 0.0
        %v2387 = vadd.f32 %v2385, %v2386
        %v2388 = vrot.slane %v2387, 4
        %v2389 = vadd.f32 %v2387, %v2388
        %v2390 = vrot.slane %v2389, 2
        %v2391 = vadd.f32 %v2389, %v2390
        %v2392 = vrot.slane %v2391, 1
        %v2393 = vadd.f32 %v2391, %v2392
        %v2394 = vsel %vm1953, %v2259, 0.0
        %v2395 = vsel %vm1953, %v2261, 0.0
        %v2396 = vadd.f32 %v2394, %v2395
        %v2397 = vrot.slane %v2396, 4
        %v2398 = vadd.f32 %v2396, %v2397
        %v2399 = vrot.slane %v2398, 2
        %v2400 = vadd.f32 %v2398, %v2399
        %v2401 = vrot.slane %v2400, 1
        %v2402 = vadd.f32 %v2400, %v2401
        %v2403 = vsel %vm1953, %v2263, 0.0
        %v2404 = vsel %vm1953, %v2265, 0.0
        %v2405 = vadd.f32 %v2403, %v2404
        %v2406 = vrot.slane %v2405, 4
        %v2407 = vadd.f32 %v2405, %v2406
        %v2408 = vrot.slane %v2407, 2
        %v2409 = vadd.f32 %v2407, %v2408
        %v2410 = vrot.slane %v2409, 1
        %v2411 = vadd.f32 %v2409, %v2410
        %v2412 = vsel %vm1953, %v2267, 0.0
        %v2413 = vsel %vm1953, %v2269, 0.0
        %v2414 = vadd.f32 %v2412, %v2413
        %v2415 = vrot.slane %v2414, 4
        %v2416 = vadd.f32 %v2414, %v2415
        %v2417 = vrot.slane %v2416, 2
        %v2418 = vadd.f32 %v2416, %v2417
        %v2419 = vrot.slane %v2418, 1
        %v2420 = vadd.f32 %v2418, %v2419
        %v2421 = vsel %vm1953, %v2271, 0.0
        %v2422 = vsel %vm1953, %v2273, 0.0
        %v2423 = vadd.f32 %v2421, %v2422
        %v2424 = vrot.slane %v2423, 4
        %v2425 = vadd.f32 %v2423, %v2424
        %v2426 = vrot.slane %v2425, 2
        %v2427 = vadd.f32 %v2425, %v2426
        %v2428 = vrot.slane %v2427, 1
        %v2429 = vadd.f32 %v2427, %v2428
        %v2430 = vsel %vm1953, %v2275, 0.0
        %v2431 = vsel %vm1953, %v2277, 0.0
        %v2432 = vadd.f32 %v2430, %v2431
        %v2433 = vrot.slane %v2432, 4
        %v2434 = vadd.f32 %v2432, %v2433
        %v2435 = vrot.slane %v2434, 2
        %v2436 = vadd.f32 %v2434, %v2435
        %v2437 = vrot.slane %v2436, 1
        %v2438 = vadd.f32 %v2436, %v2437
        %v2439 = vsel %vm1953, %v2279, 0.0
        %v2440 = vsel %vm1953, %v2281, 0.0
        %v2441 = vadd.f32 %v2439, %v2440
        %v2442 = vrot.slane %v2441, 4
        %v2443 = vadd.f32 %v2441, %v2442
        %v2444 = vrot.slane %v2443, 2
        %v2445 = vadd.f32 %v2443, %v2444
        %v2446 = vrot.slane %v2445, 1
        %v2447 = vadd.f32 %v2445, %v2446
        %v2448 = vsel %vm1953, %v2283, 0.0
        %v2449 = vsel %vm1953, %v2285, 0.0
        %v2450 = vadd.f32 %v2448, %v2449
        %v2451 = vrot.slane %v2450, 4
        %v2452 = vadd.f32 %v2450, %v2451
        %v2453 = vrot.slane %v2452, 2
        %v2454 = vadd.f32 %v2452, %v2453
        %v2455 = vrot.slane %v2454, 1
        %v2456 = vadd.f32 %v2454, %v2455
        %v2457 = vsel %vm1953, %v2287, 0.0
        %v2458 = vsel %vm1953, %v2289, 0.0
        %v2459 = vadd.f32 %v2457, %v2458
        %v2460 = vrot.slane %v2459, 4
        %v2461 = vadd.f32 %v2459, %v2460
        %v2462 = vrot.slane %v2461, 2
        %v2463 = vadd.f32 %v2461, %v2462
        %v2464 = vrot.slane %v2463, 1
        %v2465 = vadd.f32 %v2463, %v2464
        %v2466 = vsel %vm1953, %v2291, 0.0
        %v2467 = vsel %vm1953, %v2293, 0.0
        %v2468 = vadd.f32 %v2466, %v2467
        %v2469 = vrot.slane %v2468, 4
        %v2470 = vadd.f32 %v2468, %v2469
        %v2471 = vrot.slane %v2470, 2
        %v2472 = vadd.f32 %v2470, %v2471
        %v2473 = vrot.slane %v2472, 1
        %v2474 = vadd.f32 %v2472, %v2473
        %v2475 = vsel %vm1953, %v2295, 0.0
        %v2476 = vsel %vm1953, %v2297, 0.0
        %v2477 = vadd.f32 %v2475, %v2476
        %v2478 = vrot.slane %v2477, 4
        %v2479 = vadd.f32 %v2477, %v2478
        %v2480 = vrot.slane %v2479, 2
        %v2481 = vadd.f32 %v2479, %v2480
        %v2482 = vrot.slane %v2481, 1
        %v2483 = vadd.f32 %v2481, %v2482
        %v2484 = vsel %vm1953, %v2299, 0.0
        %v2485 = vsel %vm1953, %v2301, 0.0
        %v2486 = vadd.f32 %v2484, %v2485
        %v2487 = vrot.slane %v2486, 4
        %v2488 = vadd.f32 %v2486, %v2487
        %v2489 = vrot.slane %v2488, 2
        %v2490 = vadd.f32 %v2488, %v2489
        %v2491 = vrot.slane %v2490, 1
        %v2492 = vadd.f32 %v2490, %v2491
        %v2493 = vsel %vm1953, %v2303, 0.0
        %v2494 = vsel %vm1953, %v2305, 0.0
        %v2495 = vadd.f32 %v2493, %v2494
        %v2496 = vrot.slane %v2495, 4
        %v2497 = vadd.f32 %v2495, %v2496
        %v2498 = vrot.slane %v2497, 2
        %v2499 = vadd.f32 %v2497, %v2498
        %v2500 = vrot.slane %v2499, 1
        %v2501 = vadd.f32 %v2499, %v2500
        %v2504 = vrot.slane %v2355, 1
        %v2505 = vrot.slane %v2355, 2
        %v2506 = vrot.slane %v2355, 3
        %v2507 = vrot.slane %v2355, 4
        %v2508 = vrot.slane %v2355, 5
        %v2509 = vrot.slane %v2355, 6
        %v2510 = vrot.slane %v2355, 7
        %v2511 = vrot.slane %v2357, 1
        %v2512 = vrot.slane %v2357, 2
        %v2513 = vrot.slane %v2357, 3
        %v2514 = vrot.slane %v2357, 4
        %v2515 = vrot.slane %v2357, 5
        %v2516 = vrot.slane %v2357, 6
        %v2517 = vrot.slane %v2357, 7
        %v2534 = vadd.f32 %v2366, %v2355
        %v2535 = vadd.f32 %v2375, %v2504
        %v2536 = vadd.f32 %v2384, %v2505
        %v2537 = vadd.f32 %v2393, %v2506
        %v2538 = vadd.f32 %v2402, %v2507
        %v2539 = vadd.f32 %v2411, %v2508
        %v2540 = vadd.f32 %v2420, %v2509
        %v2541 = vadd.f32 %v2429, %v2510
        %v2542 = vadd.f32 %v2438, %v2357
        %v2543 = vadd.f32 %v2447, %v2511
        %v2544 = vadd.f32 %v2456, %v2512
        %v2545 = vadd.f32 %v2465, %v2513
        %v2546 = vadd.f32 %v2474, %v2514
        %v2547 = vadd.f32 %v2483, %v2515
        %v2548 = vadd.f32 %v2492, %v2516
        %v2549 = vadd.f32 %v2501, %v2517
        %v2550 = vrcp.pop %v2534
        %v2551 = vrcp.pop %v2535
        %v2552 = vrcp.pop %v2536
        %v2553 = vrcp.pop %v2537
        %v2554 = vrcp.pop %v2538
        %v2555 = vrcp.pop %v2539
        %v2556 = vrcp.pop %v2540
        %v2557 = vrcp.pop %v2541
        %v2558 = vrcp.pop %v2542
        %v2559 = vrcp.pop %v2543
        %v2560 = vrcp.pop %v2544
        %v2561 = vrcp.pop %v2545
        %v2562 = vrcp.pop %v2546
        %v2563 = vrcp.pop %v2547
        %v2564 = vrcp.pop %v2548
        %v2565 = vrcp.pop %v2549
        %v2566 = vlaneseq
        %v2567 = vshrl.u32 %v2566, 7
        %v2568 = vsub.s32 0, %v2567
        %v2569 = vrot.slane %v2550, %v2568
        %v2570 = vlaneseq
        %v2571 = vshrl.u32 %v2570, 7
        %v2572 = vsub.s32 0, %v2571
        %v2573 = vrot.slane %v2551, %v2572
        %v2574 = vlaneseq
        %v2575 = vshrl.u32 %v2574, 7
        %v2576 = vsub.s32 0, %v2575
        %v2577 = vrot.slane %v2552, %v2576
        %v2578 = vlaneseq
        %v2579 = vshrl.u32 %v2578, 7
        %v2580 = vsub.s32 0, %v2579
        %v2581 = vrot.slane %v2553, %v2580
        %v2582 = vlaneseq
        %v2583 = vshrl.u32 %v2582, 7
        %v2584 = vsub.s32 0, %v2583
        %v2585 = vrot.slane %v2554, %v2584
        %v2586 = vlaneseq
        %v2587 = vshrl.u32 %v2586, 7
        %v2588 = vsub.s32 0, %v2587
        %v2589 = vrot.slane %v2555, %v2588
        %v2590 = vlaneseq
        %v2591 = vshrl.u32 %v2590, 7
        %v2592 = vsub.s32 0, %v2591
        %v2593 = vrot.slane %v2556, %v2592
        %v2594 = vlaneseq
        %v2595 = vshrl.u32 %v2594, 7
        %v2596 = vsub.s32 0, %v2595
        %v2597 = vrot.slane %v2557, %v2596
        %v2598 = vlaneseq
        %v2599 = vshrl.u32 %v2598, 7
        %v2600 = vsub.s32 0, %v2599
        %v2601 = vrot.slane %v2558, %v2600
        %v2602 = vlaneseq
        %v2603 = vshrl.u32 %v2602, 7
        %v2604 = vsub.s32 0, %v2603
        %v2605 = vrot.slane %v2559, %v2604
        %v2606 = vlaneseq
        %v2607 = vshrl.u32 %v2606, 7
        %v2608 = vsub.s32 0, %v2607
        %v2609 = vrot.slane %v2560, %v2608
        %v2610 = vlaneseq
        %v2611 = vshrl.u32 %v2610, 7
        %v2612 = vsub.s32 0, %v2611
        %v2613 = vrot.slane %v2561, %v2612
        %v2614 = vlaneseq
        %v2615 = vshrl.u32 %v2614, 7
        %v2616 = vsub.s32 0, %v2615
        %v2617 = vrot.slane %v2562, %v2616
        %v2618 = vlaneseq
        %v2619 = vshrl.u32 %v2618, 7
        %v2620 = vsub.s32 0, %v2619
        %v2621 = vrot.slane %v2563, %v2620
        %v2622 = vlaneseq
        %v2623 = vshrl.u32 %v2622, 7
        %v2624 = vsub.s32 0, %v2623
        %v2625 = vrot.slane %v2564, %v2624
        %v2626 = vlaneseq
        %v2627 = vshrl.u32 %v2626, 7
        %v2628 = vsub.s32 0, %v2627
        %v2629 = vrot.slane %v2565, %v2628
        %v2630 = vmul.f32 %v2243, %v2569
        %v2631 = vmul.f32 %v2245, %v2569
        %v2632 = vmul.f32 %v2247, %v2573
        %v2633 = vmul.f32 %v2249, %v2573
        %v2634 = vmul.f32 %v2251, %v2577
        %v2635 = vmul.f32 %v2253, %v2577
        %v2636 = vmul.f32 %v2255, %v2581
        %v2637 = vmul.f32 %v2257, %v2581
        %v2638 = vmul.f32 %v2259, %v2585
        %v2639 = vmul.f32 %v2261, %v2585
        %v2640 = vmul.f32 %v2263, %v2589
        %v2641 = vmul.f32 %v2265, %v2589
        %v2642 = vmul.f32 %v2267, %v2593
        %v2643 = vmul.f32 %v2269, %v2593
        %v2644 = vmul.f32 %v2271, %v2597
        %v2645 = vmul.f32 %v2273, %v2597
        %v2646 = vmul.f32 %v2275, %v2601
        %v2647 = vmul.f32 %v2277, %v2601
        %v2648 = vmul.f32 %v2279, %v2605
        %v2649 = vmul.f32 %v2281, %v2605
        %v2650 = vmul.f32 %v2283, %v2609
        %v2651 = vmul.f32 %v2285, %v2609
        %v2652 = vmul.f32 %v2287, %v2613
        %v2653 = vmul.f32 %v2289, %v2613
        %v2654 = vmul.f32 %v2291, %v2617
        %v2655 = vmul.f32 %v2293, %v2617
        %v2656 = vmul.f32 %v2295, %v2621
        %v2657 = vmul.f32 %v2297, %v2621
        %v2658 = vmul.f32 %v2299, %v2625
        %v2659 = vmul.f32 %v2301, %v2625
        %v2660 = vmul.f32 %v2303, %v2629
        %v2661 = vmul.f32 %v2305, %v2629
        %v2678 = vrot.slane %v2551, 7
        %v2679 = vsel %vm810, %v2678, %v2550
        %v2680 = vrot.slane %v2552, 6
        %v2681 = vsel %vm813, %v2680, %v2679
        %v2682 = vrot.slane %v2553, 5
        %v2683 = vsel %vm816, %v2682, %v2681
        %v2684 = vrot.slane %v2554, 4
        %v2685 = vsel %vm819, %v2684, %v2683
        %v2686 = vrot.slane %v2555, 3
        %v2687 = vsel %vm822, %v2686, %v2685
        %v2688 = vrot.slane %v2556, 2
        %v2689 = vsel %vm825, %v2688, %v2687
        %v2690 = vrot.slane %v2557, 1
        %v2691 = vsel %vm828, %v2690, %v2689
        %v2692 = vrot.slane %v2559, 7
        %v2693 = vsel %vm810, %v2692, %v2558
        %v2694 = vrot.slane %v2560, 6
        %v2695 = vsel %vm813, %v2694, %v2693
        %v2696 = vrot.slane %v2561, 5
        %v2697 = vsel %vm816, %v2696, %v2695
        %v2698 = vrot.slane %v2562, 4
        %v2699 = vsel %vm819, %v2698, %v2697
        %v2700 = vrot.slane %v2563, 3
        %v2701 = vsel %vm822, %v2700, %v2699
        %v2702 = vrot.slane %v2564, 2
        %v2703 = vsel %vm825, %v2702, %v2701
        %v2704 = vrot.slane %v2565, 1
        %v2705 = vsel %vm828, %v2704, %v2703
        %v2708 = vmul.f32 %v2355, %v2691
        %v2709 = vmul.f32 %v2357, %v2705
        %v2710 = vld [vmem:[%s9] sm:$0xff]
        %v2711 = vld [vmem:[%s9 + $0x8] sm:$0xff]
        %v2712 = vld [vmem:[%s9 + $0x10] sm:$0xff]
        %v2713 = vld [vmem:[%s9 + $0x18] sm:$0xff]
        %v2714 = vld [vmem:[%s10] sm:$0x1]
        %v2716 = vlaneseq
        %v2717 = vshrl.u32 %v2716, 7
        %v2718 = vsub.s32 0, %v2717
        %v2719 = vrot.slane %v2714, %v2718
        %2721 = vmatprep.subr.mxu0 0.0
        %2722 = vmatpush1.msra.mxu0 %v2710
        %2723 = vmatprep.subr.mxu0 0.0
        %2724 = vmatpush1.msra.mxu0 %v2711
        %2725 = vmatprep.subr.mxu0 0.0
        %2726 = vmatpush1.msra.mxu0 %v2712
        %2727 = vmatprep.subr.mxu0 0.0
        %2728 = vmatpush1.msra.mxu0 %v2713
        %2729 = vmatprep.subr.mxu0 0.0
        %2730 = vmatpush1.msra.mxu0 0.0
        %2731 = vmatprep.subr.mxu0 0.0
        %2732 = vmatpush1.msra.mxu0 0.0
        %2733 = vmatprep.subr.mxu0 0.0
        %2734 = vmatpush1.msra.mxu0 0.0
        %2735 = vmatprep.subr.mxu0 0.0
        %2736 = vmatpush1.msra.mxu0 0.0
        %2737 = vmatprep.subr.mxu0 0.0
        %2738 = vmatpush1.msra.mxu0 0.0
        %2739 = vmatprep.subr.mxu0 0.0
        %2740 = vmatpush1.msra.mxu0 0.0
        %2741 = vmatprep.subr.mxu0 0.0
        %2742 = vmatpush1.msra.mxu0 0.0
        %2743 = vmatprep.subr.mxu0 0.0
        %2744 = vmatpush1.msra.mxu0 0.0
        %2745 = vmatprep.subr.mxu0 0.0
        %2746 = vmatpush1.msra.mxu0 0.0
        %2747 = vmatprep.subr.mxu0 0.0
        %2748 = vmatpush1.msra.mxu0 0.0
        %2749 = vmatprep.subr.mxu0 0.0
        %2750 = vmatpush1.msra.mxu0 0.0
        %2751 = vmatprep.subr.mxu0 0.0
        %2752 = vmatpush1.msra.mxu0 0.0
        %2753 = vmatprep.subr.mxu0 0.0
        %2754 = vmatpush1.msra.mxu0 0.0
        %2755 = vmatprep.subr.mxu0 0.0
        %2756 = vmatpush1.msra.mxu0 0.0
        %2757 = vmatprep.subr.mxu0 0.0
        %2758 = vmatpush1.msra.mxu0 0.0
        %2759 = vmatprep.subr.mxu0 0.0
        %2760 = vmatpush1.msra.mxu0 0.0
        %2761 = vmatprep.subr.mxu0 0.0
        %2762 = vmatpush1.msra.mxu0 0.0
        %2763 = vmatprep.subr.mxu0 0.0
        %2764 = vmatpush1.msra.mxu0 0.0
        %2765 = vmatprep.subr.mxu0 0.0
        %2766 = vmatpush1.msra.mxu0 0.0
        %2767 = vmatprep.subr.mxu0 0.0
        %2768 = vmatpush1.msra.mxu0 0.0
        %2769 = vmatprep.subr.mxu0 0.0
        %2770 = vmatpush1.msra.mxu0 0.0
        %2771 = vmatprep.subr.mxu0 0.0
        %2772 = vmatpush1.msra.mxu0 0.0
        %2773 = vmatprep.subr.mxu0 0.0
        %2774 = vmatpush1.msra.mxu0 0.0
        %2775 = vmatprep.subr.mxu0 0.0
        %2776 = vmatpush1.msra.mxu0 0.0
        %2777 = vmatprep.subr.mxu0 0.0
        %2778 = vmatpush1.msra.mxu0 0.0
        %2779 = vmatprep.subr.mxu0 0.0
        %2780 = vmatpush1.msra.mxu0 0.0
        %2781 = vmatprep.subr.mxu0 0.0
        %2782 = vmatpush1.msra.mxu0 0.0
        %2783 = vmatprep.subr.mxu0 0.0
        %2784 = vmatpush1.msra.mxu0 0.0
        %2785 = vmatprep.mubr.f32.mxu0 0.0
        %2786 = vmatmul.mubr.f32.gmra.mrb[0].mxu0 %v844
        %v2787 = vpop.f32.mrb[0].mxu0
        %v2788 = vadd.f32 %v2719, %v2787
        %v2789 = vpop.f32.mrb[0].mxu0
        %2790 = vmatprep.mubr.f32.mxu0 0.0
        %2791 = vmatmul.mubr.f32.gmra.mrb[0].mxu0 %v846
        %v2792 = vpop.f32.mrb[0].mxu0
        %v2793 = vadd.f32 %v2719, %v2792
        %v2794 = vpop.f32.mrb[0].mxu0
        %2795 = vdwg.mxu0
        %2796 = vmatprep.subr.mxu0 0.0
        %2797 = vmatpush1.msra.mxu0 %v2710
        %2798 = vmatprep.subr.mxu0 0.0
        %2799 = vmatpush1.msra.mxu0 %v2711
        %2800 = vmatprep.subr.mxu0 0.0
        %2801 = vmatpush1.msra.mxu0 %v2712
        %2802 = vmatprep.subr.mxu0 0.0
        %2803 = vmatpush1.msra.mxu0 %v2713
        %2804 = vmatprep.subr.mxu0 0.0
        %2805 = vmatpush1.msra.mxu0 0.0
        %2806 = vmatprep.subr.mxu0 0.0
        %2807 = vmatpush1.msra.mxu0 0.0
        %2808 = vmatprep.subr.mxu0 0.0
        %2809 = vmatpush1.msra.mxu0 0.0
        %2810 = vmatprep.subr.mxu0 0.0
        %2811 = vmatpush1.msra.mxu0 0.0
        %2812 = vmatprep.subr.mxu0 0.0
        %2813 = vmatpush1.msra.mxu0 0.0
        %2814 = vmatprep.subr.mxu0 0.0
        %2815 = vmatpush1.msra.mxu0 0.0
        %2816 = vmatprep.subr.mxu0 0.0
        %2817 = vmatpush1.msra.mxu0 0.0
        %2818 = vmatprep.subr.mxu0 0.0
        %2819 = vmatpush1.msra.mxu0 0.0
        %2820 = vmatprep.subr.mxu0 0.0
        %2821 = vmatpush1.msra.mxu0 0.0
        %2822 = vmatprep.subr.mxu0 0.0
        %2823 = vmatpush1.msra.mxu0 0.0
        %2824 = vmatprep.subr.mxu0 0.0
        %2825 = vmatpush1.msra.mxu0 0.0
        %2826 = vmatprep.subr.mxu0 0.0
        %2827 = vmatpush1.msra.mxu0 0.0
        %2828 = vmatprep.subr.mxu0 0.0
        %2829 = vmatpush1.msra.mxu0 0.0
        %2830 = vmatprep.subr.mxu0 0.0
        %2831 = vmatpush1.msra.mxu0 0.0
        %2832 = vmatprep.subr.mxu0 0.0
        %2833 = vmatpush1.msra.mxu0 0.0
        %2834 = vmatprep.subr.mxu0 0.0
        %2835 = vmatpush1.msra.mxu0 0.0
        %2836 = vmatprep.subr.mxu0 0.0
        %2837 = vmatpush1.msra.mxu0 0.0
        %2838 = vmatprep.subr.mxu0 0.0
        %2839 = vmatpush1.msra.mxu0 0.0
        %2840 = vmatprep.subr.mxu0 0.0
        %2841 = vmatpush1.msra.mxu0 0.0
        %2842 = vmatprep.subr.mxu0 0.0
        %2843 = vmatpush1.msra.mxu0 0.0
        %2844 = vmatprep.subr.mxu0 0.0
        %2845 = vmatpush1.msra.mxu0 0.0
        %2846 = vmatprep.subr.mxu0 0.0
        %2847 = vmatpush1.msra.mxu0 0.0
        %2848 = vmatprep.subr.mxu0 0.0
        %2849 = vmatpush1.msra.mxu0 0.0
        %2850 = vmatprep.subr.mxu0 0.0
        %2851 = vmatpush1.msra.mxu0 0.0
        %2852 = vmatprep.subr.mxu0 0.0
        %2853 = vmatpush1.msra.mxu0 0.0
        %2854 = vmatprep.subr.mxu0 0.0
        %2855 = vmatpush1.msra.mxu0 0.0
        %2856 = vmatprep.subr.mxu0 0.0
        %2857 = vmatpush1.msra.mxu0 0.0
        %2858 = vmatprep.subr.mxu0 0.0
        %2859 = vmatpush1.msra.mxu0 0.0
        %2860 = vmatprep.mubr.f32.mxu0 0.0
        %2861 = vmatmul.mubr.f32.gmra.mrb[0].mxu0 %v1012
        %v2862 = vpop.f32.mrb[0].mxu0
        %v2863 = vadd.f32 %v2719, %v2862
        %v2864 = vpop.f32.mrb[0].mxu0
        %2865 = vmatprep.mubr.f32.mxu0 0.0
        %2866 = vmatmul.mubr.f32.gmra.mrb[0].mxu0 %v1015
        %v2867 = vpop.f32.mrb[0].mxu0
        %v2868 = vadd.f32 %v2719, %v2867
        %v2869 = vpop.f32.mrb[0].mxu0
        %2870 = vmatprep.mubr.f32.mxu0 0.0
        %2871 = vmatmul.mubr.f32.gmra.mrb[0].mxu0 %v1018
        %v2872 = vpop.f32.mrb[0].mxu0
        %v2873 = vadd.f32 %v2719, %v2872
        %v2874 = vpop.f32.mrb[0].mxu0
        %2875 = vmatprep.mubr.f32.mxu0 0.0
        %2876 = vmatmul.mubr.f32.gmra.mrb[0].mxu0 %v1021
        %v2877 = vpop.f32.mrb[0].mxu0
        %v2878 = vadd.f32 %v2719, %v2877
        %v2879 = vpop.f32.mrb[0].mxu0
        %2880 = vmatprep.mubr.f32.mxu0 0.0
        %2881 = vmatmul.mubr.f32.gmra.mrb[0].mxu0 %v1024
        %v2882 = vpop.f32.mrb[0].mxu0
        %v2883 = vadd.f32 %v2719, %v2882
        %v2884 = vpop.f32.mrb[0].mxu0
        %2885 = vmatprep.mubr.f32.mxu0 0.0
        %2886 = vmatmul.mubr.f32.gmra.mrb[0].mxu0 %v1027
        %v2887 = vpop.f32.mrb[0].mxu0
        %v2888 = vadd.f32 %v2719, %v2887
        %v2889 = vpop.f32.mrb[0].mxu0
        %2890 = vmatprep.mubr.f32.mxu0 0.0
        %2891 = vmatmul.mubr.f32.gmra.mrb[0].mxu0 %v1030
        %v2892 = vpop.f32.mrb[0].mxu0
        %v2893 = vadd.f32 %v2719, %v2892
        %v2894 = vpop.f32.mrb[0].mxu0
        %2895 = vmatprep.mubr.f32.mxu0 0.0
        %2896 = vmatmul.mubr.f32.gmra.mrb[0].mxu0 %v1033
        %v2897 = vpop.f32.mrb[0].mxu0
        %v2898 = vadd.f32 %v2719, %v2897
        %v2899 = vpop.f32.mrb[0].mxu0
        %2900 = vmatprep.mubr.f32.mxu0 0.0
        %2901 = vmatmul.mubr.f32.gmra.mrb[0].mxu0 %v1036
        %v2902 = vpop.f32.mrb[0].mxu0
        %v2903 = vadd.f32 %v2719, %v2902
        %v2904 = vpop.f32.mrb[0].mxu0
        %2905 = vmatprep.mubr.f32.mxu0 0.0
        %2906 = vmatmul.mubr.f32.gmra.mrb[0].mxu0 %v1039
        %v2907 = vpop.f32.mrb[0].mxu0
        %v2908 = vadd.f32 %v2719, %v2907
        %v2909 = vpop.f32.mrb[0].mxu0
        %2910 = vmatprep.mubr.f32.mxu0 0.0
        %2911 = vmatmul.mubr.f32.gmra.mrb[0].mxu0 %v1042
        %v2912 = vpop.f32.mrb[0].mxu0
        %v2913 = vadd.f32 %v2719, %v2912
        %v2914 = vpop.f32.mrb[0].mxu0
        %2915 = vmatprep.mubr.f32.mxu0 0.0
        %2916 = vmatmul.mubr.f32.gmra.mrb[0].mxu0 %v1045
        %v2917 = vpop.f32.mrb[0].mxu0
        %v2918 = vadd.f32 %v2719, %v2917
        %v2919 = vpop.f32.mrb[0].mxu0
        %2920 = vmatprep.mubr.f32.mxu0 0.0
        %2921 = vmatmul.mubr.f32.gmra.mrb[0].mxu0 %v1048
        %v2922 = vpop.f32.mrb[0].mxu0
        %v2923 = vadd.f32 %v2719, %v2922
        %v2924 = vpop.f32.mrb[0].mxu0
        %2925 = vmatprep.mubr.f32.mxu0 0.0
        %2926 = vmatmul.mubr.f32.gmra.mrb[0].mxu0 %v1051
        %v2927 = vpop.f32.mrb[0].mxu0
        %v2928 = vadd.f32 %v2719, %v2927
        %v2929 = vpop.f32.mrb[0].mxu0
        %2930 = vmatprep.mubr.f32.mxu0 0.0
        %2931 = vmatmul.mubr.f32.gmra.mrb[0].mxu0 %v1054
        %v2932 = vpop.f32.mrb[0].mxu0
        %v2933 = vadd.f32 %v2719, %v2932
        %v2934 = vpop.f32.mrb[0].mxu0
        %2935 = vmatprep.mubr.f32.mxu0 0.0
        %2936 = vmatmul.mubr.f32.gmra.mrb[0].mxu0 %v1057
        %v2937 = vpop.f32.mrb[0].mxu0
        %v2938 = vadd.f32 %v2719, %v2937
        %v2939 = vpop.f32.mrb[0].mxu0
        %2940 = vmatprep.mubr.f32.mxu0 0.0
        %2941 = vmatmul.mubr.f32.gmra.mrb[0].mxu0 %v1060
        %v2942 = vpop.f32.mrb[0].mxu0
        %v2943 = vadd.f32 %v2719, %v2942
        %v2944 = vpop.f32.mrb[0].mxu0
        %2945 = vmatprep.mubr.f32.mxu0 0.0
        %2946 = vmatmul.mubr.f32.gmra.mrb[0].mxu0 %v1063
        %v2947 = vpop.f32.mrb[0].mxu0
        %v2948 = vadd.f32 %v2719, %v2947
        %v2949 = vpop.f32.mrb[0].mxu0
        %2950 = vmatprep.mubr.f32.mxu0 0.0
        %2951 = vmatmul.mubr.f32.gmra.mrb[0].mxu0 %v1066
        %v2952 = vpop.f32.mrb[0].mxu0
        %v2953 = vadd.f32 %v2719, %v2952
        %v2954 = vpop.f32.mrb[0].mxu0
        %2955 = vmatprep.mubr.f32.mxu0 0.0
        %2956 = vmatmul.mubr.f32.gmra.mrb[0].mxu0 %v1069
        %v2957 = vpop.f32.mrb[0].mxu0
        %v2958 = vadd.f32 %v2719, %v2957
        %v2959 = vpop.f32.mrb[0].mxu0
        %2960 = vmatprep.mubr.f32.mxu0 0.0
        %2961 = vmatmul.mubr.f32.gmra.mrb[0].mxu0 %v1072
        %v2962 = vpop.f32.mrb[0].mxu0
        %v2963 = vadd.f32 %v2719, %v2962
        %v2964 = vpop.f32.mrb[0].mxu0
        %2965 = vmatprep.mubr.f32.mxu0 0.0
        %2966 = vmatmul.mubr.f32.gmra.mrb[0].mxu0 %v1075
        %v2967 = vpop.f32.mrb[0].mxu0
        %v2968 = vadd.f32 %v2719, %v2967
        %v2969 = vpop.f32.mrb[0].mxu0
        %2970 = vmatprep.mubr.f32.mxu0 0.0
        %2971 = vmatmul.mubr.f32.gmra.mrb[0].mxu0 %v1078
        %v2972 = vpop.f32.mrb[0].mxu0
        %v2973 = vadd.f32 %v2719, %v2972
        %v2974 = vpop.f32.mrb[0].mxu0
        %2975 = vmatprep.mubr.f32.mxu0 0.0
        %2976 = vmatmul.mubr.f32.gmra.mrb[0].mxu0 %v1081
        %v2977 = vpop.f32.mrb[0].mxu0
        %v2978 = vadd.f32 %v2719, %v2977
        %v2979 = vpop.f32.mrb[0].mxu0
        %2980 = vmatprep.mubr.f32.mxu0 0.0
        %2981 = vmatmul.mubr.f32.gmra.mrb[0].mxu0 %v1084
        %v2982 = vpop.f32.mrb[0].mxu0
        %v2983 = vadd.f32 %v2719, %v2982
        %v2984 = vpop.f32.mrb[0].mxu0
        %2985 = vmatprep.mubr.f32.mxu0 0.0
        %2986 = vmatmul.mubr.f32.gmra.mrb[0].mxu0 %v1087
        %v2987 = vpop.f32.mrb[0].mxu0
        %v2988 = vadd.f32 %v2719, %v2987
        %v2989 = vpop.f32.mrb[0].mxu0
        %2990 = vmatprep.mubr.f32.mxu0 0.0
        %2991 = vmatmul.mubr.f32.gmra.mrb[0].mxu0 %v1090
        %v2992 = vpop.f32.mrb[0].mxu0
        %v2993 = vadd.f32 %v2719, %v2992
        %v2994 = vpop.f32.mrb[0].mxu0
        %2995 = vmatprep.mubr.f32.mxu0 0.0
        %2996 = vmatmul.mubr.f32.gmra.mrb[0].mxu0 %v1093
        %v2997 = vpop.f32.mrb[0].mxu0
        %v2998 = vadd.f32 %v2719, %v2997
        %v2999 = vpop.f32.mrb[0].mxu0
        %3000 = vmatprep.mubr.f32.mxu0 0.0
        %3001 = vmatmul.mubr.f32.gmra.mrb[0].mxu0 %v1096
        %v3002 = vpop.f32.mrb[0].mxu0
        %v3003 = vadd.f32 %v2719, %v3002
        %v3004 = vpop.f32.mrb[0].mxu0
        %3005 = vmatprep.mubr.f32.mxu0 0.0
        %3006 = vmatmul.mubr.f32.gmra.mrb[0].mxu0 %v1099
        %v3007 = vpop.f32.mrb[0].mxu0
        %v3008 = vadd.f32 %v2719, %v3007
        %v3009 = vpop.f32.mrb[0].mxu0
        %3010 = vmatprep.mubr.f32.mxu0 0.0
        %3011 = vmatmul.mubr.f32.gmra.mrb[0].mxu0 %v1102
        %v3012 = vpop.f32.mrb[0].mxu0
        %v3013 = vadd.f32 %v2719, %v3012
        %v3014 = vpop.f32.mrb[0].mxu0
        %3015 = vmatprep.mubr.f32.mxu0 0.0
        %3016 = vmatmul.mubr.f32.gmra.mrb[0].mxu0 %v1105
        %v3017 = vpop.f32.mrb[0].mxu0
        %v3018 = vadd.f32 %v2719, %v3017
        %v3019 = vpop.f32.mrb[0].mxu0
        %3020 = vdwg.mxu0
        %v3022 = vsel %vm1953, %v2630, 0
        %v3025 = vsel %vm1953, %v2631, 0
        %v3028 = vsel %vm1953, %v2632, 0
        %v3031 = vsel %vm1953, %v2633, 0
        %v3034 = vsel %vm1953, %v2634, 0
        %v3037 = vsel %vm1953, %v2635, 0
        %v3040 = vsel %vm1953, %v2636, 0
        %v3043 = vsel %vm1953, %v2637, 0
        %v3046 = vsel %vm1953, %v2638, 0
        %v3049 = vsel %vm1953, %v2639, 0
        %v3052 = vsel %vm1953, %v2640, 0
        %v3055 = vsel %vm1953, %v2641, 0
        %v3058 = vsel %vm1953, %v2642, 0
        %v3061 = vsel %vm1953, %v2643, 0
        %v3064 = vsel %vm1953, %v2644, 0
        %v3067 = vsel %vm1953, %v2645, 0
        %v3070 = vsel %vm1953, %v2646, 0
        %v3073 = vsel %vm1953, %v2647, 0
        %v3076 = vsel %vm1953, %v2648, 0
        %v3079 = vsel %vm1953, %v2649, 0
        %v3082 = vsel %vm1953, %v2650, 0
        %v3085 = vsel %vm1953, %v2651, 0
        %v3088 = vsel %vm1953, %v2652, 0
        %v3091 = vsel %vm1953, %v2653, 0
        %v3094 = vsel %vm1953, %v2654, 0
        %v3097 = vsel %vm1953, %v2655, 0
        %v3100 = vsel %vm1953, %v2656, 0
        %v3103 = vsel %vm1953, %v2657, 0
        %v3106 = vsel %vm1953, %v2658, 0
        %v3109 = vsel %vm1953, %v2659, 0
        %v3112 = vsel %vm1953, %v2660, 0
        %v3115 = vsel %vm1953, %v2661, 0
        %vm3117 = vcmask 1043456
        %v3119 = vsel %vm3117, %v1336, 0
        %3121 = vmatprep.subr.mxu0 0.0
        %3122 = vmatpush1.msra.mxu0 %v3119
        %3123 = vmatprep.subr.mxu0 0.0
        %3124 = vmatpush1.msra.mxu0 0.0
        %3125 = vmatprep.subr.mxu0 0.0
        %3126 = vmatpush1.msra.mxu0 0.0
        %3127 = vmatprep.subr.mxu0 0.0
        %3128 = vmatpush1.msra.mxu0 0.0
        %3129 = vmatprep.subr.mxu0 0.0
        %3130 = vmatpush1.msra.mxu0 0.0
        %3131 = vmatprep.subr.mxu0 0.0
        %3132 = vmatpush1.msra.mxu0 0.0
        %3133 = vmatprep.subr.mxu0 0.0
        %3134 = vmatpush1.msra.mxu0 0.0
        %3135 = vmatprep.subr.mxu0 0.0
        %3136 = vmatpush1.msra.mxu0 0.0
        %3137 = vmatprep.subr.mxu0 0.0
        %3138 = vmatpush1.msra.mxu0 0.0
        %3139 = vmatprep.subr.mxu0 0.0
        %3140 = vmatpush1.msra.mxu0 0.0
        %3141 = vmatprep.subr.mxu0 0.0
        %3142 = vmatpush1.msra.mxu0 0.0
        %3143 = vmatprep.subr.mxu0 0.0
        %3144 = vmatpush1.msra.mxu0 0.0
        %3145 = vmatprep.subr.mxu0 0.0
        %3146 = vmatpush1.msra.mxu0 0.0
        %3147 = vmatprep.subr.mxu0 0.0
        %3148 = vmatpush1.msra.mxu0 0.0
        %3149 = vmatprep.subr.mxu0 0.0
        %3150 = vmatpush1.msra.mxu0 0.0
        %3151 = vmatprep.subr.mxu0 0.0
        %3152 = vmatpush1.msra.mxu0 0.0
        %3153 = vmatprep.subr.mxu0 0.0
        %3154 = vmatpush1.msra.mxu0 0.0
        %3155 = vmatprep.subr.mxu0 0.0
        %3156 = vmatpush1.msra.mxu0 0.0
        %3157 = vmatprep.subr.mxu0 0.0
        %3158 = vmatpush1.msra.mxu0 0.0
        %3159 = vmatprep.subr.mxu0 0.0
        %3160 = vmatpush1.msra.mxu0 0.0
        %3161 = vmatprep.subr.mxu0 0.0
        %3162 = vmatpush1.msra.mxu0 0.0
        %3163 = vmatprep.subr.mxu0 0.0
        %3164 = vmatpush1.msra.mxu0 0.0
        %3165 = vmatprep.subr.mxu0 0.0
        %3166 = vmatpush1.msra.mxu0 0.0
        %3167 = vmatprep.subr.mxu0 0.0
        %3168 = vmatpush1.msra.mxu0 0.0
        %3169 = vmatprep.subr.mxu0 0.0
        %3170 = vmatpush1.msra.mxu0 0.0
        %3171 = vmatprep.subr.mxu0 0.0
        %3172 = vmatpush1.msra.mxu0 0.0
        %3173 = vmatprep.subr.mxu0 0.0
        %3174 = vmatpush1.msra.mxu0 0.0
        %3175 = vmatprep.subr.mxu0 0.0
        %3176 = vmatpush1.msra.mxu0 0.0
        %3177 = vmatprep.subr.mxu0 0.0
        %3178 = vmatpush1.msra.mxu0 0.0
        %3179 = vmatprep.subr.mxu0 0.0
        %3180 = vmatpush1.msra.mxu0 0.0
        %3181 = vmatprep.subr.mxu0 0.0
        %3182 = vmatpush1.msra.mxu0 0.0
        %3183 = vmatprep.subr.mxu0 0.0
        %3184 = vmatpush1.msra.mxu0 0.0
        %3185 = vmatprep.mubr.f32.mxu0 0.0
        %3186 = vmatmul.mubr.f32.gmra.mrb[0].mxu0 %v3022
        %v3187 = vpop.f32.mrb[0].mxu0
        %v3188 = vadd.f32 0.0, %v3187
        %v3189 = vpop.f32.mrb[0].mxu0
        %3190 = vmatprep.mubr.f32.mxu0 0.0
        %3191 = vmatmul.mubr.f32.gmra.mrb[0].mxu0 %v3025
        %v3192 = vpop.f32.mrb[0].mxu0
        %v3193 = vadd.f32 0.0, %v3192
        %v3194 = vpop.f32.mrb[0].mxu0
        %3195 = vmatprep.mubr.f32.mxu0 0.0
        %3196 = vmatmul.mubr.f32.gmra.mrb[0].mxu0 %v3028
        %v3197 = vpop.f32.mrb[0].mxu0
        %v3198 = vadd.f32 0.0, %v3197
        %v3199 = vpop.f32.mrb[0].mxu0
        %3200 = vmatprep.mubr.f32.mxu0 0.0
        %3201 = vmatmul.mubr.f32.gmra.mrb[0].mxu0 %v3031
        %v3202 = vpop.f32.mrb[0].mxu0
        %v3203 = vadd.f32 0.0, %v3202
        %v3204 = vpop.f32.mrb[0].mxu0
        %3205 = vmatprep.mubr.f32.mxu0 0.0
        %3206 = vmatmul.mubr.f32.gmra.mrb[0].mxu0 %v3034
        %v3207 = vpop.f32.mrb[0].mxu0
        %v3208 = vadd.f32 0.0, %v3207
        %v3209 = vpop.f32.mrb[0].mxu0
        %3210 = vmatprep.mubr.f32.mxu0 0.0
        %3211 = vmatmul.mubr.f32.gmra.mrb[0].mxu0 %v3037
        %v3212 = vpop.f32.mrb[0].mxu0
        %v3213 = vadd.f32 0.0, %v3212
        %v3214 = vpop.f32.mrb[0].mxu0
        %3215 = vmatprep.mubr.f32.mxu0 0.0
        %3216 = vmatmul.mubr.f32.gmra.mrb[0].mxu0 %v3040
        %v3217 = vpop.f32.mrb[0].mxu0
        %v3218 = vadd.f32 0.0, %v3217
        %v3219 = vpop.f32.mrb[0].mxu0
        %3220 = vmatprep.mubr.f32.mxu0 0.0
        %3221 = vmatmul.mubr.f32.gmra.mrb[0].mxu0 %v3043
        %v3222 = vpop.f32.mrb[0].mxu0
        %v3223 = vadd.f32 0.0, %v3222
        %v3224 = vpop.f32.mrb[0].mxu0
        %3225 = vmatprep.mubr.f32.mxu0 0.0
        %3226 = vmatmul.mubr.f32.gmra.mrb[0].mxu0 %v3046
        %v3227 = vpop.f32.mrb[0].mxu0
        %v3228 = vadd.f32 0.0, %v3227
        %v3229 = vpop.f32.mrb[0].mxu0
        %3230 = vmatprep.mubr.f32.mxu0 0.0
        %3231 = vmatmul.mubr.f32.gmra.mrb[0].mxu0 %v3049
        %v3232 = vpop.f32.mrb[0].mxu0
        %v3233 = vadd.f32 0.0, %v3232
        %v3234 = vpop.f32.mrb[0].mxu0
        %3235 = vmatprep.mubr.f32.mxu0 0.0
        %3236 = vmatmul.mubr.f32.gmra.mrb[0].mxu0 %v3052
        %v3237 = vpop.f32.mrb[0].mxu0
        %v3238 = vadd.f32 0.0, %v3237
        %v3239 = vpop.f32.mrb[0].mxu0
        %3240 = vmatprep.mubr.f32.mxu0 0.0
        %3241 = vmatmul.mubr.f32.gmra.mrb[0].mxu0 %v3055
        %v3242 = vpop.f32.mrb[0].mxu0
        %v3243 = vadd.f32 0.0, %v3242
        %v3244 = vpop.f32.mrb[0].mxu0
        %3245 = vmatprep.mubr.f32.mxu0 0.0
        %3246 = vmatmul.mubr.f32.gmra.mrb[0].mxu0 %v3058
        %v3247 = vpop.f32.mrb[0].mxu0
        %v3248 = vadd.f32 0.0, %v3247
        %v3249 = vpop.f32.mrb[0].mxu0
        %3250 = vmatprep.mubr.f32.mxu0 0.0
        %3251 = vmatmul.mubr.f32.gmra.mrb[0].mxu0 %v3061
        %v3252 = vpop.f32.mrb[0].mxu0
        %v3253 = vadd.f32 0.0, %v3252
        %v3254 = vpop.f32.mrb[0].mxu0
        %3255 = vmatprep.mubr.f32.mxu0 0.0
        %3256 = vmatmul.mubr.f32.gmra.mrb[0].mxu0 %v3064
        %v3257 = vpop.f32.mrb[0].mxu0
        %v3258 = vadd.f32 0.0, %v3257
        %v3259 = vpop.f32.mrb[0].mxu0
        %3260 = vmatprep.mubr.f32.mxu0 0.0
        %3261 = vmatmul.mubr.f32.gmra.mrb[0].mxu0 %v3067
        %v3262 = vpop.f32.mrb[0].mxu0
        %v3263 = vadd.f32 0.0, %v3262
        %v3264 = vpop.f32.mrb[0].mxu0
        %3265 = vmatprep.mubr.f32.mxu0 0.0
        %3266 = vmatmul.mubr.f32.gmra.mrb[0].mxu0 %v3070
        %v3267 = vpop.f32.mrb[0].mxu0
        %v3268 = vadd.f32 0.0, %v3267
        %v3269 = vpop.f32.mrb[0].mxu0
        %3270 = vmatprep.mubr.f32.mxu0 0.0
        %3271 = vmatmul.mubr.f32.gmra.mrb[0].mxu0 %v3073
        %v3272 = vpop.f32.mrb[0].mxu0
        %v3273 = vadd.f32 0.0, %v3272
        %v3274 = vpop.f32.mrb[0].mxu0
        %3275 = vmatprep.mubr.f32.mxu0 0.0
        %3276 = vmatmul.mubr.f32.gmra.mrb[0].mxu0 %v3076
        %v3277 = vpop.f32.mrb[0].mxu0
        %v3278 = vadd.f32 0.0, %v3277
        %v3279 = vpop.f32.mrb[0].mxu0
        %3280 = vmatprep.mubr.f32.mxu0 0.0
        %3281 = vmatmul.mubr.f32.gmra.mrb[0].mxu0 %v3079
        %v3282 = vpop.f32.mrb[0].mxu0
        %v3283 = vadd.f32 0.0, %v3282
        %v3284 = vpop.f32.mrb[0].mxu0
        %3285 = vmatprep.mubr.f32.mxu0 0.0
        %3286 = vmatmul.mubr.f32.gmra.mrb[0].mxu0 %v3082
        %v3287 = vpop.f32.mrb[0].mxu0
        %v3288 = vadd.f32 0.0, %v3287
        %v3289 = vpop.f32.mrb[0].mxu0
        %3290 = vmatprep.mubr.f32.mxu0 0.0
        %3291 = vmatmul.mubr.f32.gmra.mrb[0].mxu0 %v3085
        %v3292 = vpop.f32.mrb[0].mxu0
        %v3293 = vadd.f32 0.0, %v3292
        %v3294 = vpop.f32.mrb[0].mxu0
        %3295 = vmatprep.mubr.f32.mxu0 0.0
        %3296 = vmatmul.mubr.f32.gmra.mrb[0].mxu0 %v3088
        %v3297 = vpop.f32.mrb[0].mxu0
        %v3298 = vadd.f32 0.0, %v3297
        %v3299 = vpop.f32.mrb[0].mxu0
        %3300 = vmatprep.mubr.f32.mxu0 0.0
        %3301 = vmatmul.mubr.f32.gmra.mrb[0].mxu0 %v3091
        %v3302 = vpop.f32.mrb[0].mxu0
        %v3303 = vadd.f32 0.0, %v3302
        %v3304 = vpop.f32.mrb[0].mxu0
        %3305 = vmatprep.mubr.f32.mxu0 0.0
        %3306 = vmatmul.mubr.f32.gmra.mrb[0].mxu0 %v3094
        %v3307 = vpop.f32.mrb[0].mxu0
        %v3308 = vadd.f32 0.0, %v3307
        %v3309 = vpop.f32.mrb[0].mxu0
        %3310 = vmatprep.mubr.f32.mxu0 0.0
        %3311 = vmatmul.mubr.f32.gmra.mrb[0].mxu0 %v3097
        %v3312 = vpop.f32.mrb[0].mxu0
        %v3313 = vadd.f32 0.0, %v3312
        %v3314 = vpop.f32.mrb[0].mxu0
        %3315 = vmatprep.mubr.f32.mxu0 0.0
        %3316 = vmatmul.mubr.f32.gmra.mrb[0].mxu0 %v3100
        %v3317 = vpop.f32.mrb[0].mxu0
        %v3318 = vadd.f32 0.0, %v3317
        %v3319 = vpop.f32.mrb[0].mxu0
        %3320 = vmatprep.mubr.f32.mxu0 0.0
        %3321 = vmatmul.mubr.f32.gmra.mrb[0].mxu0 %v3103
        %v3322 = vpop.f32.mrb[0].mxu0
        %v3323 = vadd.f32 0.0, %v3322
        %v3324 = vpop.f32.mrb[0].mxu0
        %3325 = vmatprep.mubr.f32.mxu0 0.0
        %3326 = vmatmul.mubr.f32.gmra.mrb[0].mxu0 %v3106
        %v3327 = vpop.f32.mrb[0].mxu0
        %v3328 = vadd.f32 0.0, %v3327
        %v3329 = vpop.f32.mrb[0].mxu0
        %3330 = vmatprep.mubr.f32.mxu0 0.0
        %3331 = vmatmul.mubr.f32.gmra.mrb[0].mxu0 %v3109
        %v3332 = vpop.f32.mrb[0].mxu0
        %v3333 = vadd.f32 0.0, %v3332
        %v3334 = vpop.f32.mrb[0].mxu0
        %3335 = vmatprep.mubr.f32.mxu0 0.0
        %3336 = vmatmul.mubr.f32.gmra.mrb[0].mxu0 %v3112
        %v3337 = vpop.f32.mrb[0].mxu0
        %v3338 = vadd.f32 0.0, %v3337
        %v3339 = vpop.f32.mrb[0].mxu0
        %3340 = vmatprep.mubr.f32.mxu0 0.0
        %3341 = vmatmul.mubr.f32.gmra.mrb[0].mxu0 %v3115
        %v3342 = vpop.f32.mrb[0].mxu0
        %v3343 = vadd.f32 0.0, %v3342
        %v3344 = vpop.f32.mrb[0].mxu0
        %3345 = vdwg.mxu0
        %v3347 = vsel %vm1953, %v2708, 0
        %v3350 = vsel %vm1953, %v2709, 0
        %3352 = vmatprep.subr.mxu0 0.0
        %3353 = vmatpush1.msra.mxu0 %v3119
        %3354 = vmatprep.subr.mxu0 0.0
        %3355 = vmatpush1.msra.mxu0 0.0
        %3356 = vmatprep.subr.mxu0 0.0
        %3357 = vmatpush1.msra.mxu0 0.0
        %3358 = vmatprep.subr.mxu0 0.0
        %3359 = vmatpush1.msra.mxu0 0.0
        %3360 = vmatprep.subr.mxu0 0.0
        %3361 = vmatpush1.msra.mxu0 0.0
        %3362 = vmatprep.subr.mxu0 0.0
        %3363 = vmatpush1.msra.mxu0 0.0
        %3364 = vmatprep.subr.mxu0 0.0
        %3365 = vmatpush1.msra.mxu0 0.0
        %3366 = vmatprep.subr.mxu0 0.0
        %3367 = vmatpush1.msra.mxu0 0.0
        %3368 = vmatprep.subr.mxu0 0.0
        %3369 = vmatpush1.msra.mxu0 0.0
        %3370 = vmatprep.subr.mxu0 0.0
        %3371 = vmatpush1.msra.mxu0 0.0
        %3372 = vmatprep.subr.mxu0 0.0
        %3373 = vmatpush1.msra.mxu0 0.0
        %3374 = vmatprep.subr.mxu0 0.0
        %3375 = vmatpush1.msra.mxu0 0.0
        %3376 = vmatprep.subr.mxu0 0.0
        %3377 = vmatpush1.msra.mxu0 0.0
        %3378 = vmatprep.subr.mxu0 0.0
        %3379 = vmatpush1.msra.mxu0 0.0
        %3380 = vmatprep.subr.mxu0 0.0
        %3381 = vmatpush1.msra.mxu0 0.0
        %3382 = vmatprep.subr.mxu0 0.0
        %3383 = vmatpush1.msra.mxu0 0.0
        %3384 = vmatprep.subr.mxu0 0.0
        %3385 = vmatpush1.msra.mxu0 0.0
        %3386 = vmatprep.subr.mxu0 0.0
        %3387 = vmatpush1.msra.mxu0 0.0
        %3388 = vmatprep.subr.mxu0 0.0
        %3389 = vmatpush1.msra.mxu0 0.0
        %3390 = vmatprep.subr.mxu0 0.0
        %3391 = vmatpush1.msra.mxu0 0.0
        %3392 = vmatprep.subr.mxu0 0.0
        %3393 = vmatpush1.msra.mxu0 0.0
        %3394 = vmatprep.subr.mxu0 0.0
        %3395 = vmatpush1.msra.mxu0 0.0
        %3396 = vmatprep.subr.mxu0 0.0
        %3397 = vmatpush1.msra.mxu0 0.0
        %3398 = vmatprep.subr.mxu0 0.0
        %3399 = vmatpush1.msra.mxu0 0.0
        %3400 = vmatprep.subr.mxu0 0.0
        %3401 = vmatpush1.msra.mxu0 0.0
        %3402 = vmatprep.subr.mxu0 0.0
        %3403 = vmatpush1.msra.mxu0 0.0
        %3404 = vmatprep.subr.mxu0 0.0
        %3405 = vmatpush1.msra.mxu0 0.0
        %3406 = vmatprep.subr.mxu0 0.0
        %3407 = vmatpush1.msra.mxu0 0.0
        %3408 = vmatprep.subr.mxu0 0.0
        %3409 = vmatpush1.msra.mxu0 0.0
        %3410 = vmatprep.subr.mxu0 0.0
        %3411 = vmatpush1.msra.mxu0 0.0
        %3412 = vmatprep.subr.mxu0 0.0
        %3413 = vmatpush1.msra.mxu0 0.0
        %3414 = vmatprep.subr.mxu0 0.0
        %3415 = vmatpush1.msra.mxu0 0.0
        %3416 = vmatprep.mubr.f32.mxu0 0.0
        %3417 = vmatmul.mubr.f32.gmra.mrb[0].mxu0 %v3347
        %v3418 = vpop.f32.mrb[0].mxu0
        %v3419 = vadd.f32 0.0, %v3418
        %v3420 = vpop.f32.mrb[0].mxu0
        %3421 = vmatprep.mubr.f32.mxu0 0.0
        %3422 = vmatmul.mubr.f32.gmra.mrb[0].mxu0 %v3350
        %v3423 = vpop.f32.mrb[0].mxu0
        %v3424 = vadd.f32 0.0, %v3423
        %v3425 = vpop.f32.mrb[0].mxu0
        %3426 = vdwg.mxu0
        %v3427 = vmul.f32 %v3188, %v2863
        %v3428 = vmul.f32 %v3193, %v2868
        %v3429 = vmul.f32 %v3198, %v2873
        %v3430 = vmul.f32 %v3203, %v2878
        %v3431 = vmul.f32 %v3208, %v2883
        %v3432 = vmul.f32 %v3213, %v2888
        %v3433 = vmul.f32 %v3218, %v2893
        %v3434 = vmul.f32 %v3223, %v2898
        %v3435 = vmul.f32 %v3228, %v2903
        %v3436 = vmul.f32 %v3233, %v2908
        %v3437 = vmul.f32 %v3238, %v2913
        %v3438 = vmul.f32 %v3243, %v2918
        %v3439 = vmul.f32 %v3248, %v2923
        %v3440 = vmul.f32 %v3253, %v2928
        %v3441 = vmul.f32 %v3258, %v2933
        %v3442 = vmul.f32 %v3263, %v2938
        %v3443 = vmul.f32 %v3268, %v2943
        %v3444 = vmul.f32 %v3273, %v2948
        %v3445 = vmul.f32 %v3278, %v2953
        %v3446 = vmul.f32 %v3283, %v2958
        %v3447 = vmul.f32 %v3288, %v2963
        %v3448 = vmul.f32 %v3293, %v2968
        %v3449 = vmul.f32 %v3298, %v2973
        %v3450 = vmul.f32 %v3303, %v2978
        %v3451 = vmul.f32 %v3308, %v2983
        %v3452 = vmul.f32 %v3313, %v2988
        %v3453 = vmul.f32 %v3318, %v2993
        %v3454 = vmul.f32 %v3323, %v2998
        %v3455 = vmul.f32 %v3328, %v3003
        %v3456 = vmul.f32 %v3333, %v3008
        %v3457 = vmul.f32 %v3338, %v3013
        %v3458 = vmul.f32 %v3343, %v3018
        %v3459 = vsel %vm563, %v3427, 0.0
        %v3460 = vsel %vm563, %v3428, 0.0
        %v3461 = vadd.f32 %v3459, %v3460
        %v3462 = vrot.slane %v3461, 4
        %v3463 = vadd.f32 %v3461, %v3462
        %v3464 = vrot.slane %v3463, 2
        %v3465 = vadd.f32 %v3463, %v3464
        %v3466 = vrot.slane %v3465, 1
        %v3467 = vadd.f32 %v3465, %v3466
        %v3468 = vsel %vm563, %v3429, 0.0
        %v3469 = vsel %vm563, %v3430, 0.0
        %v3470 = vadd.f32 %v3468, %v3469
        %v3471 = vrot.slane %v3470, 4
        %v3472 = vadd.f32 %v3470, %v3471
        %v3473 = vrot.slane %v3472, 2
        %v3474 = vadd.f32 %v3472, %v3473
        %v3475 = vrot.slane %v3474, 1
        %v3476 = vadd.f32 %v3474, %v3475
        %v3477 = vsel %vm563, %v3431, 0.0
        %v3478 = vsel %vm563, %v3432, 0.0
        %v3479 = vadd.f32 %v3477, %v3478
        %v3480 = vrot.slane %v3479, 4
        %v3481 = vadd.f32 %v3479, %v3480
        %v3482 = vrot.slane %v3481, 2
        %v3483 = vadd.f32 %v3481, %v3482
        %v3484 = vrot.slane %v3483, 1
        %v3485 = vadd.f32 %v3483, %v3484
        %v3486 = vsel %vm563, %v3433, 0.0
        %v3487 = vsel %vm563, %v3434, 0.0
        %v3488 = vadd.f32 %v3486, %v3487
        %v3489 = vrot.slane %v3488, 4
        %v3490 = vadd.f32 %v3488, %v3489
        %v3491 = vrot.slane %v3490, 2
        %v3492 = vadd.f32 %v3490, %v3491
        %v3493 = vrot.slane %v3492, 1
        %v3494 = vadd.f32 %v3492, %v3493
        %v3495 = vsel %vm563, %v3435, 0.0
        %v3496 = vsel %vm563, %v3436, 0.0
        %v3497 = vadd.f32 %v3495, %v3496
        %v3498 = vrot.slane %v3497, 4
        %v3499 = vadd.f32 %v3497, %v3498
        %v3500 = vrot.slane %v3499, 2
        %v3501 = vadd.f32 %v3499, %v3500
        %v3502 = vrot.slane %v3501, 1
        %v3503 = vadd.f32 %v3501, %v3502
        %v3504 = vsel %vm563, %v3437, 0.0
        %v3505 = vsel %vm563, %v3438, 0.0
        %v3506 = vadd.f32 %v3504, %v3505
        %v3507 = vrot.slane %v3506, 4
        %v3508 = vadd.f32 %v3506, %v3507
        %v3509 = vrot.slane %v3508, 2
        %v3510 = vadd.f32 %v3508, %v3509
        %v3511 = vrot.slane %v3510, 1
        %v3512 = vadd.f32 %v3510, %v3511
        %v3513 = vsel %vm563, %v3439, 0.0
        %v3514 = vsel %vm563, %v3440, 0.0
        %v3515 = vadd.f32 %v3513, %v3514
        %v3516 = vrot.slane %v3515, 4
        %v3517 = vadd.f32 %v3515, %v3516
        %v3518 = vrot.slane %v3517, 2
        %v3519 = vadd.f32 %v3517, %v3518
        %v3520 = vrot.slane %v3519, 1
        %v3521 = vadd.f32 %v3519, %v3520
        %v3522 = vsel %vm563, %v3441, 0.0
        %v3523 = vsel %vm563, %v3442, 0.0
        %v3524 = vadd.f32 %v3522, %v3523
        %v3525 = vrot.slane %v3524, 4
        %v3526 = vadd.f32 %v3524, %v3525
        %v3527 = vrot.slane %v3526, 2
        %v3528 = vadd.f32 %v3526, %v3527
        %v3529 = vrot.slane %v3528, 1
        %v3530 = vadd.f32 %v3528, %v3529
        %v3531 = vsel %vm563, %v3443, 0.0
        %v3532 = vsel %vm563, %v3444, 0.0
        %v3533 = vadd.f32 %v3531, %v3532
        %v3534 = vrot.slane %v3533, 4
        %v3535 = vadd.f32 %v3533, %v3534
        %v3536 = vrot.slane %v3535, 2
        %v3537 = vadd.f32 %v3535, %v3536
        %v3538 = vrot.slane %v3537, 1
        %v3539 = vadd.f32 %v3537, %v3538
        %v3540 = vsel %vm563, %v3445, 0.0
        %v3541 = vsel %vm563, %v3446, 0.0
        %v3542 = vadd.f32 %v3540, %v3541
        %v3543 = vrot.slane %v3542, 4
        %v3544 = vadd.f32 %v3542, %v3543
        %v3545 = vrot.slane %v3544, 2
        %v3546 = vadd.f32 %v3544, %v3545
        %v3547 = vrot.slane %v3546, 1
        %v3548 = vadd.f32 %v3546, %v3547
        %v3549 = vsel %vm563, %v3447, 0.0
        %v3550 = vsel %vm563, %v3448, 0.0
        %v3551 = vadd.f32 %v3549, %v3550
        %v3552 = vrot.slane %v3551, 4
        %v3553 = vadd.f32 %v3551, %v3552
        %v3554 = vrot.slane %v3553, 2
        %v3555 = vadd.f32 %v3553, %v3554
        %v3556 = vrot.slane %v3555, 1
        %v3557 = vadd.f32 %v3555, %v3556
        %v3558 = vsel %vm563, %v3449, 0.0
        %v3559 = vsel %vm563, %v3450, 0.0
        %v3560 = vadd.f32 %v3558, %v3559
        %v3561 = vrot.slane %v3560, 4
        %v3562 = vadd.f32 %v3560, %v3561
        %v3563 = vrot.slane %v3562, 2
        %v3564 = vadd.f32 %v3562, %v3563
        %v3565 = vrot.slane %v3564, 1
        %v3566 = vadd.f32 %v3564, %v3565
        %v3567 = vsel %vm563, %v3451, 0.0
        %v3568 = vsel %vm563, %v3452, 0.0
        %v3569 = vadd.f32 %v3567, %v3568
        %v3570 = vrot.slane %v3569, 4
        %v3571 = vadd.f32 %v3569, %v3570
        %v3572 = vrot.slane %v3571, 2
        %v3573 = vadd.f32 %v3571, %v3572
        %v3574 = vrot.slane %v3573, 1
        %v3575 = vadd.f32 %v3573, %v3574
        %v3576 = vsel %vm563, %v3453, 0.0
        %v3577 = vsel %vm563, %v3454, 0.0
        %v3578 = vadd.f32 %v3576, %v3577
        %v3579 = vrot.slane %v3578, 4
        %v3580 = vadd.f32 %v3578, %v3579
        %v3581 = vrot.slane %v3580, 2
        %v3582 = vadd.f32 %v3580, %v3581
        %v3583 = vrot.slane %v3582, 1
        %v3584 = vadd.f32 %v3582, %v3583
        %v3585 = vsel %vm563, %v3455, 0.0
        %v3586 = vsel %vm563, %v3456, 0.0
        %v3587 = vadd.f32 %v3585, %v3586
        %v3588 = vrot.slane %v3587, 4
        %v3589 = vadd.f32 %v3587, %v3588
        %v3590 = vrot.slane %v3589, 2
        %v3591 = vadd.f32 %v3589, %v3590
        %v3592 = vrot.slane %v3591, 1
        %v3593 = vadd.f32 %v3591, %v3592
        %v3594 = vsel %vm563, %v3457, 0.0
        %v3595 = vsel %vm563, %v3458, 0.0
        %v3596 = vadd.f32 %v3594, %v3595
        %v3597 = vrot.slane %v3596, 4
        %v3598 = vadd.f32 %v3596, %v3597
        %v3599 = vrot.slane %v3598, 2
        %v3600 = vadd.f32 %v3598, %v3599
        %v3601 = vrot.slane %v3600, 1
        %v3602 = vadd.f32 %v3600, %v3601
        %v3603 = vmul.f32 %v3419, %v2788
        %v3604 = vmul.f32 %v3424, %v2793
        %v3607 = vrot.slane %v3603, 1
        %v3608 = vrot.slane %v3603, 2
        %v3609 = vrot.slane %v3603, 3
        %v3610 = vrot.slane %v3603, 4
        %v3611 = vrot.slane %v3603, 5
        %v3612 = vrot.slane %v3603, 6
        %v3613 = vrot.slane %v3603, 7
        %v3614 = vrot.slane %v3604, 1
        %v3615 = vrot.slane %v3604, 2
        %v3616 = vrot.slane %v3604, 3
        %v3617 = vrot.slane %v3604, 4
        %v3618 = vrot.slane %v3604, 5
        %v3619 = vrot.slane %v3604, 6
        %v3620 = vrot.slane %v3604, 7
        %v3637 = vadd.f32 %v3467, %v3603
        %v3638 = vadd.f32 %v3476, %v3607
        %v3639 = vadd.f32 %v3485, %v3608
        %v3640 = vadd.f32 %v3494, %v3609
        %v3641 = vadd.f32 %v3503, %v3610
        %v3642 = vadd.f32 %v3512, %v3611
        %v3643 = vadd.f32 %v3521, %v3612
        %v3644 = vadd.f32 %v3530, %v3613
        %v3645 = vadd.f32 %v3539, %v3604
        %v3646 = vadd.f32 %v3548, %v3614
        %v3647 = vadd.f32 %v3557, %v3615
        %v3648 = vadd.f32 %v3566, %v3616
        %v3649 = vadd.f32 %v3575, %v3617
        %v3650 = vadd.f32 %v3584, %v3618
        %v3651 = vadd.f32 %v3593, %v3619
        %v3652 = vadd.f32 %v3602, %v3620
        %v3653 = vld [vmem:[#allocation11] sm:$0xff]
        %v3654 = vld [vmem:[#allocation11 + $0x8] sm:$0xff]
        %v3655 = vld [vmem:[#allocation11 + $0x10] sm:$0xff]
        %v3656 = vld [vmem:[#allocation11 + $0x18] sm:$0xff]
        %v3657 = vld [vmem:[%s12] sm:$0x1]
        %v3659 = vlaneseq
        %v3660 = vshrl.u32 %v3659, 7
        %v3661 = vsub.s32 0, %v3660
        %v3662 = vrot.slane %v3657, %v3661
        %v3680 = vrot.slane %v3638, 7
        %v3681 = vsel %vm810, %v3680, %v3637
        %v3682 = vrot.slane %v3639, 6
        %v3683 = vsel %vm813, %v3682, %v3681
        %v3684 = vrot.slane %v3640, 5
        %v3685 = vsel %vm816, %v3684, %v3683
        %v3686 = vrot.slane %v3641, 4
        %v3687 = vsel %vm819, %v3686, %v3685
        %v3688 = vrot.slane %v3642, 3
        %v3689 = vsel %vm822, %v3688, %v3687
        %v3690 = vrot.slane %v3643, 2
        %v3691 = vsel %vm825, %v3690, %v3689
        %v3692 = vrot.slane %v3644, 1
        %v3693 = vsel %vm828, %v3692, %v3691
        %v3694 = vrot.slane %v3646, 7
        %v3695 = vsel %vm810, %v3694, %v3645
        %v3696 = vrot.slane %v3647, 6
        %v3697 = vsel %vm813, %v3696, %v3695
        %v3698 = vrot.slane %v3648, 5
        %v3699 = vsel %vm816, %v3698, %v3697
        %v3700 = vrot.slane %v3649, 4
        %v3701 = vsel %vm819, %v3700, %v3699
        %v3702 = vrot.slane %v3650, 3
        %v3703 = vsel %vm822, %v3702, %v3701
        %v3704 = vrot.slane %v3651, 2
        %v3705 = vsel %vm825, %v3704, %v3703
        %v3706 = vrot.slane %v3652, 1
        %v3707 = vsel %vm828, %v3706, %v3705
        %v3708 = vsel %vm563, %v3693, 0
        %v3710 = vsel %vm563, %v3707, 0
        %3712 = vmatprep.subr.mxu0 0.0
        %3713 = vmatpush1.msra.mxu0 %v3653
        %3714 = vmatprep.subr.mxu0 0.0
        %3715 = vmatpush1.msra.mxu0 %v3654
        %3716 = vmatprep.subr.mxu0 0.0
        %3717 = vmatpush1.msra.mxu0 %v3655
        %3718 = vmatprep.subr.mxu0 0.0
        %3719 = vmatpush1.msra.mxu0 %v3656
        %3720 = vmatprep.subr.mxu0 0.0
        %3721 = vmatpush1.msra.mxu0 0.0
        %3722 = vmatprep.subr.mxu0 0.0
        %3723 = vmatpush1.msra.mxu0 0.0
        %3724 = vmatprep.subr.mxu0 0.0
        %3725 = vmatpush1.msra.mxu0 0.0
        %3726 = vmatprep.subr.mxu0 0.0
        %3727 = vmatpush1.msra.mxu0 0.0
        %3728 = vmatprep.subr.mxu0 0.0
        %3729 = vmatpush1.msra.mxu0 0.0
        %3730 = vmatprep.subr.mxu0 0.0
        %3731 = vmatpush1.msra.mxu0 0.0
        %3732 = vmatprep.subr.mxu0 0.0
        %3733 = vmatpush1.msra.mxu0 0.0
        %3734 = vmatprep.subr.mxu0 0.0
        %3735 = vmatpush1.msra.mxu0 0.0
        %3736 = vmatprep.subr.mxu0 0.0
        %3737 = vmatpush1.msra.mxu0 0.0
        %3738 = vmatprep.subr.mxu0 0.0
        %3739 = vmatpush1.msra.mxu0 0.0
        %3740 = vmatprep.subr.mxu0 0.0
        %3741 = vmatpush1.msra.mxu0 0.0
        %3742 = vmatprep.subr.mxu0 0.0
        %3743 = vmatpush1.msra.mxu0 0.0
        %3744 = vmatprep.subr.mxu0 0.0
        %3745 = vmatpush1.msra.mxu0 0.0
        %3746 = vmatprep.subr.mxu0 0.0
        %3747 = vmatpush1.msra.mxu0 0.0
        %3748 = vmatprep.subr.mxu0 0.0
        %3749 = vmatpush1.msra.mxu0 0.0
        %3750 = vmatprep.subr.mxu0 0.0
        %3751 = vmatpush1.msra.mxu0 0.0
        %3752 = vmatprep.subr.mxu0 0.0
        %3753 = vmatpush1.msra.mxu0 0.0
        %3754 = vmatprep.subr.mxu0 0.0
        %3755 = vmatpush1.msra.mxu0 0.0
        %3756 = vmatprep.subr.mxu0 0.0
        %3757 = vmatpush1.msra.mxu0 0.0
        %3758 = vmatprep.subr.mxu0 0.0
        %3759 = vmatpush1.msra.mxu0 0.0
        %3760 = vmatprep.subr.mxu0 0.0
        %3761 = vmatpush1.msra.mxu0 0.0
        %3762 = vmatprep.subr.mxu0 0.0
        %3763 = vmatpush1.msra.mxu0 0.0
        %3764 = vmatprep.subr.mxu0 0.0
        %3765 = vmatpush1.msra.mxu0 0.0
        %3766 = vmatprep.subr.mxu0 0.0
        %3767 = vmatpush1.msra.mxu0 0.0
        %3768 = vmatprep.subr.mxu0 0.0
        %3769 = vmatpush1.msra.mxu0 0.0
        %3770 = vmatprep.subr.mxu0 0.0
        %3771 = vmatpush1.msra.mxu0 0.0
        %3772 = vmatprep.subr.mxu0 0.0
        %3773 = vmatpush1.msra.mxu0 0.0
        %3774 = vmatprep.subr.mxu0 0.0
        %3775 = vmatpush1.msra.mxu0 0.0
        %3776 = vmatprep.mubr.f32.mxu0 0.0
        %3777 = vmatmul.mubr.f32.gmra.mrb[0].mxu0 %v3708
        %v3778 = vpop.f32.mrb[0].mxu0
        %v3779 = vadd.f32 %v3662, %v3778
        %v3780 = vpop.f32.mrb[0].mxu0
        %3781 = vmatprep.mubr.f32.mxu0 0.0
        %3782 = vmatmul.mubr.f32.gmra.mrb[0].mxu0 %v3710
        %v3783 = vpop.f32.mrb[0].mxu0
        %v3784 = vadd.f32 %v3662, %v3783
        %v3785 = vpop.f32.mrb[0].mxu0
        %3786 = vdwg.mxu0
        %3787 = vst [vmem:[%s528] sm:$0xff] %v3779
        %3788 = vst [vmem:[%s528 + $0x8] sm:$0xff] %v3784
        %s3789 = sand.u32 %s319, 1
        %s3790 = scalar_lea.sflag [#allocation4], %s3789
        %s3791 = sand.u32 %s319, 1
        %s3792 = smul.addr %s3791, 16
        %s3793 = scalar_lea.vmem [#allocation13], %s3792
        // Predicated region
        $region97: #{tpu_custom_call.1} parent=71 // pred_check
          %p3794 = pneg %p329
        $region98: #{tpu_custom_call.1} parent=71 // pred_check_branch
          %3796 = sbr.rel (%p3794) target = $region100
        $region99: #{tpu_custom_call.1} parent=71 // pred_region
          %s3797 = smul.u32 2, %s33
          %s3799 = ssub.s32 256, 256
          %3800 = vsyncadd %s3790, %s3799
          %s3801 = smul.addr %s3797, 128
          %s3802 = scalar_lea.hbm %s13, %s3801
          %s3803 = sshll.u32 %s3793, 4
          %s3804 = int_to_ptr.vmem [resolvable:$true] %s3803
          %3809 = dma.vmem_to_hbm [thread:$0]  %s3804, 256, %s3802, %s3790, 128, 128, 8
        $region100: #{tpu_custom_call.1} parent=71 // pred_fallthru
          _
      $region72: #{tpu_custom_call.1} parent=5 // pred_fallthru
        _
      %p3810 = scmp.le.s32.totalorder 2, %s28
      // Predicated region
      $region101: #{tpu_custom_call.1} parent=5 // pred_check
        %p3811 = pneg %p3810
      $region102: #{tpu_custom_call.1} parent=5 // pred_check_branch
        %3813 = sbr.rel (%p3811) target = $region104
      $region103: #{tpu_custom_call.1} parent=5 // pred_region
        %s3814 = ssub.s32 %s28, 2
        // Predicated region
        $region105: #{tpu_custom_call.1} parent=103 // pred_check
          %p3815 = pneg %p335
        $region106: #{tpu_custom_call.1} parent=103 // pred_check_branch
          %3817 = sbr.rel (%p3815) target = $region108
        $region107: #{tpu_custom_call.1} parent=103 // pred_region
          %s3818 = sand.u32 %s320, 1
          %s3819 = scalar_lea.sflag [#allocation4], %s3818
          %s3820 = sand.u32 %s320, 1
          %s3821 = smul.addr %s3820, 16
          %s3822 = scalar_lea.vmem [#allocation13], %s3821
          %3823 = dma.done %s3819, 256
        $region108: #{tpu_custom_call.1} parent=103 // pred_fallthru
          _
      $region104: #{tpu_custom_call.1} parent=5 // pred_fallthru
        _
    $region6: #{tpu_custom_call.1} parent=1 // loop_footer
      %s32 = sadd.s32 1, %s28
    $region7: #{tpu_custom_call.1} parent=1 // loop_footer_branch
      %27 = sbr.rel target = $region3
    $region8: #{tpu_custom_call.1} parent=1 // loop_exit
      _
    %3824 = vsyncpa [#allocation3], 1
    %s3825 = scalar_lea.sflag [#allocation3], 1
    %3826 = vsyncpa %s3825, 1
    %3827 = vsyncpa [#allocation6], 1
    %3828 = vsyncpa [#allocation9], 1
    %3829 = vsyncpa [#allocation12], 1
    %3830 = vsyncpa [#allocation4], 1
    %s3831 = scalar_lea.sflag [#allocation4], 1
    %3832 = vsyncpa %s3831, 1

</llo_original>
